<compile_context>
chip_gen: v6e
topology: v6e:2x2x1
jax: 0.10.0
libtpu: 0.0.40
codegen_flags: <defaults>
</compile_context>

<pallas_src>
import jax
import jax.numpy as jnp
from jax.experimental import pallas as pl
from jax.experimental.pallas import tpu as pltpu


# --------------------------------------------------------------------------
# 3x3 conv (padding=1) + ReLU.  x: (BT, W, H, Cin) NHWC; w: (3,3,Cin,Cout)
# returns (BT, W*H, Cout)  (reshape to (BT, W, H, Cout) in glue is free).
# --------------------------------------------------------------------------
def conv3x3_relu(x_nhwc, w, b):
    BT, W, H, Cin = x_nhwc.shape
    Cout = w.shape[-1]
    FB = 8 if BT % 8 == 0 else BT                      # frames per grid step
    xp = jnp.pad(x_nhwc, ((0, 0), (1, 1), (1, 1), (0, 0)))

    def kernel(x_ref, w_ref, b_ref, o_ref):
        x = x_ref[...]                                 # (FB, W+2, H+2, Cin)
        acc = jnp.zeros((FB * W * H, Cout), jnp.float32)
        for ki in range(3):
            for kj in range(3):
                xs = x[:, ki:ki + W, kj:kj + H, :].reshape(FB * W * H, Cin)
                acc = acc + jnp.dot(xs, w_ref[ki, kj],
                                    preferred_element_type=jnp.float32)
        out = jax.nn.relu(acc + b_ref[...])
        o_ref[...] = out.reshape(FB, W * H, Cout)

    return pl.pallas_call(
        kernel,
        out_shape=jax.ShapeDtypeStruct((BT, W * H, Cout), jnp.float32),
        grid_spec=pltpu.PrefetchScalarGridSpec(
            num_scalar_prefetch=0,
            grid=(BT // FB,),
            in_specs=[
                pl.BlockSpec((FB, W + 2, H + 2, Cin), lambda i: (i, 0, 0, 0)),
                pl.BlockSpec((3, 3, Cin, Cout), lambda i: (0, 0, 0, 0)),
                pl.BlockSpec((1, Cout), lambda i: (0, 0)),
            ],
            out_specs=pl.BlockSpec((FB, W * H, Cout), lambda i: (i, 0, 0)),
        ),
        compiler_params=pltpu.CompilerParams(
            dimension_semantics=("parallel",),
            vmem_limit_bytes=48 * 1024 * 1024),
    )(xp, w, b.reshape(1, Cout))


# --------------------------------------------------------------------------
# GRU layer (PyTorch gate order r, z, n).  One matmul per timestep against a
# fused (Din+Hd, 4*Hd) weight: columns are [r+z (i&h fused), n_input, n_hidden].
# --------------------------------------------------------------------------
def _fuse_gru_gates(wih, whh, bih, bhh):
    Din = wih.shape[0]
    Hd = whh.shape[0]
    w_top = jnp.concatenate([wih[:, :2 * Hd], wih[:, 2 * Hd:],
                             jnp.zeros((Din, Hd), wih.dtype)], axis=1)
    w_bot = jnp.concatenate([whh[:, :2 * Hd],
                             jnp.zeros((Hd, Hd), whh.dtype),
                             whh[:, 2 * Hd:]], axis=1)
    w_cat = jnp.concatenate([w_top, w_bot], axis=0)          # (Din+Hd, 4Hd)
    b_cat = jnp.concatenate([bih[:2 * Hd] + bhh[:2 * Hd],
                             bih[2 * Hd:], bhh[2 * Hd:]])     # (4Hd,)
    return w_cat, b_cat


def _gru_layer(x_btd, wih, whh, bih, bhh):
    BN, T, Din = x_btd.shape
    Hd = whh.shape[0]
    w_cat, b_cat = _fuse_gru_gates(wih, whh, bih, bhh)
    x_tbd = jnp.transpose(x_btd, (1, 0, 2))                  # (T, BN, Din)

    # Leading "parallel" BN-block axis (v7x megacore); T stays sequential.
    nb = 2 if (BN % 2 == 0 and (BN // 2) % 8 == 0) else 1
    bn_blk = BN // nb

    def kernel(x_ref, w_ref, b_ref, o_ref, h_ref):
        t = pl.program_id(1)

        @pl.when(t == 0)
        def _():
            h_ref[...] = jnp.zeros_like(h_ref)

        x = x_ref[0]                                         # (bn_blk, Din)
        h = h_ref[...]                                       # (bn_blk, Hd)
        xh = jnp.concatenate([x, h], axis=-1)                # (bn_blk, Din+Hd)
        g = jnp.dot(xh, w_ref[...],
                    preferred_element_type=jnp.float32) + b_ref[...]
        r = jax.nn.sigmoid(g[:, :Hd])
        z = jax.nn.sigmoid(g[:, Hd:2 * Hd])
        n = jnp.tanh(g[:, 2 * Hd:3 * Hd] + r * g[:, 3 * Hd:])
        h_new = (1.0 - z) * n + z * h
        h_ref[...] = h_new
        o_ref[0] = h_new

    out_tbh = pl.pallas_call(
        kernel,
        out_shape=jax.ShapeDtypeStruct((T, BN, Hd), jnp.float32),
        grid_spec=pltpu.PrefetchScalarGridSpec(
            num_scalar_prefetch=0,
            grid=(nb, T),
            in_specs=[
                pl.BlockSpec((1, bn_blk, Din), lambda b, t: (t, b, 0)),
                pl.BlockSpec((Din + Hd, 4 * Hd), lambda b, t: (0, 0)),
                pl.BlockSpec((1, 4 * Hd), lambda b, t: (0, 0)),
            ],
            out_specs=pl.BlockSpec((1, bn_blk, Hd), lambda b, t: (t, b, 0)),
            scratch_shapes=[pltpu.VMEM((bn_blk, Hd), jnp.float32)],
        ),
        compiler_params=pltpu.CompilerParams(
            dimension_semantics=("parallel", "arbitrary")),
    )(x_tbd, w_cat, b_cat.reshape(1, -1))
    return jnp.transpose(out_tbh, (1, 0, 2))


def gru_forward(x_btd, layer_params):
    out = x_btd
    for (wih, whh, bih, bhh) in layer_params:
        out = _gru_layer(out, wih, whh, bih, bhh)
    return out


# --------------------------------------------------------------------------
# Attention pooling: relu(fc1(gru) + fc2(tt) + bias) -> softmax over T ->
# weighted sum over time.  gru_out: (BN, T, Hd), tt: (BN, F) -> (BN, Hd)
# --------------------------------------------------------------------------
def attention_pool(gru_out, tt, w1, b1, w2, b2, att_bias):
    BN, T, Hd = gru_out.shape
    F_t = tt.shape[-1]
    RB = 128 if BN % 128 == 0 else BN                       # row tile

    def kernel(g_ref, tt_ref, w1_ref, b1_ref, w2_ref, b2_ref, ab_ref, o_ref):
        g = g_ref[...]                                      # (RB, T, Hd)
        # fc1 has a single output column: do it on the VPU/XLU, not the MXU.
        s1 = jnp.sum(g * w1_ref[...][None, :, :], axis=-1) + b1_ref[0, 0]
        s2 = jnp.dot(tt_ref[...], w2_ref[...],
                     preferred_element_type=jnp.float32) + b2_ref[...]
        s = jax.nn.relu(s1 + s2 + ab_ref[0, 0])             # (RB, T)
        s = s - jnp.max(s, axis=-1, keepdims=True)
        e = jnp.exp(s)
        inv = pl.reciprocal(jnp.sum(e, axis=-1, keepdims=True), approx=True)
        score = e * inv
        o_ref[...] = jnp.sum(g * score[:, :, None], axis=1)  # (RB, Hd)

    return pl.pallas_call(
        kernel,
        out_shape=jax.ShapeDtypeStruct((BN, Hd), jnp.float32),
        grid_spec=pltpu.PrefetchScalarGridSpec(
            num_scalar_prefetch=0,
            grid=(BN // RB,),
            in_specs=[
                pl.BlockSpec((RB, T, Hd), lambda i: (i, 0, 0)),
                pl.BlockSpec((RB, F_t), lambda i: (i, 0)),
                pl.BlockSpec((1, Hd), lambda i: (0, 0)),
                pl.BlockSpec((1, 1), lambda i: (0, 0)),
                pl.BlockSpec((F_t, T), lambda i: (0, 0)),
                pl.BlockSpec((1, T), lambda i: (0, 0)),
                pl.BlockSpec((1, 1), lambda i: (0, 0)),
            ],
            out_specs=pl.BlockSpec((RB, Hd), lambda i: (i, 0)),
        ),
        compiler_params=pltpu.CompilerParams(
            dimension_semantics=("parallel",)),
    )(gru_out, tt, w1.reshape(1, Hd), b1.reshape(1, 1),
      w2, b2.reshape(1, -1), att_bias.reshape(1, 1))


# --------------------------------------------------------------------------
# Fused road+risk GCN stacks: out = road_stack(x) + risk_stack(x).
# x: (TB, N, D1); adj: (N, N); each layer is relu(adj @ x @ W + b).
# Uses associativity: relu((adj@x)@W + b) == relu(adj@(x@W) + b) so the x@W
# part runs as one flattened (FB*N, Din) matmul per layer.
# --------------------------------------------------------------------------
def sem_gcn(x, road_adj, risk_adj, road_params, risk_params):
    TB, N, D1 = x.shape
    num_layers = len(road_params)
    F_out = road_params[-1][0].shape[-1]
    FB = 8 if TB % 8 == 0 else TB

    inputs = [x, road_adj, risk_adj]
    in_specs = [
        pl.BlockSpec((FB, N, D1), lambda i: (i, 0, 0)),
        pl.BlockSpec((N, N), lambda i: (0, 0)),
        pl.BlockSpec((N, N), lambda i: (0, 0)),
    ]
    for (w, bias) in list(road_params) + list(risk_params):
        inputs += [w, bias.reshape(1, -1)]
        in_specs += [
            pl.BlockSpec(w.shape, lambda i: (0, 0)),
            pl.BlockSpec((1, bias.shape[0]), lambda i: (0, 0)),
        ]

    def kernel(*refs):
        x_ref, ra_ref, ka_ref = refs[:3]
        wrefs = refs[3:3 + 4 * num_layers]
        o_ref = refs[3 + 4 * num_layers]
        xv = x_ref[...]                                     # (FB, N, D1)

        def stack(adj, off):
            cur = xv
            for l in range(num_layers):
                w_ref = wrefs[off + 2 * l]
                b_ref = wrefs[off + 2 * l + 1]
                din = cur.shape[-1]
                fo = w_ref.shape[-1]
                h = jnp.dot(cur.reshape(FB * N, din), w_ref[...],
                            preferred_element_type=jnp.float32)
                h = h.reshape(FB, N, fo)
                frames = [jax.nn.relu(
                    jnp.dot(adj, h[f], preferred_element_type=jnp.float32)
                    + b_ref[...]) for f in range(FB)]
                cur = jnp.stack(frames, axis=0)
            return cur

        road = stack(ra_ref[...], 0)
        risk = stack(ka_ref[...], 2 * num_layers)
        o_ref[...] = road + risk

    return pl.pallas_call(
        kernel,
        out_shape=jax.ShapeDtypeStruct((TB, N, F_out), jnp.float32),
        grid_spec=pltpu.PrefetchScalarGridSpec(
            num_scalar_prefetch=0,
            grid=(TB // FB,),
            in_specs=in_specs,
            out_specs=pl.BlockSpec((FB, N, F_out), lambda i: (i, 0, 0)),
        ),
        compiler_params=pltpu.CompilerParams(
            dimension_semantics=("parallel",),
            vmem_limit_bytes=48 * 1024 * 1024),
    )(*inputs)


# --------------------------------------------------------------------------
# Fusion: [geo | grid_node_map @ sem] @ [wg; wr] + (bg + br).
# geo: (B, WH, Hd), sem: (B, N, Hd) -> (B*WH, C)   (grid-free; B is tiny)
# --------------------------------------------------------------------------
def fuse_1x1(geo, sem, gnm, wg, bg, wr, br):
    B, WH, Hd = geo.shape
    C = wg.shape[-1]
    w_cat = jnp.concatenate([wg, wr], axis=0)        # (2*Hd, C)
    b_cat = (bg + br).reshape(1, C)

    def kernel(geo_ref, sem_ref, gnm_ref, w_ref, b_ref, o_ref):
        gnm_v = gnm_ref[...]
        feats = []
        for bb in range(B):
            mapped = jnp.dot(gnm_v, sem_ref[bb],
                             preferred_element_type=jnp.float32)   # (WH, Hd)
            feats.append(jnp.concatenate([geo_ref[bb], mapped], axis=-1))
        slab = jnp.concatenate(feats, axis=0)                       # (B*WH, 2Hd)
        o_ref[...] = jnp.dot(slab, w_ref[...],
                             preferred_element_type=jnp.float32) + b_ref[...]

    return pl.pallas_call(
        kernel,
        out_shape=jax.ShapeDtypeStruct((B * WH, C), jnp.float32),
        in_specs=[pl.BlockSpec(memory_space=pltpu.MemorySpace.VMEM)] * 5,
        out_specs=pl.BlockSpec(memory_space=pltpu.MemorySpace.VMEM),
    )(geo, sem, gnm, w_cat, b_cat)


# --------------------------------------------------------------------------
# Final output linear.
# --------------------------------------------------------------------------
def linear(x, w, b):
    def kernel(x_ref, w_ref, b_ref, o_ref):
        o_ref[...] = jnp.dot(x_ref[...], w_ref[...],
                             preferred_element_type=jnp.float32) + b_ref[...]

    return pl.pallas_call(
        kernel,
        out_shape=jax.ShapeDtypeStruct((x.shape[0], w.shape[1]), jnp.float32),
        in_specs=[pl.BlockSpec(memory_space=pltpu.MemorySpace.VMEM)] * 3,
        out_specs=pl.BlockSpec(memory_space=pltpu.MemorySpace.VMEM),
    )(x, w, b.reshape(1, -1))


# --------------------------------------------------------------------------
# Full GSNet forward (glue in plain JAX, compute in Pallas kernels above).
# --------------------------------------------------------------------------
def gsnet_forward(params, grid_input, target_time_feature, graph_feature,
                  road_adj, risk_adj, grid_node_map, pre_len):
    B, T, D, W, H = grid_input.shape
    WH = W * H
    _, _, D1, N = graph_feature.shape
    F_t = target_time_feature.shape[-1]

    # ---------------- STGeoModule ----------------
    x = grid_input.reshape(B * T, D, W, H).transpose(0, 2, 3, 1)     # NHWC
    x = conv3x3_relu(x, params['conv1_w'], params['conv1_b'])        # (BT,WH,64)
    x = x.reshape(B * T, W, H, 64)
    x = conv3x3_relu(x, params['conv2_w'], params['conv2_b'])        # (BT,WH,D)
    x = x.reshape(B, T, W, H, D).transpose(0, 2, 3, 1, 4).reshape(B * WH, T, D)
    geo_gru_out = gru_forward(x, params['geo_gru'])                  # (B*WH,T,Hd)
    tt_grid = jnp.repeat(target_time_feature[:, None, :], WH,
                         axis=1).reshape(B * WH, F_t)
    geo_att = attention_pool(geo_gru_out, tt_grid,
                             params['geo_att_w1'], params['geo_att_b1'],
                             params['geo_att_w2'], params['geo_att_b2'],
                             params['geo_att_bias'])                 # (B*WH,Hd)
    geo_out = geo_att.reshape(B, WH, -1)

    # ---------------- STSemModule ----------------
    g = graph_feature.reshape(B * T, D1, N).transpose(0, 2, 1)       # (BT,N,D1)
    graph_out = sem_gcn(g, road_adj, risk_adj,
                        params['road_gcn'], params['risk_gcn'])      # (BT,N,Fg)
    Fg = graph_out.shape[-1]
    graph_out = graph_out.reshape(B, T, N, Fg).transpose(0, 2, 1, 3)
    graph_out = graph_out.reshape(B * N, T, Fg)
    sem_gru_out = gru_forward(graph_out, params['graph_gru'])        # (B*N,T,Hd)
    tt_graph = jnp.repeat(target_time_feature[:, None, :], N,
                          axis=1).reshape(B * N, F_t)
    sem_att = attention_pool(sem_gru_out, tt_graph,
                             params['graph_att_w1'], params['graph_att_b1'],
                             params['graph_att_w2'], params['graph_att_b2'],
                             params['graph_att_bias'])               # (B*N,Hd)
    sem_out = sem_att.reshape(B, N, -1)

    # ---------------- fusion + output ----------------
    fused = fuse_1x1(geo_out, sem_out, grid_node_map,
                     params['grid_w'], params['grid_b'],
                     params['graph_w'], params['graph_b'])           # (B*WH, C)
    # out_w rows were pre-permuted at param-setup time for this (wh-major,
    # channel-minor) flatten order -> no HBM transpose needed here.
    fused_flat = fused.reshape(B, -1)
    final = linear(fused_flat, params['out_w'], params['out_b'])
    return final.reshape(B, pre_len, W, H)


# --------------------------------------------------------------------------
# Deterministic parameter initialization.
# --------------------------------------------------------------------------
def make_params(key, *, D, D1, T, Hd, F_t, filters, WH, pre_len, num_gru_layers):
    keys = iter(jax.random.split(key, 64))

    def rnd(shape, scale=0.1):
        return scale * jax.random.normal(next(keys), shape, dtype=jnp.float32)

    def gru_params(in_dim):
        layers = []
        d = in_dim
        for _ in range(num_gru_layers):
            layers.append((rnd((d, 3 * Hd)), rnd((Hd, 3 * Hd)),
                           rnd((3 * Hd,)), rnd((3 * Hd,))))
            d = Hd
        return layers

    def gcn_params(in_dim):
        layers = []
        d = in_dim
        for f in filters:
            layers.append((rnd((d, f)), rnd((f,))))
            d = f
        return layers

    C = 16  # fusion_channel
    # out_w in PyTorch row order (c*WH + wh), then permuted once so that the
    # (wh*C + c) flatten order of the fused Pallas output can be used directly.
    out_w_torch = rnd((C * WH, pre_len * WH))
    row_perm = (jnp.arange(C)[None, :] * WH
                + jnp.arange(WH)[:, None]).reshape(-1)
    params = dict(
        conv1_w=rnd((3, 3, D, 64)), conv1_b=rnd((64,)),
        conv2_w=rnd((3, 3, 64, D)), conv2_b=rnd((D,)),
        geo_gru=gru_params(D),
        geo_att_w1=rnd((Hd, 1)), geo_att_b1=rnd((1,)),
        geo_att_w2=rnd((F_t, T)), geo_att_b2=rnd((T,)),
        geo_att_bias=jnp.zeros((1,), jnp.float32),
        road_gcn=gcn_params(D1),
        risk_gcn=gcn_params(D1),
        graph_gru=gru_params(filters[-1]),
        graph_att_w1=rnd((Hd, 1)), graph_att_b1=rnd((1,)),
        graph_att_w2=rnd((F_t, T)), graph_att_b2=rnd((T,)),
        graph_att_bias=jnp.zeros((1,), jnp.float32),
        grid_w=rnd((Hd, C)), grid_b=rnd((C,)),
        graph_w=rnd((Hd, C)), graph_b=rnd((C,)),
        out_w=out_w_torch[row_perm],
        out_b=rnd((pre_len * WH,)),
    )
    return params


if __name__ == "__main__":
    # Small, GSNet-consistent shapes.
    B = 2          # batch
    T = 8          # seq_len
    D = 4          # grid_in_channel
    W = H = 8      # north_south_map / west_east_map
    Hd = 32        # gru_hidden_size
    F_t = 32       # num_of_target_time_feature (24+7+1)
    D1 = 4         # num_of_graph_feature
    N = 32         # number of graph nodes
    filters = [32, 32]
    pre_len = 2
    num_gru_layers = 1
    WH = W * H

    key = jax.random.PRNGKey(0)
    k_in, k_p = jax.random.split(key)
    k1, k2, k3 = jax.random.split(k_in, 3)

    grid_input = jax.random.normal(k1, (B, T, D, W, H), dtype=jnp.float32)
    target_time_feature = jax.random.normal(k2, (B, F_t), dtype=jnp.float32)
    graph_feature = jax.random.normal(k3, (B, T, D1, N), dtype=jnp.float32)

    eye = jnp.eye(N, dtype=jnp.float32)
    road_adj = (eye + jnp.roll(eye, 1, axis=1) + jnp.roll(eye, -1, axis=1)) / 3.0
    risk_adj = (eye + jnp.roll(eye, 2, axis=1) + jnp.roll(eye, -2, axis=1)) / 3.0
    grid_node_map = jax.nn.one_hot(jnp.arange(WH) % N, N, dtype=jnp.float32)

    params = make_params(k_p, D=D, D1=D1, T=T, Hd=Hd, F_t=F_t, filters=filters,
                         WH=WH, pre_len=pre_len, num_gru_layers=num_gru_layers)

    out = gsnet_forward(params, grid_input, target_time_feature, graph_feature,
                        road_adj, risk_adj, grid_node_map, pre_len)
    out = jax.block_until_ready(out)
    assert out.shape == (B, pre_len, W, H), out.shape
    assert bool(jnp.all(jnp.isfinite(out)))
    print("KERNEL_OK")
</pallas_src>

<mosaic_0001>
module attributes {stable_mosaic.version = 11 : i64} {
  func.func @kernel(%arg0: i32, %arg1: memref<8x10x10x4xf32, #tpu.memory_space<vmem>>, %arg2: memref<3x3x4x64xf32, #tpu.memory_space<vmem>>, %arg3: memref<1x64xf32, #tpu.memory_space<vmem>>, %arg4: memref<8x64x64xf32, #tpu.memory_space<vmem>>) attributes {dimension_semantics = [#tpu.dimension_semantics<parallel>], iteration_bounds = array<i64: 2>, scalar_prefetch = 0 : i64, scratch_operands = 0 : i64, tpu.core_type = #tpu.core_type<tc>, window_params = [{transform_indices = @transform_0, window_bounds = array<i64: 8, 10, 10, 4>}, {pipeline_mode = #tpu.pipeline_mode<synchronous>, transform_indices = @transform_1, window_bounds = array<i64: 3, 3, 4, 64>}, {pipeline_mode = #tpu.pipeline_mode<synchronous>, transform_indices = @transform_2, window_bounds = array<i64: 1, 64>}, {transform_indices = @transform_3, window_bounds = array<i64: 8, 64, 64>}]} {
    %c0 = arith.constant 0 : index
    %c0_0 = arith.constant 0 : index
    %c0_1 = arith.constant 0 : index
    %c0_2 = arith.constant 0 : index
    %0 = vector.load %arg1[%c0, %c0_0, %c0_1, %c0_2] : memref<8x10x10x4xf32, #tpu.memory_space<vmem>>, vector<8x10x10x4xf32>
    %cst = arith.constant 0.000000e+00 : f32
    %1 = vector.broadcast %cst : f32 to vector<512x64xf32>
    %2 = vector.extract_strided_slice %0 {offsets = [0, 0, 0, 0], sizes = [8, 8, 8, 4], strides = [1, 1, 1, 1]} : vector<8x10x10x4xf32> to vector<8x8x8x4xf32>
    %3 = vector.shape_cast %2 : vector<8x8x8x4xf32> to vector<512x4xf32>
    %c0_3 = arith.constant 0 : index
    %c0_4 = arith.constant 0 : index
    %c0_5 = arith.constant 0 : index
    %c0_6 = arith.constant 0 : index
    %4 = vector.load %arg2[%c0_3, %c0_4, %c0_5, %c0_6] : memref<3x3x4x64xf32, #tpu.memory_space<vmem>>, vector<1x1x4x64xf32>
    %5 = vector.shape_cast %4 : vector<1x1x4x64xf32> to vector<4x64xf32>
    %cst_7 = arith.constant dense<0.000000e+00> : vector<512x64xf32>
    %6 = tpu.matmul %3, %5, %cst_7 {dimension_numbers = #tpu.dot_dimension_numbers<[1], [0], [0], [1], [0, 0, 1, 1], [], []>} : vector<512x4xf32>, vector<4x64xf32>, vector<512x64xf32> -> vector<512x64xf32>
    %7 = arith.addf %1, %6 : vector<512x64xf32>
    %8 = vector.extract_strided_slice %0 {offsets = [0, 0, 1, 0], sizes = [8, 8, 8, 4], strides = [1, 1, 1, 1]} : vector<8x10x10x4xf32> to vector<8x8x8x4xf32>
    %9 = vector.shape_cast %8 : vector<8x8x8x4xf32> to vector<512x4xf32>
    %c0_8 = arith.constant 0 : index
    %c1 = arith.constant 1 : index
    %c0_9 = arith.constant 0 : index
    %c0_10 = arith.constant 0 : index
    %10 = vector.load %arg2[%c0_8, %c1, %c0_9, %c0_10] : memref<3x3x4x64xf32, #tpu.memory_space<vmem>>, vector<1x1x4x64xf32>
    %11 = vector.shape_cast %10 : vector<1x1x4x64xf32> to vector<4x64xf32>
    %cst_11 = arith.constant dense<0.000000e+00> : vector<512x64xf32>
    %12 = tpu.matmul %9, %11, %cst_11 {dimension_numbers = #tpu.dot_dimension_numbers<[1], [0], [0], [1], [0, 0, 1, 1], [], []>} : vector<512x4xf32>, vector<4x64xf32>, vector<512x64xf32> -> vector<512x64xf32>
    %13 = arith.addf %7, %12 : vector<512x64xf32>
    %14 = vector.extract_strided_slice %0 {offsets = [0, 0, 2, 0], sizes = [8, 8, 8, 4], strides = [1, 1, 1, 1]} : vector<8x10x10x4xf32> to vector<8x8x8x4xf32>
    %15 = vector.shape_cast %14 : vector<8x8x8x4xf32> to vector<512x4xf32>
    %c0_12 = arith.constant 0 : index
    %c2 = arith.constant 2 : index
    %c0_13 = arith.constant 0 : index
    %c0_14 = arith.constant 0 : index
    %16 = vector.load %arg2[%c0_12, %c2, %c0_13, %c0_14] : memref<3x3x4x64xf32, #tpu.memory_space<vmem>>, vector<1x1x4x64xf32>
    %17 = vector.shape_cast %16 : vector<1x1x4x64xf32> to vector<4x64xf32>
    %cst_15 = arith.constant dense<0.000000e+00> : vector<512x64xf32>
    %18 = tpu.matmul %15, %17, %cst_15 {dimension_numbers = #tpu.dot_dimension_numbers<[1], [0], [0], [1], [0, 0, 1, 1], [], []>} : vector<512x4xf32>, vector<4x64xf32>, vector<512x64xf32> -> vector<512x64xf32>
    %19 = arith.addf %13, %18 : vector<512x64xf32>
    %20 = vector.extract_strided_slice %0 {offsets = [0, 1, 0, 0], sizes = [8, 8, 8, 4], strides = [1, 1, 1, 1]} : vector<8x10x10x4xf32> to vector<8x8x8x4xf32>
    %21 = vector.shape_cast %20 : vector<8x8x8x4xf32> to vector<512x4xf32>
    %c1_16 = arith.constant 1 : index
    %c0_17 = arith.constant 0 : index
    %c0_18 = arith.constant 0 : index
    %c0_19 = arith.constant 0 : index
    %22 = vector.load %arg2[%c1_16, %c0_17, %c0_18, %c0_19] : memref<3x3x4x64xf32, #tpu.memory_space<vmem>>, vector<1x1x4x64xf32>
    %23 = vector.shape_cast %22 : vector<1x1x4x64xf32> to vector<4x64xf32>
    %cst_20 = arith.constant dense<0.000000e+00> : vector<512x64xf32>
    %24 = tpu.matmul %21, %23, %cst_20 {dimension_numbers = #tpu.dot_dimension_numbers<[1], [0], [0], [1], [0, 0, 1, 1], [], []>} : vector<512x4xf32>, vector<4x64xf32>, vector<512x64xf32> -> vector<512x64xf32>
    %25 = arith.addf %19, %24 : vector<512x64xf32>
    %26 = vector.extract_strided_slice %0 {offsets = [0, 1, 1, 0], sizes = [8, 8, 8, 4], strides = [1, 1, 1, 1]} : vector<8x10x10x4xf32> to vector<8x8x8x4xf32>
    %27 = vector.shape_cast %26 : vector<8x8x8x4xf32> to vector<512x4xf32>
    %c1_21 = arith.constant 1 : index
    %c1_22 = arith.constant 1 : index
    %c0_23 = arith.constant 0 : index
    %c0_24 = arith.constant 0 : index
    %28 = vector.load %arg2[%c1_21, %c1_22, %c0_23, %c0_24] : memref<3x3x4x64xf32, #tpu.memory_space<vmem>>, vector<1x1x4x64xf32>
    %29 = vector.shape_cast %28 : vector<1x1x4x64xf32> to vector<4x64xf32>
    %cst_25 = arith.constant dense<0.000000e+00> : vector<512x64xf32>
    %30 = tpu.matmul %27, %29, %cst_25 {dimension_numbers = #tpu.dot_dimension_numbers<[1], [0], [0], [1], [0, 0, 1, 1], [], []>} : vector<512x4xf32>, vector<4x64xf32>, vector<512x64xf32> -> vector<512x64xf32>
    %31 = arith.addf %25, %30 : vector<512x64xf32>
    %32 = vector.extract_strided_slice %0 {offsets = [0, 1, 2, 0], sizes = [8, 8, 8, 4], strides = [1, 1, 1, 1]} : vector<8x10x10x4xf32> to vector<8x8x8x4xf32>
    %33 = vector.shape_cast %32 : vector<8x8x8x4xf32> to vector<512x4xf32>
    %c1_26 = arith.constant 1 : index
    %c2_27 = arith.constant 2 : index
    %c0_28 = arith.constant 0 : index
    %c0_29 = arith.constant 0 : index
    %34 = vector.load %arg2[%c1_26, %c2_27, %c0_28, %c0_29] : memref<3x3x4x64xf32, #tpu.memory_space<vmem>>, vector<1x1x4x64xf32>
    %35 = vector.shape_cast %34 : vector<1x1x4x64xf32> to vector<4x64xf32>
    %cst_30 = arith.constant dense<0.000000e+00> : vector<512x64xf32>
    %36 = tpu.matmul %33, %35, %cst_30 {dimension_numbers = #tpu.dot_dimension_numbers<[1], [0], [0], [1], [0, 0, 1, 1], [], []>} : vector<512x4xf32>, vector<4x64xf32>, vector<512x64xf32> -> vector<512x64xf32>
    %37 = arith.addf %31, %36 : vector<512x64xf32>
    %38 = vector.extract_strided_slice %0 {offsets = [0, 2, 0, 0], sizes = [8, 8, 8, 4], strides = [1, 1, 1, 1]} : vector<8x10x10x4xf32> to vector<8x8x8x4xf32>
    %39 = vector.shape_cast %38 : vector<8x8x8x4xf32> to vector<512x4xf32>
    %c2_31 = arith.constant 2 : index
    %c0_32 = arith.constant 0 : index
    %c0_33 = arith.constant 0 : index
    %c0_34 = arith.constant 0 : index
    %40 = vector.load %arg2[%c2_31, %c0_32, %c0_33, %c0_34] : memref<3x3x4x64xf32, #tpu.memory_space<vmem>>, vector<1x1x4x64xf32>
    %41 = vector.shape_cast %40 : vector<1x1x4x64xf32> to vector<4x64xf32>
    %cst_35 = arith.constant dense<0.000000e+00> : vector<512x64xf32>
    %42 = tpu.matmul %39, %41, %cst_35 {dimension_numbers = #tpu.dot_dimension_numbers<[1], [0], [0], [1], [0, 0, 1, 1], [], []>} : vector<512x4xf32>, vector<4x64xf32>, vector<512x64xf32> -> vector<512x64xf32>
    %43 = arith.addf %37, %42 : vector<512x64xf32>
    %44 = vector.extract_strided_slice %0 {offsets = [0, 2, 1, 0], sizes = [8, 8, 8, 4], strides = [1, 1, 1, 1]} : vector<8x10x10x4xf32> to vector<8x8x8x4xf32>
    %45 = vector.shape_cast %44 : vector<8x8x8x4xf32> to vector<512x4xf32>
    %c2_36 = arith.constant 2 : index
    %c1_37 = arith.constant 1 : index
    %c0_38 = arith.constant 0 : index
    %c0_39 = arith.constant 0 : index
    %46 = vector.load %arg2[%c2_36, %c1_37, %c0_38, %c0_39] : memref<3x3x4x64xf32, #tpu.memory_space<vmem>>, vector<1x1x4x64xf32>
    %47 = vector.shape_cast %46 : vector<1x1x4x64xf32> to vector<4x64xf32>
    %cst_40 = arith.constant dense<0.000000e+00> : vector<512x64xf32>
    %48 = tpu.matmul %45, %47, %cst_40 {dimension_numbers = #tpu.dot_dimension_numbers<[1], [0], [0], [1], [0, 0, 1, 1], [], []>} : vector<512x4xf32>, vector<4x64xf32>, vector<512x64xf32> -> vector<512x64xf32>
    %49 = arith.addf %43, %48 : vector<512x64xf32>
    %50 = vector.extract_strided_slice %0 {offsets = [0, 2, 2, 0], sizes = [8, 8, 8, 4], strides = [1, 1, 1, 1]} : vector<8x10x10x4xf32> to vector<8x8x8x4xf32>
    %51 = vector.shape_cast %50 : vector<8x8x8x4xf32> to vector<512x4xf32>
    %c2_41 = arith.constant 2 : index
    %c2_42 = arith.constant 2 : index
    %c0_43 = arith.constant 0 : index
    %c0_44 = arith.constant 0 : index
    %52 = vector.load %arg2[%c2_41, %c2_42, %c0_43, %c0_44] : memref<3x3x4x64xf32, #tpu.memory_space<vmem>>, vector<1x1x4x64xf32>
    %53 = vector.shape_cast %52 : vector<1x1x4x64xf32> to vector<4x64xf32>
    %cst_45 = arith.constant dense<0.000000e+00> : vector<512x64xf32>
    %54 = tpu.matmul %51, %53, %cst_45 {dimension_numbers = #tpu.dot_dimension_numbers<[1], [0], [0], [1], [0, 0, 1, 1], [], []>} : vector<512x4xf32>, vector<4x64xf32>, vector<512x64xf32> -> vector<512x64xf32>
    %55 = arith.addf %49, %54 : vector<512x64xf32>
    %c0_46 = arith.constant 0 : index
    %c0_47 = arith.constant 0 : index
    %56 = vector.load %arg3[%c0_46, %c0_47] : memref<1x64xf32, #tpu.memory_space<vmem>>, vector<1x64xf32>
    %57 = vector.broadcast %56 : vector<1x64xf32> to vector<512x64xf32>
    %58 = arith.addf %55, %57 : vector<512x64xf32>
    %cst_48 = arith.constant 0.000000e+00 : f32
    %59 = vector.broadcast %cst_48 : f32 to vector<512x64xf32>
    %60 = arith.maximumf %58, %59 : vector<512x64xf32>
    %61 = vector.shape_cast %60 : vector<512x64xf32> to vector<8x64x64xf32>
    %c0_49 = arith.constant 0 : index
    %c0_50 = arith.constant 0 : index
    %c0_51 = arith.constant 0 : index
    %62 = vector.load %arg4[%c0_49, %c0_50, %c0_51] : memref<8x64x64xf32, #tpu.memory_space<vmem>>, vector<8x64x64xf32>
    tpu.vector_store %arg4[%c0_49, %c0_50, %c0_51], %61 {strides = array<i32>} : memref<8x64x64xf32, #tpu.memory_space<vmem>>, vector<8x64x64xf32>,
    return
  }
  func.func @transform_0(%arg0: i32) -> (i32, i32, i32, i32) {
    %c0_i32 = arith.constant 0 : i32
    %c0_i32_0 = arith.constant 0 : i32
    %c0_i32_1 = arith.constant 0 : i32
    %c0_i32_2 = arith.constant 0 : i32
    return %arg0, %c0_i32, %c0_i32_0, %c0_i32_1 : i32, i32, i32, i32
  }
  func.func @transform_1(%arg0: i32) -> (i32, i32, i32, i32) {
    %c0_i32 = arith.constant 0 : i32
    %c0_i32_0 = arith.constant 0 : i32
    %c0_i32_1 = arith.constant 0 : i32
    %c0_i32_2 = arith.constant 0 : i32
    %c0_i32_3 = arith.constant 0 : i32
    return %c0_i32, %c0_i32_0, %c0_i32_1, %c0_i32_2 : i32, i32, i32, i32
  }
  func.func @transform_2(%arg0: i32) -> (i32, i32) {
    %c0_i32 = arith.constant 0 : i32
    %c0_i32_0 = arith.constant 0 : i32
    %c0_i32_1 = arith.constant 0 : i32
    return %c0_i32, %c0_i32_0 : i32, i32
  }
  func.func @transform_3(%arg0: i32) -> (i32, i32, i32) {
    %c0_i32 = arith.constant 0 : i32
    %c0_i32_0 = arith.constant 0 : i32
    %c0_i32_1 = arith.constant 0 : i32
    return %arg0, %c0_i32, %c0_i32_0 : i32, i32, i32
  }
}

</mosaic_0001>

<llo_original>
// kernel: tpu_custom_call.1
$region0: #{tpu_custom_call.1}
  #allocation0 [shape = 'u32[]', space=smem, size = 0x4, offset = 0x4, fixed_abs, tag = 'smem constant byte address 0x4 - core index']
  #allocation1 [shape = 'u32[144,128]{1,0:T(1,128)}', space=vmem, size = 0x12000, scoped, tag = 'internal scratch']
  %s0 = inlined_call_operand.vmem [shape: f32[16,10,10,4], index: 0, kind: input, shape index: {}]
  %s1 = inlined_call_operand.vmem [shape: f32[3,3,4,64], index: 1, kind: input, shape index: {}]
  %s2 = inlined_call_operand.vmem [shape: f32[1,64], index: 2, kind: input, shape index: {}]
  %s3 = inlined_call_operand.hbm [shape: f32[16,64,64], index: 3, kind: output, shape index: {}]
  %s4 = sld [smem:[#allocation0]]
  $region45: #{tpu_custom_call.1} parent=0
    _
  %s6 = ssub.s32 1, %s4
  %s7 = scalar_select 0, %s6, %s4
  $region1: #{tpu_custom_call.1} parent=0
    #allocation2 [shape = 'u8[524288]{0}', space=vmem, size = 0x80000, scoped, tag = 'output window, operand 0']
    #allocation3 [shape = 's32[2]{0}', space=sflag, size = 0x8, scoped, tag = 'scoped memory for tpu_custom_call.1']
    %8 = vsyncpa [#allocation3], 0
    %s9 = scalar_lea.sflag [#allocation3], 1
    %10 = vsyncpa %s9, 0
    loop: start=0, step=1, limit=4
    $region2: #{tpu_custom_call.1} parent=1 // loop_pre_header
      _
    $region3: #{tpu_custom_call.1} parent=1 // loop_header
      %s12 = sphi 0, %s16
      %p13 = scmp.ge.s32.totalorder %s12, 4
      %s22 = sphi 0, %s24
      %s25 = sphi 0, %s22
      %s26 = sphi 0, %s25
      %s42 = sphi 0, %s26
      %s46 = sphi 0, %s46
      %s48 = sphi 0, %s46
      %s49 = sphi 0, %s48
      %s63 = sphi 0, %s49
      %s67 = sphi 0, %s67
      %s69 = sphi 0, %s67
      %s70 = sphi 0, %s69
      %s84 = sphi 0, %s70
      %s90 = sphi 0, %s92
      %s93 = sphi 0, %s90
      %s94 = sphi 0, %s93
      %s110 = sphi 0, %s94
    $region4: #{tpu_custom_call.1} parent=1 // loop_header_branch
      %15 = sbr.rel (%p13) target = $region8
    $region5: #{tpu_custom_call.1} parent=1 // loop_body
      %s17 = ssub.s32 %s12, 1
      %s18 = ssub.s32 %s12, 2
      %s19 = sadd.s32 %s12, 1
      %s20 = ssub.s32 %s12, %s19
      %p21 = scmp.eq.s32.totalorder %s20, 0
      %s23 = sadd.s32 %s22, 1
      %s24 = scalar_select %p21, %s22, %s23
      %p27 = pneg %p21
      %p28 = scmp.eq.s32.totalorder %s12, 1
      %p29 = por %p27, %p28
      %p30 = scmp.ne.s32.totalorder %s22, %s25
      %p31 = scmp.eq.s32.totalorder %s12, 0
      %p32 = por %p30, %p31
      %p33 = scmp.ne.s32.totalorder %s22, %s25
      %p34 = scmp.eq.s32.totalorder %s17, 1
      %p35 = por %p33, %p34
      %p36 = scmp.ne.s32.totalorder %s25, %s26
      %p37 = scmp.eq.s32.totalorder %s17, 0
      %p38 = por %p36, %p37
      %p39 = scmp.ne.s32.totalorder %s25, %s26
      %p40 = scmp.eq.s32.totalorder %s18, 1
      %p41 = por %p39, %p40
      %p43 = scmp.ne.s32.totalorder %s26, %s42
      %p44 = scmp.eq.s32.totalorder %s18, 0
      %p45 = por %p43, %p44
      %s47 = sadd.s32 %s46, 1
      %p50 = scmp.eq.s32.totalorder %s12, 1
      %p51 = scmp.ne.s32.totalorder %s46, %s48
      %p52 = scmp.eq.s32.totalorder %s12, 0
      %p53 = por %p51, %p52
      %p54 = scmp.ne.s32.totalorder %s46, %s48
      %p55 = scmp.eq.s32.totalorder %s17, 1
      %p56 = por %p54, %p55
      %p57 = scmp.ne.s32.totalorder %s48, %s49
      %p58 = scmp.eq.s32.totalorder %s17, 0
      %p59 = por %p57, %p58
      %p60 = scmp.ne.s32.totalorder %s48, %s49
      %p61 = scmp.eq.s32.totalorder %s18, 1
      %p62 = por %p60, %p61
      %p64 = scmp.ne.s32.totalorder %s49, %s63
      %p65 = scmp.eq.s32.totalorder %s18, 0
      %p66 = por %p64, %p65
      %s68 = sadd.s32 %s67, 1
      %p71 = scmp.eq.s32.totalorder %s12, 1
      %p72 = scmp.ne.s32.totalorder %s67, %s69
      %p73 = scmp.eq.s32.totalorder %s12, 0
      %p74 = por %p72, %p73
      %p75 = scmp.ne.s32.totalorder %s67, %s69
      %p76 = scmp.eq.s32.totalorder %s17, 1
      %p77 = por %p75, %p76
      %p78 = scmp.ne.s32.totalorder %s69, %s70
      %p79 = scmp.eq.s32.totalorder %s17, 0
      %p80 = por %p78, %p79
      %p81 = scmp.ne.s32.totalorder %s69, %s70
      %p82 = scmp.eq.s32.totalorder %s18, 1
      %p83 = por %p81, %p82
      %p85 = scmp.ne.s32.totalorder %s70, %s84
      %p86 = scmp.eq.s32.totalorder %s18, 0
      %p87 = por %p85, %p86
      %s88 = ssub.s32 %s12, %s19
      %p89 = scmp.eq.s32.totalorder %s88, 0
      %s91 = sadd.s32 %s90, 1
      %s92 = scalar_select %p89, %s90, %s91
      %p95 = pneg %p89
      %p96 = scmp.eq.s32.totalorder %s12, 1
      %p97 = por %p95, %p96
      %p98 = scmp.ne.s32.totalorder %s90, %s93
      %p99 = scmp.eq.s32.totalorder %s12, 0
      %p100 = por %p98, %p99
      %p101 = scmp.ne.s32.totalorder %s90, %s93
      %p102 = scmp.eq.s32.totalorder %s17, 1
      %p103 = por %p101, %p102
      %p104 = scmp.ne.s32.totalorder %s93, %s94
      %p105 = scmp.eq.s32.totalorder %s17, 0
      %p106 = por %p104, %p105
      %p107 = scmp.ne.s32.totalorder %s93, %s94
      %p108 = scmp.eq.s32.totalorder %s18, 1
      %p109 = por %p107, %p108
      %p111 = scmp.ne.s32.totalorder %s94, %s110
      %p112 = scmp.eq.s32.totalorder %s18, 0
      %p113 = por %p111, %p112
      %p114 = scmp.le.s32.totalorder 1, %s12
      %p115 = scmp.lt.s32.totalorder %s12, 3
      %p116 = pnand %p114, %p115
      %p117 = pneg %p116
      // Predicated region
      $region9: #{tpu_custom_call.1} parent=5 // pred_check
        _
      $region10: #{tpu_custom_call.1} parent=5 // pred_check_branch
        %119 = sbr.rel (%p116) target = $region12
      $region11: #{tpu_custom_call.1} parent=5 // pred_region
        %s120 = ssub.s32 %s12, 1
        // Predicated region
        $region13: #{tpu_custom_call.1} parent=11 // pred_check
          %p121 = pneg %p59
        $region14: #{tpu_custom_call.1} parent=11 // pred_check_branch
          %123 = sbr.rel (%p121) target = $region16
        $region15: #{tpu_custom_call.1} parent=11 // pred_region
          _
        $region16: #{tpu_custom_call.1} parent=11 // pred_fallthru
          _
        // Predicated region
        $region17: #{tpu_custom_call.1} parent=11 // pred_check
          %p124 = pneg %p80
        $region18: #{tpu_custom_call.1} parent=11 // pred_check_branch
          %126 = sbr.rel (%p124) target = $region20
        $region19: #{tpu_custom_call.1} parent=11 // pred_region
          _
        $region20: #{tpu_custom_call.1} parent=11 // pred_fallthru
          _
      $region12: #{tpu_custom_call.1} parent=5 // pred_fallthru
        _
      %p127 = scmp.lt.s32.totalorder %s12, 2
      // Predicated region
      $region21: #{tpu_custom_call.1} parent=5 // pred_check
        %p128 = pneg %p127
      $region22: #{tpu_custom_call.1} parent=5 // pred_check_branch
        %130 = sbr.rel (%p128) target = $region24
      $region23: #{tpu_custom_call.1} parent=5 // pred_region
        // Predicated region
        $region25: #{tpu_custom_call.1} parent=23 // pred_check
          %p131 = pneg %p32
        $region26: #{tpu_custom_call.1} parent=23 // pred_check_branch
          %133 = sbr.rel (%p131) target = $region28
        $region27: #{tpu_custom_call.1} parent=23 // pred_region
          %s134 = smul.u32 8, %s12
          %p135 = scmp.lt.s32.totalorder %s134, 15
          %s136 = scalar_select %p135, %s134, 15
          %s137 = smul.addr %s136, 20
          %s138 = smul.addr %s137, 8
          %s139 = scalar_lea.vmem %s0, %s138
          %s140 = smul.u32 8, %s12
        $region28: #{tpu_custom_call.1} parent=23 // pred_fallthru
          _
      $region24: #{tpu_custom_call.1} parent=5 // pred_fallthru
        _
      %p141 = scmp.le.s32.totalorder 1, %s12
      %p142 = scmp.lt.s32.totalorder %s12, 3
      %p143 = pnand %p141, %p142
      %p144 = pneg %p143
      // Predicated region
      $region29: #{tpu_custom_call.1} parent=5 // pred_check
        _
      $region30: #{tpu_custom_call.1} parent=5 // pred_check_branch
        %146 = sbr.rel (%p143) target = $region32
      $region31: #{tpu_custom_call.1} parent=5 // pred_region
        %s147 = ssub.s32 %s12, 1
        %s148 = smul.u32 8, %s17
        %p149 = scmp.lt.s32.totalorder %s148, 15
        %s150 = scalar_select %p149, %s148, 15
        %s151 = smul.addr %s150, 20
        %s152 = smul.addr %s151, 8
        %s153 = scalar_lea.vmem %s0, %s152
        %p154 = pneg %p38
        %p155 = pneg %p35
        %p156 = pneg %p59
        %p157 = pneg %p56
        %p158 = pneg %p80
        %p159 = pneg %p77
        %p160 = pneg %p106
        %p161 = pneg %p103
        %s162 = sand.u32 %s93, 1
        %s163 = scalar_lea.sflag [#allocation3], %s162
        %s164 = sand.u32 %s93, 1
        %s165 = smul.addr %s164, 512
        %s166 = scalar_lea.vmem [#allocation2], %s165
        %s167 = smul.u32 8, %s17
        %p168 = scmp.lt.s32.totalorder %s167, 15
        %s169 = scalar_select %p168, %s167, 15
        %s170 = smul.addr %s169, 20
        %s171 = smul.addr %s170, 8
        %s172 = scalar_lea.vmem %s0, %s171
        %s173 = smul.u32 8, %s17
        %s174 = smul.u32 8, %s17
        %v175 = vld [vmem:[%s172] sm:$0xff]
        %v176 = vld [vmem:[%s172 + $0x8] sm:$0x3]
        %v177 = vld [vmem:[%s172 + $0x10] sm:$0xff]
        %v178 = vld [vmem:[%s172 + $0x18] sm:$0x3]
        %v179 = vld [vmem:[%s172 + $0x20] sm:$0xff]
        %v180 = vld [vmem:[%s172 + $0x28] sm:$0x3]
        %v181 = vld [vmem:[%s172 + $0x30] sm:$0xff]
        %v182 = vld [vmem:[%s172 + $0x38] sm:$0x3]
        %v183 = vld [vmem:[%s172 + $0x40] sm:$0xff]
        %v184 = vld [vmem:[%s172 + $0x48] sm:$0x3]
        %v185 = vld [vmem:[%s172 + $0x50] sm:$0xff]
        %v186 = vld [vmem:[%s172 + $0x58] sm:$0x3]
        %v187 = vld [vmem:[%s172 + $0x60] sm:$0xff]
        %v188 = vld [vmem:[%s172 + $0x68] sm:$0x3]
        %v189 = vld [vmem:[%s172 + $0x70] sm:$0xff]
        %v190 = vld [vmem:[%s172 + $0x78] sm:$0x3]
        %v191 = vld [vmem:[%s172 + $0x80] sm:$0xff]
        %v192 = vld [vmem:[%s172 + $0x88] sm:$0x3]
        %v193 = vld [vmem:[%s172 + $0x90] sm:$0xff]
        %v194 = vld [vmem:[%s172 + $0x98] sm:$0x3]
        %v195 = vld [vmem:[%s172 + $0xa0] sm:$0xff]
        %v196 = vld [vmem:[%s172 + $0xa8] sm:$0x3]
        %v197 = vld [vmem:[%s172 + $0xb0] sm:$0xff]
        %v198 = vld [vmem:[%s172 + $0xb8] sm:$0x3]
        %v199 = vld [vmem:[%s172 + $0xc0] sm:$0xff]
        %v200 = vld [vmem:[%s172 + $0xc8] sm:$0x3]
        %v201 = vld [vmem:[%s172 + $0xd0] sm:$0xff]
        %v202 = vld [vmem:[%s172 + $0xd8] sm:$0x3]
        %v203 = vld [vmem:[%s172 + $0xe0] sm:$0xff]
        %v204 = vld [vmem:[%s172 + $0xe8] sm:$0x3]
        %v205 = vld [vmem:[%s172 + $0xf0] sm:$0xff]
        %v206 = vld [vmem:[%s172 + $0xf8] sm:$0x3]
        %v207 = vld [vmem:[%s172 + $0x100] sm:$0xff]
        %v208 = vld [vmem:[%s172 + $0x108] sm:$0x3]
        %v209 = vld [vmem:[%s172 + $0x110] sm:$0xff]
        %v210 = vld [vmem:[%s172 + $0x118] sm:$0x3]
        %v211 = vld [vmem:[%s172 + $0x120] sm:$0xff]
        %v212 = vld [vmem:[%s172 + $0x128] sm:$0x3]
        %v213 = vld [vmem:[%s172 + $0x130] sm:$0xff]
        %v214 = vld [vmem:[%s172 + $0x138] sm:$0x3]
        %v215 = vld [vmem:[%s172 + $0x140] sm:$0xff]
        %v216 = vld [vmem:[%s172 + $0x148] sm:$0x3]
        %v217 = vld [vmem:[%s172 + $0x150] sm:$0xff]
        %v218 = vld [vmem:[%s172 + $0x158] sm:$0x3]
        %v219 = vld [vmem:[%s172 + $0x160] sm:$0xff]
        %v220 = vld [vmem:[%s172 + $0x168] sm:$0x3]
        %v221 = vld [vmem:[%s172 + $0x170] sm:$0xff]
        %v222 = vld [vmem:[%s172 + $0x178] sm:$0x3]
        %v223 = vld [vmem:[%s172 + $0x180] sm:$0xff]
        %v224 = vld [vmem:[%s172 + $0x188] sm:$0x3]
        %v225 = vld [vmem:[%s172 + $0x190] sm:$0xff]
        %v226 = vld [vmem:[%s172 + $0x198] sm:$0x3]
        %v227 = vld [vmem:[%s172 + $0x1a0] sm:$0xff]
        %v228 = vld [vmem:[%s172 + $0x1a8] sm:$0x3]
        %v229 = vld [vmem:[%s172 + $0x1b0] sm:$0xff]
        %v230 = vld [vmem:[%s172 + $0x1b8] sm:$0x3]
        %v231 = vld [vmem:[%s172 + $0x1c0] sm:$0xff]
        %v232 = vld [vmem:[%s172 + $0x1c8] sm:$0x3]
        %v233 = vld [vmem:[%s172 + $0x1d0] sm:$0xff]
        %v234 = vld [vmem:[%s172 + $0x1d8] sm:$0x3]
        %v235 = vld [vmem:[%s172 + $0x1e0] sm:$0xff]
        %v236 = vld [vmem:[%s172 + $0x1e8] sm:$0x3]
        %v237 = vld [vmem:[%s172 + $0x1f0] sm:$0xff]
        %v238 = vld [vmem:[%s172 + $0x1f8] sm:$0x3]
        %v239 = vld [vmem:[%s172 + $0x200] sm:$0xff]
        %v240 = vld [vmem:[%s172 + $0x208] sm:$0x3]
        %v241 = vld [vmem:[%s172 + $0x210] sm:$0xff]
        %v242 = vld [vmem:[%s172 + $0x218] sm:$0x3]
        %v243 = vld [vmem:[%s172 + $0x220] sm:$0xff]
        %v244 = vld [vmem:[%s172 + $0x228] sm:$0x3]
        %v245 = vld [vmem:[%s172 + $0x230] sm:$0xff]
        %v246 = vld [vmem:[%s172 + $0x238] sm:$0x3]
        %v247 = vld [vmem:[%s172 + $0x240] sm:$0xff]
        %v248 = vld [vmem:[%s172 + $0x248] sm:$0x3]
        %v249 = vld [vmem:[%s172 + $0x250] sm:$0xff]
        %v250 = vld [vmem:[%s172 + $0x258] sm:$0x3]
        %v251 = vld [vmem:[%s172 + $0x260] sm:$0xff]
        %v252 = vld [vmem:[%s172 + $0x268] sm:$0x3]
        %v253 = vld [vmem:[%s172 + $0x270] sm:$0xff]
        %v254 = vld [vmem:[%s172 + $0x278] sm:$0x3]
        %v255 = vld [vmem:[%s172 + $0x280] sm:$0xff]
        %v256 = vld [vmem:[%s172 + $0x288] sm:$0x3]
        %v257 = vld [vmem:[%s172 + $0x290] sm:$0xff]
        %v258 = vld [vmem:[%s172 + $0x298] sm:$0x3]
        %v259 = vld [vmem:[%s172 + $0x2a0] sm:$0xff]
        %v260 = vld [vmem:[%s172 + $0x2a8] sm:$0x3]
        %v261 = vld [vmem:[%s172 + $0x2b0] sm:$0xff]
        %v262 = vld [vmem:[%s172 + $0x2b8] sm:$0x3]
        %v263 = vld [vmem:[%s172 + $0x2c0] sm:$0xff]
        %v264 = vld [vmem:[%s172 + $0x2c8] sm:$0x3]
        %v265 = vld [vmem:[%s172 + $0x2d0] sm:$0xff]
        %v266 = vld [vmem:[%s172 + $0x2d8] sm:$0x3]
        %v267 = vld [vmem:[%s172 + $0x2e0] sm:$0xff]
        %v268 = vld [vmem:[%s172 + $0x2e8] sm:$0x3]
        %v269 = vld [vmem:[%s172 + $0x2f0] sm:$0xff]
        %v270 = vld [vmem:[%s172 + $0x2f8] sm:$0x3]
        %v271 = vld [vmem:[%s172 + $0x300] sm:$0xff]
        %v272 = vld [vmem:[%s172 + $0x308] sm:$0x3]
        %v273 = vld [vmem:[%s172 + $0x310] sm:$0xff]
        %v274 = vld [vmem:[%s172 + $0x318] sm:$0x3]
        %v275 = vld [vmem:[%s172 + $0x320] sm:$0xff]
        %v276 = vld [vmem:[%s172 + $0x328] sm:$0x3]
        %v277 = vld [vmem:[%s172 + $0x330] sm:$0xff]
        %v278 = vld [vmem:[%s172 + $0x338] sm:$0x3]
        %v279 = vld [vmem:[%s172 + $0x340] sm:$0xff]
        %v280 = vld [vmem:[%s172 + $0x348] sm:$0x3]
        %v281 = vld [vmem:[%s172 + $0x350] sm:$0xff]
        %v282 = vld [vmem:[%s172 + $0x358] sm:$0x3]
        %v283 = vld [vmem:[%s172 + $0x360] sm:$0xff]
        %v284 = vld [vmem:[%s172 + $0x368] sm:$0x3]
        %v285 = vld [vmem:[%s172 + $0x370] sm:$0xff]
        %v286 = vld [vmem:[%s172 + $0x378] sm:$0x3]
        %v287 = vld [vmem:[%s172 + $0x380] sm:$0xff]
        %v288 = vld [vmem:[%s172 + $0x388] sm:$0x3]
        %v289 = vld [vmem:[%s172 + $0x390] sm:$0xff]
        %v290 = vld [vmem:[%s172 + $0x398] sm:$0x3]
        %v291 = vld [vmem:[%s172 + $0x3a0] sm:$0xff]
        %v292 = vld [vmem:[%s172 + $0x3a8] sm:$0x3]
        %v293 = vld [vmem:[%s172 + $0x3b0] sm:$0xff]
        %v294 = vld [vmem:[%s172 + $0x3b8] sm:$0x3]
        %v295 = vld [vmem:[%s172 + $0x3c0] sm:$0xff]
        %v296 = vld [vmem:[%s172 + $0x3c8] sm:$0x3]
        %v297 = vld [vmem:[%s172 + $0x3d0] sm:$0xff]
        %v298 = vld [vmem:[%s172 + $0x3d8] sm:$0x3]
        %v299 = vld [vmem:[%s172 + $0x3e0] sm:$0xff]
        %v300 = vld [vmem:[%s172 + $0x3e8] sm:$0x3]
        %v301 = vld [vmem:[%s172 + $0x3f0] sm:$0xff]
        %v302 = vld [vmem:[%s172 + $0x3f8] sm:$0x3]
        %v303 = vld [vmem:[%s172 + $0x400] sm:$0xff]
        %v304 = vld [vmem:[%s172 + $0x408] sm:$0x3]
        %v305 = vld [vmem:[%s172 + $0x410] sm:$0xff]
        %v306 = vld [vmem:[%s172 + $0x418] sm:$0x3]
        %v307 = vld [vmem:[%s172 + $0x420] sm:$0xff]
        %v308 = vld [vmem:[%s172 + $0x428] sm:$0x3]
        %v309 = vld [vmem:[%s172 + $0x430] sm:$0xff]
        %v310 = vld [vmem:[%s172 + $0x438] sm:$0x3]
        %v311 = vld [vmem:[%s172 + $0x440] sm:$0xff]
        %v312 = vld [vmem:[%s172 + $0x448] sm:$0x3]
        %v313 = vld [vmem:[%s172 + $0x450] sm:$0xff]
        %v314 = vld [vmem:[%s172 + $0x458] sm:$0x3]
        %v315 = vld [vmem:[%s172 + $0x460] sm:$0xff]
        %v316 = vld [vmem:[%s172 + $0x468] sm:$0x3]
        %v317 = vld [vmem:[%s172 + $0x470] sm:$0xff]
        %v318 = vld [vmem:[%s172 + $0x478] sm:$0x3]
        %v319 = vld [vmem:[%s172 + $0x480] sm:$0xff]
        %v320 = vld [vmem:[%s172 + $0x488] sm:$0x3]
        %v321 = vld [vmem:[%s172 + $0x490] sm:$0xff]
        %v322 = vld [vmem:[%s172 + $0x498] sm:$0x3]
        %v323 = vld [vmem:[%s172 + $0x4a0] sm:$0xff]
        %v324 = vld [vmem:[%s172 + $0x4a8] sm:$0x3]
        %v325 = vld [vmem:[%s172 + $0x4b0] sm:$0xff]
        %v326 = vld [vmem:[%s172 + $0x4b8] sm:$0x3]
        %v327 = vld [vmem:[%s172 + $0x4c0] sm:$0xff]
        %v328 = vld [vmem:[%s172 + $0x4c8] sm:$0x3]
        %v329 = vld [vmem:[%s172 + $0x4d0] sm:$0xff]
        %v330 = vld [vmem:[%s172 + $0x4d8] sm:$0x3]
        %v331 = vld [vmem:[%s172 + $0x4e0] sm:$0xff]
        %v332 = vld [vmem:[%s172 + $0x4e8] sm:$0x3]
        %v333 = vld [vmem:[%s172 + $0x4f0] sm:$0xff]
        %v334 = vld [vmem:[%s172 + $0x4f8] sm:$0x3]
        %v335 = vld [vmem:[%s1] sm:$0xf]
        %vm464 = vcmask 1046528
        %v465 = vrot.slane %v175, 1
        %v466 = vrot.slane %v176, 1
        %v467 = vsel %vm464, %v465, %v466
        %v468 = vrot.slane %v177, 1
        %v469 = vrot.slane %v178, 1
        %v470 = vsel %vm464, %v468, %v469
        %v471 = vrot.slane %v179, 1
        %v472 = vrot.slane %v180, 1
        %v473 = vsel %vm464, %v471, %v472
        %v474 = vrot.slane %v181, 1
        %v475 = vrot.slane %v182, 1
        %v476 = vsel %vm464, %v474, %v475
        %v477 = vrot.slane %v183, 1
        %v478 = vrot.slane %v184, 1
        %v479 = vsel %vm464, %v477, %v478
        %v480 = vrot.slane %v185, 1
        %v481 = vrot.slane %v186, 1
        %v482 = vsel %vm464, %v480, %v481
        %v483 = vrot.slane %v187, 1
        %v484 = vrot.slane %v188, 1
        %v485 = vsel %vm464, %v483, %v484
        %v486 = vrot.slane %v189, 1
        %v487 = vrot.slane %v190, 1
        %v488 = vsel %vm464, %v486, %v487
        %v489 = vrot.slane %v195, 1
        %v490 = vrot.slane %v196, 1
        %v491 = vsel %vm464, %v489, %v490
        %v492 = vrot.slane %v197, 1
        %v493 = vrot.slane %v198, 1
        %v494 = vsel %vm464, %v492, %v493
        %v495 = vrot.slane %v199, 1
        %v496 = vrot.slane %v200, 1
        %v497 = vsel %vm464, %v495, %v496
        %v498 = vrot.slane %v201, 1
        %v499 = vrot.slane %v202, 1
        %v500 = vsel %vm464, %v498, %v499
        %v501 = vrot.slane %v203, 1
        %v502 = vrot.slane %v204, 1
        %v503 = vsel %vm464, %v501, %v502
        %v504 = vrot.slane %v205, 1
        %v505 = vrot.slane %v206, 1
        %v506 = vsel %vm464, %v504, %v505
        %v507 = vrot.slane %v207, 1
        %v508 = vrot.slane %v208, 1
        %v509 = vsel %vm464, %v507, %v508
        %v510 = vrot.slane %v209, 1
        %v511 = vrot.slane %v210, 1
        %v512 = vsel %vm464, %v510, %v511
        %v513 = vrot.slane %v215, 1
        %v514 = vrot.slane %v216, 1
        %v515 = vsel %vm464, %v513, %v514
        %v516 = vrot.slane %v217, 1
        %v517 = vrot.slane %v218, 1
        %v518 = vsel %vm464, %v516, %v517
        %v519 = vrot.slane %v219, 1
        %v520 = vrot.slane %v220, 1
        %v521 = vsel %vm464, %v519, %v520
        %v522 = vrot.slane %v221, 1
        %v523 = vrot.slane %v222, 1
        %v524 = vsel %vm464, %v522, %v523
        %v525 = vrot.slane %v223, 1
        %v526 = vrot.slane %v224, 1
        %v527 = vsel %vm464, %v525, %v526
        %v528 = vrot.slane %v225, 1
        %v529 = vrot.slane %v226, 1
        %v530 = vsel %vm464, %v528, %v529
        %v531 = vrot.slane %v227, 1
        %v532 = vrot.slane %v228, 1
        %v533 = vsel %vm464, %v531, %v532
        %v534 = vrot.slane %v229, 1
        %v535 = vrot.slane %v230, 1
        %v536 = vsel %vm464, %v534, %v535
        %v537 = vrot.slane %v235, 1
        %v538 = vrot.slane %v236, 1
        %v539 = vsel %vm464, %v537, %v538
        %v540 = vrot.slane %v237, 1
        %v541 = vrot.slane %v238, 1
        %v542 = vsel %vm464, %v540, %v541
        %v543 = vrot.slane %v239, 1
        %v544 = vrot.slane %v240, 1
        %v545 = vsel %vm464, %v543, %v544
        %v546 = vrot.slane %v241, 1
        %v547 = vrot.slane %v242, 1
        %v548 = vsel %vm464, %v546, %v547
        %v549 = vrot.slane %v243, 1
        %v550 = vrot.slane %v244, 1
        %v551 = vsel %vm464, %v549, %v550
        %v552 = vrot.slane %v245, 1
        %v553 = vrot.slane %v246, 1
        %v554 = vsel %vm464, %v552, %v553
        %v555 = vrot.slane %v247, 1
        %v556 = vrot.slane %v248, 1
        %v557 = vsel %vm464, %v555, %v556
        %v558 = vrot.slane %v249, 1
        %v559 = vrot.slane %v250, 1
        %v560 = vsel %vm464, %v558, %v559
        %v561 = vrot.slane %v255, 1
        %v562 = vrot.slane %v256, 1
        %v563 = vsel %vm464, %v561, %v562
        %v564 = vrot.slane %v257, 1
        %v565 = vrot.slane %v258, 1
        %v566 = vsel %vm464, %v564, %v565
        %v567 = vrot.slane %v259, 1
        %v568 = vrot.slane %v260, 1
        %v569 = vsel %vm464, %v567, %v568
        %v570 = vrot.slane %v261, 1
        %v571 = vrot.slane %v262, 1
        %v572 = vsel %vm464, %v570, %v571
        %v573 = vrot.slane %v263, 1
        %v574 = vrot.slane %v264, 1
        %v575 = vsel %vm464, %v573, %v574
        %v576 = vrot.slane %v265, 1
        %v577 = vrot.slane %v266, 1
        %v578 = vsel %vm464, %v576, %v577
        %v579 = vrot.slane %v267, 1
        %v580 = vrot.slane %v268, 1
        %v581 = vsel %vm464, %v579, %v580
        %v582 = vrot.slane %v269, 1
        %v583 = vrot.slane %v270, 1
        %v584 = vsel %vm464, %v582, %v583
        %v585 = vrot.slane %v275, 1
        %v586 = vrot.slane %v276, 1
        %v587 = vsel %vm464, %v585, %v586
        %v588 = vrot.slane %v277, 1
        %v589 = vrot.slane %v278, 1
        %v590 = vsel %vm464, %v588, %v589
        %v591 = vrot.slane %v279, 1
        %v592 = vrot.slane %v280, 1
        %v593 = vsel %vm464, %v591, %v592
        %v594 = vrot.slane %v281, 1
        %v595 = vrot.slane %v282, 1
        %v596 = vsel %vm464, %v594, %v595
        %v597 = vrot.slane %v283, 1
        %v598 = vrot.slane %v284, 1
        %v599 = vsel %vm464, %v597, %v598
        %v600 = vrot.slane %v285, 1
        %v601 = vrot.slane %v286, 1
        %v602 = vsel %vm464, %v600, %v601
        %v603 = vrot.slane %v287, 1
        %v604 = vrot.slane %v288, 1
        %v605 = vsel %vm464, %v603, %v604
        %v606 = vrot.slane %v289, 1
        %v607 = vrot.slane %v290, 1
        %v608 = vsel %vm464, %v606, %v607
        %v609 = vrot.slane %v295, 1
        %v610 = vrot.slane %v296, 1
        %v611 = vsel %vm464, %v609, %v610
        %v612 = vrot.slane %v297, 1
        %v613 = vrot.slane %v298, 1
        %v614 = vsel %vm464, %v612, %v613
        %v615 = vrot.slane %v299, 1
        %v616 = vrot.slane %v300, 1
        %v617 = vsel %vm464, %v615, %v616
        %v618 = vrot.slane %v301, 1
        %v619 = vrot.slane %v302, 1
        %v620 = vsel %vm464, %v618, %v619
        %v621 = vrot.slane %v303, 1
        %v622 = vrot.slane %v304, 1
        %v623 = vsel %vm464, %v621, %v622
        %v624 = vrot.slane %v305, 1
        %v625 = vrot.slane %v306, 1
        %v626 = vsel %vm464, %v624, %v625
        %v627 = vrot.slane %v307, 1
        %v628 = vrot.slane %v308, 1
        %v629 = vsel %vm464, %v627, %v628
        %v630 = vrot.slane %v309, 1
        %v631 = vrot.slane %v310, 1
        %v632 = vsel %vm464, %v630, %v631
        %v633 = vrot.slane %v315, 1
        %v634 = vrot.slane %v316, 1
        %v635 = vsel %vm464, %v633, %v634
        %v636 = vrot.slane %v317, 1
        %v637 = vrot.slane %v318, 1
        %v638 = vsel %vm464, %v636, %v637
        %v639 = vrot.slane %v319, 1
        %v640 = vrot.slane %v320, 1
        %v641 = vsel %vm464, %v639, %v640
        %v642 = vrot.slane %v321, 1
        %v643 = vrot.slane %v322, 1
        %v644 = vsel %vm464, %v642, %v643
        %v645 = vrot.slane %v323, 1
        %v646 = vrot.slane %v324, 1
        %v647 = vsel %vm464, %v645, %v646
        %v648 = vrot.slane %v325, 1
        %v649 = vrot.slane %v326, 1
        %v650 = vsel %vm464, %v648, %v649
        %v651 = vrot.slane %v327, 1
        %v652 = vrot.slane %v328, 1
        %v653 = vsel %vm464, %v651, %v652
        %v654 = vrot.slane %v329, 1
        %v655 = vrot.slane %v330, 1
        %v656 = vsel %vm464, %v654, %v655
        %s657 = scalar_lea.vmem %s1, 4
        %v658 = vld [vmem:[%s657] sm:$0xf]
        %vm659 = vcmask 31744
        %v660 = vsel %vm659, %v467, 0
        %v662 = vsel %vm659, %v470, 0
        %v664 = vsel %vm659, %v473, 0
        %v666 = vsel %vm659, %v476, 0
        %v668 = vsel %vm659, %v479, 0
        %v670 = vsel %vm659, %v482, 0
        %v672 = vsel %vm659, %v485, 0
        %v674 = vsel %vm659, %v488, 0
        %v676 = vsel %vm659, %v491, 0
        %v678 = vsel %vm659, %v494, 0
        %v680 = vsel %vm659, %v497, 0
        %v682 = vsel %vm659, %v500, 0
        %v684 = vsel %vm659, %v503, 0
        %v686 = vsel %vm659, %v506, 0
        %v688 = vsel %vm659, %v509, 0
        %v690 = vsel %vm659, %v512, 0
        %v692 = vsel %vm659, %v515, 0
        %v694 = vsel %vm659, %v518, 0
        %v696 = vsel %vm659, %v521, 0
        %v698 = vsel %vm659, %v524, 0
        %v700 = vsel %vm659, %v527, 0
        %v702 = vsel %vm659, %v530, 0
        %v704 = vsel %vm659, %v533, 0
        %v706 = vsel %vm659, %v536, 0
        %v708 = vsel %vm659, %v539, 0
        %v710 = vsel %vm659, %v542, 0
        %v712 = vsel %vm659, %v545, 0
        %v714 = vsel %vm659, %v548, 0
        %v716 = vsel %vm659, %v551, 0
        %v718 = vsel %vm659, %v554, 0
        %v720 = vsel %vm659, %v557, 0
        %v722 = vsel %vm659, %v560, 0
        %v724 = vsel %vm659, %v563, 0
        %v726 = vsel %vm659, %v566, 0
        %v728 = vsel %vm659, %v569, 0
        %v730 = vsel %vm659, %v572, 0
        %v732 = vsel %vm659, %v575, 0
        %v734 = vsel %vm659, %v578, 0
        %v736 = vsel %vm659, %v581, 0
        %v738 = vsel %vm659, %v584, 0
        %v740 = vsel %vm659, %v587, 0
        %v742 = vsel %vm659, %v590, 0
        %v744 = vsel %vm659, %v593, 0
        %v746 = vsel %vm659, %v596, 0
        %v748 = vsel %vm659, %v599, 0
        %v750 = vsel %vm659, %v602, 0
        %v752 = vsel %vm659, %v605, 0
        %v754 = vsel %vm659, %v608, 0
        %v756 = vsel %vm659, %v611, 0
        %v758 = vsel %vm659, %v614, 0
        %v760 = vsel %vm659, %v617, 0
        %v762 = vsel %vm659, %v620, 0
        %v764 = vsel %vm659, %v623, 0
        %v766 = vsel %vm659, %v626, 0
        %v768 = vsel %vm659, %v629, 0
        %v770 = vsel %vm659, %v632, 0
        %v772 = vsel %vm659, %v635, 0
        %v774 = vsel %vm659, %v638, 0
        %v776 = vsel %vm659, %v641, 0
        %v778 = vsel %vm659, %v644, 0
        %v780 = vsel %vm659, %v647, 0
        %v782 = vsel %vm659, %v650, 0
        %v784 = vsel %vm659, %v653, 0
        %v786 = vsel %vm659, %v656, 0
        %vm788 = vcmask 1043456
        %v790 = vsel %vm788, %v658, 0
        %792 = vmatprep.subr.mxu0 0.0
        %793 = vmatpush1.msra.mxu0 0.0
        %794 = vmatprep.subr.mxu0 0.0
        %795 = vmatpush1.msra.mxu0 0.0
        %796 = vmatprep.subr.mxu0 0.0
        %797 = vmatpush1.msra.mxu0 0.0
        %798 = vmatprep.subr.mxu0 0.0
        %799 = vmatpush1.msra.mxu0 0.0
        %800 = vmatprep.subr.mxu0 0.0
        %801 = vmatpush1.msra.mxu0 0.0
        %802 = vmatprep.subr.mxu0 0.0
        %803 = vmatpush1.msra.mxu0 0.0
        %804 = vmatprep.subr.mxu0 0.0
        %805 = vmatpush1.msra.mxu0 0.0
        %806 = vmatprep.subr.mxu0 0.0
        %807 = vmatpush1.msra.mxu0 0.0
        %808 = vmatprep.subr.mxu0 0.0
        %809 = vmatpush1.msra.mxu0 0.0
        %810 = vmatprep.subr.mxu0 0.0
        %811 = vmatpush1.msra.mxu0 0.0
        %812 = vmatprep.subr.mxu0 0.0
        %813 = vmatpush1.msra.mxu0 0.0
        %814 = vmatprep.subr.mxu0 0.0
        %815 = vmatpush1.msra.mxu0 0.0
        %816 = vmatprep.subr.mxu0 0.0
        %817 = vmatpush1.msra.mxu0 0.0
        %818 = vmatprep.subr.mxu0 0.0
        %819 = vmatpush1.msra.mxu0 0.0
        %820 = vmatprep.subr.mxu0 0.0
        %821 = vmatpush1.msra.mxu0 0.0
        %822 = vmatprep.subr.mxu0 0.0
        %823 = vmatpush1.msra.mxu0 %v790
        %824 = vmatprep.subr.mxu0 0.0
        %825 = vmatpush2.msra.mxu0 0.0
        %826 = vmatprep.subr.mxu0 0.0
        %827 = vmatpush2.msra.mxu0 0.0
        %828 = vmatprep.subr.mxu0 0.0
        %829 = vmatpush2.msra.mxu0 0.0
        %830 = vmatprep.subr.mxu0 0.0
        %831 = vmatpush2.msra.mxu0 0.0
        %832 = vmatprep.subr.mxu0 0.0
        %833 = vmatpush2.msra.mxu0 0.0
        %834 = vmatprep.subr.mxu0 0.0
        %835 = vmatpush2.msra.mxu0 0.0
        %836 = vmatprep.subr.mxu0 0.0
        %837 = vmatpush2.msra.mxu0 0.0
        %838 = vmatprep.subr.mxu0 0.0
        %839 = vmatpush2.msra.mxu0 0.0
        %840 = vmatprep.subr.mxu0 0.0
        %841 = vmatpush2.msra.mxu0 0.0
        %842 = vmatprep.subr.mxu0 0.0
        %843 = vmatpush2.msra.mxu0 0.0
        %844 = vmatprep.subr.mxu0 0.0
        %845 = vmatpush2.msra.mxu0 0.0
        %846 = vmatprep.subr.mxu0 0.0
        %847 = vmatpush2.msra.mxu0 0.0
        %848 = vmatprep.subr.mxu0 0.0
        %849 = vmatpush2.msra.mxu0 0.0
        %850 = vmatprep.subr.mxu0 0.0
        %851 = vmatpush2.msra.mxu0 0.0
        %852 = vmatprep.subr.mxu0 0.0
        %853 = vmatpush2.msra.mxu0 0.0
        %854 = vmatprep.subr.mxu0 0.0
        %855 = vmatpush2.msra.mxu0 0.0
        %856 = vmatprep.mubr.f32.mxu0 0.0
        %857 = vmatmul.mubr.f32.gmra.mxu0 %v660
        %v858 = vpop.f32.mrf.mxu0
        %v859 = vadd.f32 0.0, %v858
        %v860 = vpop.f32.mrf.mxu0
        %861 = vmatprep.mubr.f32.mxu0 0.0
        %862 = vmatmul.mubr.f32.gmra.mxu0 %v662
        %v863 = vpop.f32.mrf.mxu0
        %v864 = vadd.f32 0.0, %v863
        %v865 = vpop.f32.mrf.mxu0
        %866 = vmatprep.mubr.f32.mxu0 0.0
        %867 = vmatmul.mubr.f32.gmra.mxu0 %v664
        %v868 = vpop.f32.mrf.mxu0
        %v869 = vadd.f32 0.0, %v868
        %v870 = vpop.f32.mrf.mxu0
        %871 = vmatprep.mubr.f32.mxu0 0.0
        %872 = vmatmul.mubr.f32.gmra.mxu0 %v666
        %v873 = vpop.f32.mrf.mxu0
        %v874 = vadd.f32 0.0, %v873
        %v875 = vpop.f32.mrf.mxu0
        %876 = vmatprep.mubr.f32.mxu0 0.0
        %877 = vmatmul.mubr.f32.gmra.mxu0 %v668
        %v878 = vpop.f32.mrf.mxu0
        %v879 = vadd.f32 0.0, %v878
        %v880 = vpop.f32.mrf.mxu0
        %881 = vmatprep.mubr.f32.mxu0 0.0
        %882 = vmatmul.mubr.f32.gmra.mxu0 %v670
        %v883 = vpop.f32.mrf.mxu0
        %v884 = vadd.f32 0.0, %v883
        %v885 = vpop.f32.mrf.mxu0
        %886 = vmatprep.mubr.f32.mxu0 0.0
        %887 = vmatmul.mubr.f32.gmra.mxu0 %v672
        %v888 = vpop.f32.mrf.mxu0
        %v889 = vadd.f32 0.0, %v888
        %v890 = vpop.f32.mrf.mxu0
        %891 = vmatprep.mubr.f32.mxu0 0.0
        %892 = vmatmul.mubr.f32.gmra.mxu0 %v674
        %v893 = vpop.f32.mrf.mxu0
        %v894 = vadd.f32 0.0, %v893
        %v895 = vpop.f32.mrf.mxu0
        %896 = vmatprep.mubr.f32.mxu0 0.0
        %897 = vmatmul.mubr.f32.gmra.mxu0 %v676
        %v898 = vpop.f32.mrf.mxu0
        %v899 = vadd.f32 0.0, %v898
        %v900 = vpop.f32.mrf.mxu0
        %901 = vmatprep.mubr.f32.mxu0 0.0
        %902 = vmatmul.mubr.f32.gmra.mxu0 %v678
        %v903 = vpop.f32.mrf.mxu0
        %v904 = vadd.f32 0.0, %v903
        %v905 = vpop.f32.mrf.mxu0
        %906 = vmatprep.mubr.f32.mxu0 0.0
        %907 = vmatmul.mubr.f32.gmra.mxu0 %v680
        %v908 = vpop.f32.mrf.mxu0
        %v909 = vadd.f32 0.0, %v908
        %v910 = vpop.f32.mrf.mxu0
        %911 = vmatprep.mubr.f32.mxu0 0.0
        %912 = vmatmul.mubr.f32.gmra.mxu0 %v682
        %v913 = vpop.f32.mrf.mxu0
        %v914 = vadd.f32 0.0, %v913
        %v915 = vpop.f32.mrf.mxu0
        %916 = vmatprep.mubr.f32.mxu0 0.0
        %917 = vmatmul.mubr.f32.gmra.mxu0 %v684
        %v918 = vpop.f32.mrf.mxu0
        %v919 = vadd.f32 0.0, %v918
        %v920 = vpop.f32.mrf.mxu0
        %921 = vmatprep.mubr.f32.mxu0 0.0
        %922 = vmatmul.mubr.f32.gmra.mxu0 %v686
        %v923 = vpop.f32.mrf.mxu0
        %v924 = vadd.f32 0.0, %v923
        %v925 = vpop.f32.mrf.mxu0
        %926 = vmatprep.mubr.f32.mxu0 0.0
        %927 = vmatmul.mubr.f32.gmra.mxu0 %v688
        %v928 = vpop.f32.mrf.mxu0
        %v929 = vadd.f32 0.0, %v928
        %v930 = vpop.f32.mrf.mxu0
        %931 = vmatprep.mubr.f32.mxu0 0.0
        %932 = vmatmul.mubr.f32.gmra.mxu0 %v690
        %v933 = vpop.f32.mrf.mxu0
        %v934 = vadd.f32 0.0, %v933
        %v935 = vpop.f32.mrf.mxu0
        %936 = vmatprep.mubr.f32.mxu0 0.0
        %937 = vmatmul.mubr.f32.gmra.mxu0 %v692
        %v938 = vpop.f32.mrf.mxu0
        %v939 = vadd.f32 0.0, %v938
        %v940 = vpop.f32.mrf.mxu0
        %941 = vmatprep.mubr.f32.mxu0 0.0
        %942 = vmatmul.mubr.f32.gmra.mxu0 %v694
        %v943 = vpop.f32.mrf.mxu0
        %v944 = vadd.f32 0.0, %v943
        %v945 = vpop.f32.mrf.mxu0
        %946 = vmatprep.mubr.f32.mxu0 0.0
        %947 = vmatmul.mubr.f32.gmra.mxu0 %v696
        %v948 = vpop.f32.mrf.mxu0
        %v949 = vadd.f32 0.0, %v948
        %v950 = vpop.f32.mrf.mxu0
        %951 = vmatprep.mubr.f32.mxu0 0.0
        %952 = vmatmul.mubr.f32.gmra.mxu0 %v698
        %v953 = vpop.f32.mrf.mxu0
        %v954 = vadd.f32 0.0, %v953
        %v955 = vpop.f32.mrf.mxu0
        %956 = vmatprep.mubr.f32.mxu0 0.0
        %957 = vmatmul.mubr.f32.gmra.mxu0 %v700
        %v958 = vpop.f32.mrf.mxu0
        %v959 = vadd.f32 0.0, %v958
        %v960 = vpop.f32.mrf.mxu0
        %961 = vmatprep.mubr.f32.mxu0 0.0
        %962 = vmatmul.mubr.f32.gmra.mxu0 %v702
        %v963 = vpop.f32.mrf.mxu0
        %v964 = vadd.f32 0.0, %v963
        %v965 = vpop.f32.mrf.mxu0
        %966 = vmatprep.mubr.f32.mxu0 0.0
        %967 = vmatmul.mubr.f32.gmra.mxu0 %v704
        %v968 = vpop.f32.mrf.mxu0
        %v969 = vadd.f32 0.0, %v968
        %v970 = vpop.f32.mrf.mxu0
        %971 = vmatprep.mubr.f32.mxu0 0.0
        %972 = vmatmul.mubr.f32.gmra.mxu0 %v706
        %v973 = vpop.f32.mrf.mxu0
        %v974 = vadd.f32 0.0, %v973
        %v975 = vpop.f32.mrf.mxu0
        %976 = vmatprep.mubr.f32.mxu0 0.0
        %977 = vmatmul.mubr.f32.gmra.mxu0 %v708
        %v978 = vpop.f32.mrf.mxu0
        %v979 = vadd.f32 0.0, %v978
        %v980 = vpop.f32.mrf.mxu0
        %981 = vmatprep.mubr.f32.mxu0 0.0
        %982 = vmatmul.mubr.f32.gmra.mxu0 %v710
        %v983 = vpop.f32.mrf.mxu0
        %v984 = vadd.f32 0.0, %v983
        %v985 = vpop.f32.mrf.mxu0
        %986 = vmatprep.mubr.f32.mxu0 0.0
        %987 = vmatmul.mubr.f32.gmra.mxu0 %v712
        %v988 = vpop.f32.mrf.mxu0
        %v989 = vadd.f32 0.0, %v988
        %v990 = vpop.f32.mrf.mxu0
        %991 = vmatprep.mubr.f32.mxu0 0.0
        %992 = vmatmul.mubr.f32.gmra.mxu0 %v714
        %v993 = vpop.f32.mrf.mxu0
        %v994 = vadd.f32 0.0, %v993
        %v995 = vpop.f32.mrf.mxu0
        %996 = vmatprep.mubr.f32.mxu0 0.0
        %997 = vmatmul.mubr.f32.gmra.mxu0 %v716
        %v998 = vpop.f32.mrf.mxu0
        %v999 = vadd.f32 0.0, %v998
        %v1000 = vpop.f32.mrf.mxu0
        %1001 = vmatprep.mubr.f32.mxu0 0.0
        %1002 = vmatmul.mubr.f32.gmra.mxu0 %v718
        %v1003 = vpop.f32.mrf.mxu0
        %v1004 = vadd.f32 0.0, %v1003
        %v1005 = vpop.f32.mrf.mxu0
        %1006 = vmatprep.mubr.f32.mxu0 0.0
        %1007 = vmatmul.mubr.f32.gmra.mxu0 %v720
        %v1008 = vpop.f32.mrf.mxu0
        %v1009 = vadd.f32 0.0, %v1008
        %v1010 = vpop.f32.mrf.mxu0
        %1011 = vmatprep.mubr.f32.mxu0 0.0
        %1012 = vmatmul.mubr.f32.gmra.mxu0 %v722
        %v1013 = vpop.f32.mrf.mxu0
        %v1014 = vadd.f32 0.0, %v1013
        %v1015 = vpop.f32.mrf.mxu0
        %1016 = vmatprep.mubr.f32.mxu0 0.0
        %1017 = vmatmul.mubr.f32.gmra.mxu0 %v724
        %v1018 = vpop.f32.mrf.mxu0
        %v1019 = vadd.f32 0.0, %v1018
        %v1020 = vpop.f32.mrf.mxu0
        %1021 = vmatprep.mubr.f32.mxu0 0.0
        %1022 = vmatmul.mubr.f32.gmra.mxu0 %v726
        %v1023 = vpop.f32.mrf.mxu0
        %v1024 = vadd.f32 0.0, %v1023
        %v1025 = vpop.f32.mrf.mxu0
        %1026 = vmatprep.mubr.f32.mxu0 0.0
        %1027 = vmatmul.mubr.f32.gmra.mxu0 %v728
        %v1028 = vpop.f32.mrf.mxu0
        %v1029 = vadd.f32 0.0, %v1028
        %v1030 = vpop.f32.mrf.mxu0
        %1031 = vmatprep.mubr.f32.mxu0 0.0
        %1032 = vmatmul.mubr.f32.gmra.mxu0 %v730
        %v1033 = vpop.f32.mrf.mxu0
        %v1034 = vadd.f32 0.0, %v1033
        %v1035 = vpop.f32.mrf.mxu0
        %1036 = vmatprep.mubr.f32.mxu0 0.0
        %1037 = vmatmul.mubr.f32.gmra.mxu0 %v732
        %v1038 = vpop.f32.mrf.mxu0
        %v1039 = vadd.f32 0.0, %v1038
        %v1040 = vpop.f32.mrf.mxu0
        %1041 = vmatprep.mubr.f32.mxu0 0.0
        %1042 = vmatmul.mubr.f32.gmra.mxu0 %v734
        %v1043 = vpop.f32.mrf.mxu0
        %v1044 = vadd.f32 0.0, %v1043
        %v1045 = vpop.f32.mrf.mxu0
        %1046 = vmatprep.mubr.f32.mxu0 0.0
        %1047 = vmatmul.mubr.f32.gmra.mxu0 %v736
        %v1048 = vpop.f32.mrf.mxu0
        %v1049 = vadd.f32 0.0, %v1048
        %v1050 = vpop.f32.mrf.mxu0
        %1051 = vmatprep.mubr.f32.mxu0 0.0
        %1052 = vmatmul.mubr.f32.gmra.mxu0 %v738
        %v1053 = vpop.f32.mrf.mxu0
        %v1054 = vadd.f32 0.0, %v1053
        %v1055 = vpop.f32.mrf.mxu0
        %1056 = vmatprep.mubr.f32.mxu0 0.0
        %1057 = vmatmul.mubr.f32.gmra.mxu0 %v740
        %v1058 = vpop.f32.mrf.mxu0
        %v1059 = vadd.f32 0.0, %v1058
        %v1060 = vpop.f32.mrf.mxu0
        %1061 = vmatprep.mubr.f32.mxu0 0.0
        %1062 = vmatmul.mubr.f32.gmra.mxu0 %v742
        %v1063 = vpop.f32.mrf.mxu0
        %v1064 = vadd.f32 0.0, %v1063
        %v1065 = vpop.f32.mrf.mxu0
        %1066 = vmatprep.mubr.f32.mxu0 0.0
        %1067 = vmatmul.mubr.f32.gmra.mxu0 %v744
        %v1068 = vpop.f32.mrf.mxu0
        %v1069 = vadd.f32 0.0, %v1068
        %v1070 = vpop.f32.mrf.mxu0
        %1071 = vmatprep.mubr.f32.mxu0 0.0
        %1072 = vmatmul.mubr.f32.gmra.mxu0 %v746
        %v1073 = vpop.f32.mrf.mxu0
        %v1074 = vadd.f32 0.0, %v1073
        %v1075 = vpop.f32.mrf.mxu0
        %1076 = vmatprep.mubr.f32.mxu0 0.0
        %1077 = vmatmul.mubr.f32.gmra.mxu0 %v748
        %v1078 = vpop.f32.mrf.mxu0
        %v1079 = vadd.f32 0.0, %v1078
        %v1080 = vpop.f32.mrf.mxu0
        %1081 = vmatprep.mubr.f32.mxu0 0.0
        %1082 = vmatmul.mubr.f32.gmra.mxu0 %v750
        %v1083 = vpop.f32.mrf.mxu0
        %v1084 = vadd.f32 0.0, %v1083
        %v1085 = vpop.f32.mrf.mxu0
        %1086 = vmatprep.mubr.f32.mxu0 0.0
        %1087 = vmatmul.mubr.f32.gmra.mxu0 %v752
        %v1088 = vpop.f32.mrf.mxu0
        %v1089 = vadd.f32 0.0, %v1088
        %v1090 = vpop.f32.mrf.mxu0
        %1091 = vmatprep.mubr.f32.mxu0 0.0
        %1092 = vmatmul.mubr.f32.gmra.mxu0 %v754
        %v1093 = vpop.f32.mrf.mxu0
        %v1094 = vadd.f32 0.0, %v1093
        %v1095 = vpop.f32.mrf.mxu0
        %1096 = vmatprep.mubr.f32.mxu0 0.0
        %1097 = vmatmul.mubr.f32.gmra.mxu0 %v756
        %v1098 = vpop.f32.mrf.mxu0
        %v1099 = vadd.f32 0.0, %v1098
        %v1100 = vpop.f32.mrf.mxu0
        %1101 = vmatprep.mubr.f32.mxu0 0.0
        %1102 = vmatmul.mubr.f32.gmra.mxu0 %v758
        %v1103 = vpop.f32.mrf.mxu0
        %v1104 = vadd.f32 0.0, %v1103
        %v1105 = vpop.f32.mrf.mxu0
        %1106 = vmatprep.mubr.f32.mxu0 0.0
        %1107 = vmatmul.mubr.f32.gmra.mxu0 %v760
        %v1108 = vpop.f32.mrf.mxu0
        %v1109 = vadd.f32 0.0, %v1108
        %v1110 = vpop.f32.mrf.mxu0
        %1111 = vmatprep.mubr.f32.mxu0 0.0
        %1112 = vmatmul.mubr.f32.gmra.mxu0 %v762
        %v1113 = vpop.f32.mrf.mxu0
        %v1114 = vadd.f32 0.0, %v1113
        %v1115 = vpop.f32.mrf.mxu0
        %1116 = vmatprep.mubr.f32.mxu0 0.0
        %1117 = vmatmul.mubr.f32.gmra.mxu0 %v764
        %v1118 = vpop.f32.mrf.mxu0
        %v1119 = vadd.f32 0.0, %v1118
        %v1120 = vpop.f32.mrf.mxu0
        %1121 = vmatprep.mubr.f32.mxu0 0.0
        %1122 = vmatmul.mubr.f32.gmra.mxu0 %v766
        %v1123 = vpop.f32.mrf.mxu0
        %v1124 = vadd.f32 0.0, %v1123
        %v1125 = vpop.f32.mrf.mxu0
        %1126 = vmatprep.mubr.f32.mxu0 0.0
        %1127 = vmatmul.mubr.f32.gmra.mxu0 %v768
        %v1128 = vpop.f32.mrf.mxu0
        %v1129 = vadd.f32 0.0, %v1128
        %v1130 = vpop.f32.mrf.mxu0
        %1131 = vmatprep.mubr.f32.mxu0 0.0
        %1132 = vmatmul.mubr.f32.gmra.mxu0 %v770
        %v1133 = vpop.f32.mrf.mxu0
        %v1134 = vadd.f32 0.0, %v1133
        %v1135 = vpop.f32.mrf.mxu0
        %1136 = vmatprep.mubr.f32.mxu0 0.0
        %1137 = vmatmul.mubr.f32.gmra.mxu0 %v772
        %v1138 = vpop.f32.mrf.mxu0
        %v1139 = vadd.f32 0.0, %v1138
        %v1140 = vpop.f32.mrf.mxu0
        %1141 = vmatprep.mubr.f32.mxu0 0.0
        %1142 = vmatmul.mubr.f32.gmra.mxu0 %v774
        %v1143 = vpop.f32.mrf.mxu0
        %v1144 = vadd.f32 0.0, %v1143
        %v1145 = vpop.f32.mrf.mxu0
        %1146 = vmatprep.mubr.f32.mxu0 0.0
        %1147 = vmatmul.mubr.f32.gmra.mxu0 %v776
        %v1148 = vpop.f32.mrf.mxu0
        %v1149 = vadd.f32 0.0, %v1148
        %v1150 = vpop.f32.mrf.mxu0
        %1151 = vmatprep.mubr.f32.mxu0 0.0
        %1152 = vmatmul.mubr.f32.gmra.mxu0 %v778
        %v1153 = vpop.f32.mrf.mxu0
        %v1154 = vadd.f32 0.0, %v1153
        %v1155 = vpop.f32.mrf.mxu0
        %1156 = vmatprep.mubr.f32.mxu0 0.0
        %1157 = vmatmul.mubr.f32.gmra.mxu0 %v780
        %v1158 = vpop.f32.mrf.mxu0
        %v1159 = vadd.f32 0.0, %v1158
        %v1160 = vpop.f32.mrf.mxu0
        %1161 = vmatprep.mubr.f32.mxu0 0.0
        %1162 = vmatmul.mubr.f32.gmra.mxu0 %v782
        %v1163 = vpop.f32.mrf.mxu0
        %v1164 = vadd.f32 0.0, %v1163
        %v1165 = vpop.f32.mrf.mxu0
        %1166 = vmatprep.mubr.f32.mxu0 0.0
        %1167 = vmatmul.mubr.f32.gmra.mxu0 %v784
        %v1168 = vpop.f32.mrf.mxu0
        %v1169 = vadd.f32 0.0, %v1168
        %v1170 = vpop.f32.mrf.mxu0
        %1171 = vmatprep.mubr.f32.mxu0 0.0
        %1172 = vmatmul.mubr.f32.gmra.mxu0 %v786
        %v1173 = vpop.f32.mrf.mxu0
        %v1174 = vadd.f32 0.0, %v1173
        %v1175 = vpop.f32.mrf.mxu0
        %1176 = vdwg.mxu0
        %v1177 = vsel %vm659, %v175, 0
        %v1179 = vsel %vm659, %v177, 0
        %v1181 = vsel %vm659, %v179, 0
        %v1183 = vsel %vm659, %v181, 0
        %v1185 = vsel %vm659, %v183, 0
        %v1187 = vsel %vm659, %v185, 0
        %v1189 = vsel %vm659, %v187, 0
        %v1191 = vsel %vm659, %v189, 0
        %v1193 = vsel %vm659, %v195, 0
        %v1195 = vsel %vm659, %v197, 0
        %v1197 = vsel %vm659, %v199, 0
        %v1199 = vsel %vm659, %v201, 0
        %v1201 = vsel %vm659, %v203, 0
        %v1203 = vsel %vm659, %v205, 0
        %v1205 = vsel %vm659, %v207, 0
        %v1207 = vsel %vm659, %v209, 0
        %v1209 = vsel %vm659, %v215, 0
        %v1211 = vsel %vm659, %v217, 0
        %v1213 = vsel %vm659, %v219, 0
        %v1215 = vsel %vm659, %v221, 0
        %v1217 = vsel %vm659, %v223, 0
        %v1219 = vsel %vm659, %v225, 0
        %v1221 = vsel %vm659, %v227, 0
        %v1223 = vsel %vm659, %v229, 0
        %v1225 = vsel %vm659, %v235, 0
        %v1227 = vsel %vm659, %v237, 0
        %v1229 = vsel %vm659, %v239, 0
        %v1231 = vsel %vm659, %v241, 0
        %v1233 = vsel %vm659, %v243, 0
        %v1235 = vsel %vm659, %v245, 0
        %v1237 = vsel %vm659, %v247, 0
        %v1239 = vsel %vm659, %v249, 0
        %v1241 = vsel %vm659, %v255, 0
        %v1243 = vsel %vm659, %v257, 0
        %v1245 = vsel %vm659, %v259, 0
        %v1247 = vsel %vm659, %v261, 0
        %v1249 = vsel %vm659, %v263, 0
        %v1251 = vsel %vm659, %v265, 0
        %v1253 = vsel %vm659, %v267, 0
        %v1255 = vsel %vm659, %v269, 0
        %v1257 = vsel %vm659, %v275, 0
        %v1259 = vsel %vm659, %v277, 0
        %v1261 = vsel %vm659, %v279, 0
        %v1263 = vsel %vm659, %v281, 0
        %v1265 = vsel %vm659, %v283, 0
        %v1267 = vsel %vm659, %v285, 0
        %v1269 = vsel %vm659, %v287, 0
        %v1271 = vsel %vm659, %v289, 0
        %v1273 = vsel %vm659, %v295, 0
        %v1275 = vsel %vm659, %v297, 0
        %v1277 = vsel %vm659, %v299, 0
        %v1279 = vsel %vm659, %v301, 0
        %v1281 = vsel %vm659, %v303, 0
        %v1283 = vsel %vm659, %v305, 0
        %v1285 = vsel %vm659, %v307, 0
        %v1287 = vsel %vm659, %v309, 0
        %v1289 = vsel %vm659, %v315, 0
        %v1291 = vsel %vm659, %v317, 0
        %v1293 = vsel %vm659, %v319, 0
        %v1295 = vsel %vm659, %v321, 0
        %v1297 = vsel %vm659, %v323, 0
        %v1299 = vsel %vm659, %v325, 0
        %v1301 = vsel %vm659, %v327, 0
        %v1303 = vsel %vm659, %v329, 0
        %v1306 = vsel %vm788, %v335, 0
        %1308 = vmatprep.subr.mxu0 0.0
        %1309 = vmatpush1.msra.mxu0 0.0
        %1310 = vmatprep.subr.mxu0 0.0
        %1311 = vmatpush1.msra.mxu0 0.0
        %1312 = vmatprep.subr.mxu0 0.0
        %1313 = vmatpush1.msra.mxu0 0.0
        %1314 = vmatprep.subr.mxu0 0.0
        %1315 = vmatpush1.msra.mxu0 0.0
        %1316 = vmatprep.subr.mxu0 0.0
        %1317 = vmatpush1.msra.mxu0 0.0
        %1318 = vmatprep.subr.mxu0 0.0
        %1319 = vmatpush1.msra.mxu0 0.0
        %1320 = vmatprep.subr.mxu0 0.0
        %1321 = vmatpush1.msra.mxu0 0.0
        %1322 = vmatprep.subr.mxu0 0.0
        %1323 = vmatpush1.msra.mxu0 0.0
        %1324 = vmatprep.subr.mxu0 0.0
        %1325 = vmatpush1.msra.mxu0 0.0
        %1326 = vmatprep.subr.mxu0 0.0
        %1327 = vmatpush1.msra.mxu0 0.0
        %1328 = vmatprep.subr.mxu0 0.0
        %1329 = vmatpush1.msra.mxu0 0.0
        %1330 = vmatprep.subr.mxu0 0.0
        %1331 = vmatpush1.msra.mxu0 0.0
        %1332 = vmatprep.subr.mxu0 0.0
        %1333 = vmatpush1.msra.mxu0 0.0
        %1334 = vmatprep.subr.mxu0 0.0
        %1335 = vmatpush1.msra.mxu0 0.0
        %1336 = vmatprep.subr.mxu0 0.0
        %1337 = vmatpush1.msra.mxu0 0.0
        %1338 = vmatprep.subr.mxu0 0.0
        %1339 = vmatpush1.msra.mxu0 %v1306
        %1340 = vmatprep.subr.mxu0 0.0
        %1341 = vmatpush2.msra.mxu0 0.0
        %1342 = vmatprep.subr.mxu0 0.0
        %1343 = vmatpush2.msra.mxu0 0.0
        %1344 = vmatprep.subr.mxu0 0.0
        %1345 = vmatpush2.msra.mxu0 0.0
        %1346 = vmatprep.subr.mxu0 0.0
        %1347 = vmatpush2.msra.mxu0 0.0
        %1348 = vmatprep.subr.mxu0 0.0
        %1349 = vmatpush2.msra.mxu0 0.0
        %1350 = vmatprep.subr.mxu0 0.0
        %1351 = vmatpush2.msra.mxu0 0.0
        %1352 = vmatprep.subr.mxu0 0.0
        %1353 = vmatpush2.msra.mxu0 0.0
        %1354 = vmatprep.subr.mxu0 0.0
        %1355 = vmatpush2.msra.mxu0 0.0
        %1356 = vmatprep.subr.mxu0 0.0
        %1357 = vmatpush2.msra.mxu0 0.0
        %1358 = vmatprep.subr.mxu0 0.0
        %1359 = vmatpush2.msra.mxu0 0.0
        %1360 = vmatprep.subr.mxu0 0.0
        %1361 = vmatpush2.msra.mxu0 0.0
        %1362 = vmatprep.subr.mxu0 0.0
        %1363 = vmatpush2.msra.mxu0 0.0
        %1364 = vmatprep.subr.mxu0 0.0
        %1365 = vmatpush2.msra.mxu0 0.0
        %1366 = vmatprep.subr.mxu0 0.0
        %1367 = vmatpush2.msra.mxu0 0.0
        %1368 = vmatprep.subr.mxu0 0.0
        %1369 = vmatpush2.msra.mxu0 0.0
        %1370 = vmatprep.subr.mxu0 0.0
        %1371 = vmatpush2.msra.mxu0 0.0
        %1372 = vmatprep.mubr.f32.mxu0 0.0
        %1373 = vmatmul.mubr.f32.gmra.mxu0 %v1177
        %v1374 = vpop.f32.mrf.mxu0
        %v1375 = vadd.f32 %v859, %v1374
        %v1376 = vpop.f32.mrf.mxu0
        %1377 = vmatprep.mubr.f32.mxu0 0.0
        %1378 = vmatmul.mubr.f32.gmra.mxu0 %v1179
        %v1379 = vpop.f32.mrf.mxu0
        %v1380 = vadd.f32 %v864, %v1379
        %v1381 = vpop.f32.mrf.mxu0
        %1382 = vmatprep.mubr.f32.mxu0 0.0
        %1383 = vmatmul.mubr.f32.gmra.mxu0 %v1181
        %v1384 = vpop.f32.mrf.mxu0
        %v1385 = vadd.f32 %v869, %v1384
        %v1386 = vpop.f32.mrf.mxu0
        %1387 = vmatprep.mubr.f32.mxu0 0.0
        %1388 = vmatmul.mubr.f32.gmra.mxu0 %v1183
        %v1389 = vpop.f32.mrf.mxu0
        %v1390 = vadd.f32 %v874, %v1389
        %v1391 = vpop.f32.mrf.mxu0
        %1392 = vmatprep.mubr.f32.mxu0 0.0
        %1393 = vmatmul.mubr.f32.gmra.mxu0 %v1185
        %v1394 = vpop.f32.mrf.mxu0
        %v1395 = vadd.f32 %v879, %v1394
        %v1396 = vpop.f32.mrf.mxu0
        %1397 = vmatprep.mubr.f32.mxu0 0.0
        %1398 = vmatmul.mubr.f32.gmra.mxu0 %v1187
        %v1399 = vpop.f32.mrf.mxu0
        %v1400 = vadd.f32 %v884, %v1399
        %v1401 = vpop.f32.mrf.mxu0
        %1402 = vmatprep.mubr.f32.mxu0 0.0
        %1403 = vmatmul.mubr.f32.gmra.mxu0 %v1189
        %v1404 = vpop.f32.mrf.mxu0
        %v1405 = vadd.f32 %v889, %v1404
        %v1406 = vpop.f32.mrf.mxu0
        %1407 = vmatprep.mubr.f32.mxu0 0.0
        %1408 = vmatmul.mubr.f32.gmra.mxu0 %v1191
        %v1409 = vpop.f32.mrf.mxu0
        %v1410 = vadd.f32 %v894, %v1409
        %v1411 = vpop.f32.mrf.mxu0
        %1412 = vmatprep.mubr.f32.mxu0 0.0
        %1413 = vmatmul.mubr.f32.gmra.mxu0 %v1193
        %v1414 = vpop.f32.mrf.mxu0
        %v1415 = vadd.f32 %v899, %v1414
        %v1416 = vpop.f32.mrf.mxu0
        %1417 = vmatprep.mubr.f32.mxu0 0.0
        %1418 = vmatmul.mubr.f32.gmra.mxu0 %v1195
        %v1419 = vpop.f32.mrf.mxu0
        %v1420 = vadd.f32 %v904, %v1419
        %v1421 = vpop.f32.mrf.mxu0
        %1422 = vmatprep.mubr.f32.mxu0 0.0
        %1423 = vmatmul.mubr.f32.gmra.mxu0 %v1197
        %v1424 = vpop.f32.mrf.mxu0
        %v1425 = vadd.f32 %v909, %v1424
        %v1426 = vpop.f32.mrf.mxu0
        %1427 = vmatprep.mubr.f32.mxu0 0.0
        %1428 = vmatmul.mubr.f32.gmra.mxu0 %v1199
        %v1429 = vpop.f32.mrf.mxu0
        %v1430 = vadd.f32 %v914, %v1429
        %v1431 = vpop.f32.mrf.mxu0
        %1432 = vmatprep.mubr.f32.mxu0 0.0
        %1433 = vmatmul.mubr.f32.gmra.mxu0 %v1201
        %v1434 = vpop.f32.mrf.mxu0
        %v1435 = vadd.f32 %v919, %v1434
        %v1436 = vpop.f32.mrf.mxu0
        %1437 = vmatprep.mubr.f32.mxu0 0.0
        %1438 = vmatmul.mubr.f32.gmra.mxu0 %v1203
        %v1439 = vpop.f32.mrf.mxu0
        %v1440 = vadd.f32 %v924, %v1439
        %v1441 = vpop.f32.mrf.mxu0
        %1442 = vmatprep.mubr.f32.mxu0 0.0
        %1443 = vmatmul.mubr.f32.gmra.mxu0 %v1205
        %v1444 = vpop.f32.mrf.mxu0
        %v1445 = vadd.f32 %v929, %v1444
        %v1446 = vpop.f32.mrf.mxu0
        %1447 = vmatprep.mubr.f32.mxu0 0.0
        %1448 = vmatmul.mubr.f32.gmra.mxu0 %v1207
        %v1449 = vpop.f32.mrf.mxu0
        %v1450 = vadd.f32 %v934, %v1449
        %v1451 = vpop.f32.mrf.mxu0
        %1452 = vmatprep.mubr.f32.mxu0 0.0
        %1453 = vmatmul.mubr.f32.gmra.mxu0 %v1209
        %v1454 = vpop.f32.mrf.mxu0
        %v1455 = vadd.f32 %v939, %v1454
        %v1456 = vpop.f32.mrf.mxu0
        %1457 = vmatprep.mubr.f32.mxu0 0.0
        %1458 = vmatmul.mubr.f32.gmra.mxu0 %v1211
        %v1459 = vpop.f32.mrf.mxu0
        %v1460 = vadd.f32 %v944, %v1459
        %v1461 = vpop.f32.mrf.mxu0
        %1462 = vmatprep.mubr.f32.mxu0 0.0
        %1463 = vmatmul.mubr.f32.gmra.mxu0 %v1213
        %v1464 = vpop.f32.mrf.mxu0
        %v1465 = vadd.f32 %v949, %v1464
        %v1466 = vpop.f32.mrf.mxu0
        %1467 = vmatprep.mubr.f32.mxu0 0.0
        %1468 = vmatmul.mubr.f32.gmra.mxu0 %v1215
        %v1469 = vpop.f32.mrf.mxu0
        %v1470 = vadd.f32 %v954, %v1469
        %v1471 = vpop.f32.mrf.mxu0
        %1472 = vmatprep.mubr.f32.mxu0 0.0
        %1473 = vmatmul.mubr.f32.gmra.mxu0 %v1217
        %v1474 = vpop.f32.mrf.mxu0
        %v1475 = vadd.f32 %v959, %v1474
        %v1476 = vpop.f32.mrf.mxu0
        %1477 = vmatprep.mubr.f32.mxu0 0.0
        %1478 = vmatmul.mubr.f32.gmra.mxu0 %v1219
        %v1479 = vpop.f32.mrf.mxu0
        %v1480 = vadd.f32 %v964, %v1479
        %v1481 = vpop.f32.mrf.mxu0
        %1482 = vmatprep.mubr.f32.mxu0 0.0
        %1483 = vmatmul.mubr.f32.gmra.mxu0 %v1221
        %v1484 = vpop.f32.mrf.mxu0
        %v1485 = vadd.f32 %v969, %v1484
        %v1486 = vpop.f32.mrf.mxu0
        %1487 = vmatprep.mubr.f32.mxu0 0.0
        %1488 = vmatmul.mubr.f32.gmra.mxu0 %v1223
        %v1489 = vpop.f32.mrf.mxu0
        %v1490 = vadd.f32 %v974, %v1489
        %v1491 = vpop.f32.mrf.mxu0
        %1492 = vmatprep.mubr.f32.mxu0 0.0
        %1493 = vmatmul.mubr.f32.gmra.mxu0 %v1225
        %v1494 = vpop.f32.mrf.mxu0
        %v1495 = vadd.f32 %v979, %v1494
        %v1496 = vpop.f32.mrf.mxu0
        %1497 = vmatprep.mubr.f32.mxu0 0.0
        %1498 = vmatmul.mubr.f32.gmra.mxu0 %v1227
        %v1499 = vpop.f32.mrf.mxu0
        %v1500 = vadd.f32 %v984, %v1499
        %v1501 = vpop.f32.mrf.mxu0
        %1502 = vmatprep.mubr.f32.mxu0 0.0
        %1503 = vmatmul.mubr.f32.gmra.mxu0 %v1229
        %v1504 = vpop.f32.mrf.mxu0
        %v1505 = vadd.f32 %v989, %v1504
        %v1506 = vpop.f32.mrf.mxu0
        %1507 = vmatprep.mubr.f32.mxu0 0.0
        %1508 = vmatmul.mubr.f32.gmra.mxu0 %v1231
        %v1509 = vpop.f32.mrf.mxu0
        %v1510 = vadd.f32 %v994, %v1509
        %v1511 = vpop.f32.mrf.mxu0
        %1512 = vmatprep.mubr.f32.mxu0 0.0
        %1513 = vmatmul.mubr.f32.gmra.mxu0 %v1233
        %v1514 = vpop.f32.mrf.mxu0
        %v1515 = vadd.f32 %v999, %v1514
        %v1516 = vpop.f32.mrf.mxu0
        %1517 = vmatprep.mubr.f32.mxu0 0.0
        %1518 = vmatmul.mubr.f32.gmra.mxu0 %v1235
        %v1519 = vpop.f32.mrf.mxu0
        %v1520 = vadd.f32 %v1004, %v1519
        %v1521 = vpop.f32.mrf.mxu0
        %1522 = vmatprep.mubr.f32.mxu0 0.0
        %1523 = vmatmul.mubr.f32.gmra.mxu0 %v1237
        %v1524 = vpop.f32.mrf.mxu0
        %v1525 = vadd.f32 %v1009, %v1524
        %v1526 = vpop.f32.mrf.mxu0
        %1527 = vmatprep.mubr.f32.mxu0 0.0
        %1528 = vmatmul.mubr.f32.gmra.mxu0 %v1239
        %v1529 = vpop.f32.mrf.mxu0
        %v1530 = vadd.f32 %v1014, %v1529
        %v1531 = vpop.f32.mrf.mxu0
        %1532 = vmatprep.mubr.f32.mxu0 0.0
        %1533 = vmatmul.mubr.f32.gmra.mxu0 %v1241
        %v1534 = vpop.f32.mrf.mxu0
        %v1535 = vadd.f32 %v1019, %v1534
        %v1536 = vpop.f32.mrf.mxu0
        %1537 = vmatprep.mubr.f32.mxu0 0.0
        %1538 = vmatmul.mubr.f32.gmra.mxu0 %v1243
        %v1539 = vpop.f32.mrf.mxu0
        %v1540 = vadd.f32 %v1024, %v1539
        %v1541 = vpop.f32.mrf.mxu0
        %1542 = vmatprep.mubr.f32.mxu0 0.0
        %1543 = vmatmul.mubr.f32.gmra.mxu0 %v1245
        %v1544 = vpop.f32.mrf.mxu0
        %v1545 = vadd.f32 %v1029, %v1544
        %v1546 = vpop.f32.mrf.mxu0
        %1547 = vmatprep.mubr.f32.mxu0 0.0
        %1548 = vmatmul.mubr.f32.gmra.mxu0 %v1247
        %v1549 = vpop.f32.mrf.mxu0
        %v1550 = vadd.f32 %v1034, %v1549
        %v1551 = vpop.f32.mrf.mxu0
        %1552 = vmatprep.mubr.f32.mxu0 0.0
        %1553 = vmatmul.mubr.f32.gmra.mxu0 %v1249
        %v1554 = vpop.f32.mrf.mxu0
        %v1555 = vadd.f32 %v1039, %v1554
        %v1556 = vpop.f32.mrf.mxu0
        %1557 = vmatprep.mubr.f32.mxu0 0.0
        %1558 = vmatmul.mubr.f32.gmra.mxu0 %v1251
        %v1559 = vpop.f32.mrf.mxu0
        %v1560 = vadd.f32 %v1044, %v1559
        %v1561 = vpop.f32.mrf.mxu0
        %1562 = vmatprep.mubr.f32.mxu0 0.0
        %1563 = vmatmul.mubr.f32.gmra.mxu0 %v1253
        %v1564 = vpop.f32.mrf.mxu0
        %v1565 = vadd.f32 %v1049, %v1564
        %v1566 = vpop.f32.mrf.mxu0
        %1567 = vmatprep.mubr.f32.mxu0 0.0
        %1568 = vmatmul.mubr.f32.gmra.mxu0 %v1255
        %v1569 = vpop.f32.mrf.mxu0
        %v1570 = vadd.f32 %v1054, %v1569
        %v1571 = vpop.f32.mrf.mxu0
        %1572 = vmatprep.mubr.f32.mxu0 0.0
        %1573 = vmatmul.mubr.f32.gmra.mxu0 %v1257
        %v1574 = vpop.f32.mrf.mxu0
        %v1575 = vadd.f32 %v1059, %v1574
        %v1576 = vpop.f32.mrf.mxu0
        %1577 = vmatprep.mubr.f32.mxu0 0.0
        %1578 = vmatmul.mubr.f32.gmra.mxu0 %v1259
        %v1579 = vpop.f32.mrf.mxu0
        %v1580 = vadd.f32 %v1064, %v1579
        %v1581 = vpop.f32.mrf.mxu0
        %1582 = vmatprep.mubr.f32.mxu0 0.0
        %1583 = vmatmul.mubr.f32.gmra.mxu0 %v1261
        %v1584 = vpop.f32.mrf.mxu0
        %v1585 = vadd.f32 %v1069, %v1584
        %v1586 = vpop.f32.mrf.mxu0
        %1587 = vmatprep.mubr.f32.mxu0 0.0
        %1588 = vmatmul.mubr.f32.gmra.mxu0 %v1263
        %v1589 = vpop.f32.mrf.mxu0
        %v1590 = vadd.f32 %v1074, %v1589
        %v1591 = vpop.f32.mrf.mxu0
        %1592 = vmatprep.mubr.f32.mxu0 0.0
        %1593 = vmatmul.mubr.f32.gmra.mxu0 %v1265
        %v1594 = vpop.f32.mrf.mxu0
        %v1595 = vadd.f32 %v1079, %v1594
        %v1596 = vpop.f32.mrf.mxu0
        %1597 = vmatprep.mubr.f32.mxu0 0.0
        %1598 = vmatmul.mubr.f32.gmra.mxu0 %v1267
        %v1599 = vpop.f32.mrf.mxu0
        %v1600 = vadd.f32 %v1084, %v1599
        %v1601 = vpop.f32.mrf.mxu0
        %1602 = vmatprep.mubr.f32.mxu0 0.0
        %1603 = vmatmul.mubr.f32.gmra.mxu0 %v1269
        %v1604 = vpop.f32.mrf.mxu0
        %v1605 = vadd.f32 %v1089, %v1604
        %v1606 = vpop.f32.mrf.mxu0
        %1607 = vmatprep.mubr.f32.mxu0 0.0
        %1608 = vmatmul.mubr.f32.gmra.mxu0 %v1271
        %v1609 = vpop.f32.mrf.mxu0
        %v1610 = vadd.f32 %v1094, %v1609
        %v1611 = vpop.f32.mrf.mxu0
        %1612 = vmatprep.mubr.f32.mxu0 0.0
        %1613 = vmatmul.mubr.f32.gmra.mxu0 %v1273
        %v1614 = vpop.f32.mrf.mxu0
        %v1615 = vadd.f32 %v1099, %v1614
        %v1616 = vpop.f32.mrf.mxu0
        %1617 = vmatprep.mubr.f32.mxu0 0.0
        %1618 = vmatmul.mubr.f32.gmra.mxu0 %v1275
        %v1619 = vpop.f32.mrf.mxu0
        %v1620 = vadd.f32 %v1104, %v1619
        %v1621 = vpop.f32.mrf.mxu0
        %1622 = vmatprep.mubr.f32.mxu0 0.0
        %1623 = vmatmul.mubr.f32.gmra.mxu0 %v1277
        %v1624 = vpop.f32.mrf.mxu0
        %v1625 = vadd.f32 %v1109, %v1624
        %v1626 = vpop.f32.mrf.mxu0
        %1627 = vmatprep.mubr.f32.mxu0 0.0
        %1628 = vmatmul.mubr.f32.gmra.mxu0 %v1279
        %v1629 = vpop.f32.mrf.mxu0
        %v1630 = vadd.f32 %v1114, %v1629
        %v1631 = vpop.f32.mrf.mxu0
        %1632 = vmatprep.mubr.f32.mxu0 0.0
        %1633 = vmatmul.mubr.f32.gmra.mxu0 %v1281
        %v1634 = vpop.f32.mrf.mxu0
        %v1635 = vadd.f32 %v1119, %v1634
        %v1636 = vpop.f32.mrf.mxu0
        %1637 = vmatprep.mubr.f32.mxu0 0.0
        %1638 = vmatmul.mubr.f32.gmra.mxu0 %v1283
        %v1639 = vpop.f32.mrf.mxu0
        %v1640 = vadd.f32 %v1124, %v1639
        %v1641 = vpop.f32.mrf.mxu0
        %1642 = vmatprep.mubr.f32.mxu0 0.0
        %1643 = vmatmul.mubr.f32.gmra.mxu0 %v1285
        %v1644 = vpop.f32.mrf.mxu0
        %v1645 = vadd.f32 %v1129, %v1644
        %v1646 = vpop.f32.mrf.mxu0
        %1647 = vmatprep.mubr.f32.mxu0 0.0
        %1648 = vmatmul.mubr.f32.gmra.mxu0 %v1287
        %v1649 = vpop.f32.mrf.mxu0
        %v1650 = vadd.f32 %v1134, %v1649
        %v1651 = vpop.f32.mrf.mxu0
        %1652 = vmatprep.mubr.f32.mxu0 0.0
        %1653 = vmatmul.mubr.f32.gmra.mxu0 %v1289
        %v1654 = vpop.f32.mrf.mxu0
        %v1655 = vadd.f32 %v1139, %v1654
        %v1656 = vpop.f32.mrf.mxu0
        %1657 = vmatprep.mubr.f32.mxu0 0.0
        %1658 = vmatmul.mubr.f32.gmra.mxu0 %v1291
        %v1659 = vpop.f32.mrf.mxu0
        %v1660 = vadd.f32 %v1144, %v1659
        %v1661 = vpop.f32.mrf.mxu0
        %1662 = vmatprep.mubr.f32.mxu0 0.0
        %1663 = vmatmul.mubr.f32.gmra.mxu0 %v1293
        %v1664 = vpop.f32.mrf.mxu0
        %v1665 = vadd.f32 %v1149, %v1664
        %v1666 = vpop.f32.mrf.mxu0
        %1667 = vmatprep.mubr.f32.mxu0 0.0
        %1668 = vmatmul.mubr.f32.gmra.mxu0 %v1295
        %v1669 = vpop.f32.mrf.mxu0
        %v1670 = vadd.f32 %v1154, %v1669
        %v1671 = vpop.f32.mrf.mxu0
        %1672 = vmatprep.mubr.f32.mxu0 0.0
        %1673 = vmatmul.mubr.f32.gmra.mxu0 %v1297
        %v1674 = vpop.f32.mrf.mxu0
        %v1675 = vadd.f32 %v1159, %v1674
        %v1676 = vpop.f32.mrf.mxu0
        %1677 = vmatprep.mubr.f32.mxu0 0.0
        %1678 = vmatmul.mubr.f32.gmra.mxu0 %v1299
        %v1679 = vpop.f32.mrf.mxu0
        %v1680 = vadd.f32 %v1164, %v1679
        %v1681 = vpop.f32.mrf.mxu0
        %1682 = vmatprep.mubr.f32.mxu0 0.0
        %1683 = vmatmul.mubr.f32.gmra.mxu0 %v1301
        %v1684 = vpop.f32.mrf.mxu0
        %v1685 = vadd.f32 %v1169, %v1684
        %v1686 = vpop.f32.mrf.mxu0
        %1687 = vmatprep.mubr.f32.mxu0 0.0
        %1688 = vmatmul.mubr.f32.gmra.mxu0 %v1303
        %v1689 = vpop.f32.mrf.mxu0
        %v1690 = vadd.f32 %v1174, %v1689
        %v1691 = vpop.f32.mrf.mxu0
        %1692 = vdwg.mxu0
        %vm1693 = vcmask 1045504
        %v1694 = vrot.slane %v175, 2
        %v1695 = vrot.slane %v176, 2
        %v1696 = vsel %vm1693, %v1694, %v1695
        %v1697 = vrot.slane %v177, 2
        %v1698 = vrot.slane %v178, 2
        %v1699 = vsel %vm1693, %v1697, %v1698
        %v1700 = vrot.slane %v179, 2
        %v1701 = vrot.slane %v180, 2
        %v1702 = vsel %vm1693, %v1700, %v1701
        %v1703 = vrot.slane %v181, 2
        %v1704 = vrot.slane %v182, 2
        %v1705 = vsel %vm1693, %v1703, %v1704
        %v1706 = vrot.slane %v183, 2
        %v1707 = vrot.slane %v184, 2
        %v1708 = vsel %vm1693, %v1706, %v1707
        %v1709 = vrot.slane %v185, 2
        %v1710 = vrot.slane %v186, 2
        %v1711 = vsel %vm1693, %v1709, %v1710
        %v1712 = vrot.slane %v187, 2
        %v1713 = vrot.slane %v188, 2
        %v1714 = vsel %vm1693, %v1712, %v1713
        %v1715 = vrot.slane %v189, 2
        %v1716 = vrot.slane %v190, 2
        %v1717 = vsel %vm1693, %v1715, %v1716
        %v1718 = vrot.slane %v195, 2
        %v1719 = vrot.slane %v196, 2
        %v1720 = vsel %vm1693, %v1718, %v1719
        %v1721 = vrot.slane %v197, 2
        %v1722 = vrot.slane %v198, 2
        %v1723 = vsel %vm1693, %v1721, %v1722
        %v1724 = vrot.slane %v199, 2
        %v1725 = vrot.slane %v200, 2
        %v1726 = vsel %vm1693, %v1724, %v1725
        %v1727 = vrot.slane %v201, 2
        %v1728 = vrot.slane %v202, 2
        %v1729 = vsel %vm1693, %v1727, %v1728
        %v1730 = vrot.slane %v203, 2
        %v1731 = vrot.slane %v204, 2
        %v1732 = vsel %vm1693, %v1730, %v1731
        %v1733 = vrot.slane %v205, 2
        %v1734 = vrot.slane %v206, 2
        %v1735 = vsel %vm1693, %v1733, %v1734
        %v1736 = vrot.slane %v207, 2
        %v1737 = vrot.slane %v208, 2
        %v1738 = vsel %vm1693, %v1736, %v1737
        %v1739 = vrot.slane %v209, 2
        %v1740 = vrot.slane %v210, 2
        %v1741 = vsel %vm1693, %v1739, %v1740
        %v1742 = vrot.slane %v215, 2
        %v1743 = vrot.slane %v216, 2
        %v1744 = vsel %vm1693, %v1742, %v1743
        %v1745 = vrot.slane %v217, 2
        %v1746 = vrot.slane %v218, 2
        %v1747 = vsel %vm1693, %v1745, %v1746
        %v1748 = vrot.slane %v219, 2
        %v1749 = vrot.slane %v220, 2
        %v1750 = vsel %vm1693, %v1748, %v1749
        %v1751 = vrot.slane %v221, 2
        %v1752 = vrot.slane %v222, 2
        %v1753 = vsel %vm1693, %v1751, %v1752
        %v1754 = vrot.slane %v223, 2
        %v1755 = vrot.slane %v224, 2
        %v1756 = vsel %vm1693, %v1754, %v1755
        %v1757 = vrot.slane %v225, 2
        %v1758 = vrot.slane %v226, 2
        %v1759 = vsel %vm1693, %v1757, %v1758
        %v1760 = vrot.slane %v227, 2
        %v1761 = vrot.slane %v228, 2
        %v1762 = vsel %vm1693, %v1760, %v1761
        %v1763 = vrot.slane %v229, 2
        %v1764 = vrot.slane %v230, 2
        %v1765 = vsel %vm1693, %v1763, %v1764
        %v1766 = vrot.slane %v235, 2
        %v1767 = vrot.slane %v236, 2
        %v1768 = vsel %vm1693, %v1766, %v1767
        %v1769 = vrot.slane %v237, 2
        %v1770 = vrot.slane %v238, 2
        %v1771 = vsel %vm1693, %v1769, %v1770
        %v1772 = vrot.slane %v239, 2
        %v1773 = vrot.slane %v240, 2
        %v1774 = vsel %vm1693, %v1772, %v1773
        %v1775 = vrot.slane %v241, 2
        %v1776 = vrot.slane %v242, 2
        %v1777 = vsel %vm1693, %v1775, %v1776
        %v1778 = vrot.slane %v243, 2
        %v1779 = vrot.slane %v244, 2
        %v1780 = vsel %vm1693, %v1778, %v1779
        %v1781 = vrot.slane %v245, 2
        %v1782 = vrot.slane %v246, 2
        %v1783 = vsel %vm1693, %v1781, %v1782
        %v1784 = vrot.slane %v247, 2
        %v1785 = vrot.slane %v248, 2
        %v1786 = vsel %vm1693, %v1784, %v1785
        %v1787 = vrot.slane %v249, 2
        %v1788 = vrot.slane %v250, 2
        %v1789 = vsel %vm1693, %v1787, %v1788
        %v1790 = vrot.slane %v255, 2
        %v1791 = vrot.slane %v256, 2
        %v1792 = vsel %vm1693, %v1790, %v1791
        %v1793 = vrot.slane %v257, 2
        %v1794 = vrot.slane %v258, 2
        %v1795 = vsel %vm1693, %v1793, %v1794
        %v1796 = vrot.slane %v259, 2
        %v1797 = vrot.slane %v260, 2
        %v1798 = vsel %vm1693, %v1796, %v1797
        %v1799 = vrot.slane %v261, 2
        %v1800 = vrot.slane %v262, 2
        %v1801 = vsel %vm1693, %v1799, %v1800
        %v1802 = vrot.slane %v263, 2
        %v1803 = vrot.slane %v264, 2
        %v1804 = vsel %vm1693, %v1802, %v1803
        %v1805 = vrot.slane %v265, 2
        %v1806 = vrot.slane %v266, 2
        %v1807 = vsel %vm1693, %v1805, %v1806
        %v1808 = vrot.slane %v267, 2
        %v1809 = vrot.slane %v268, 2
        %v1810 = vsel %vm1693, %v1808, %v1809
        %v1811 = vrot.slane %v269, 2
        %v1812 = vrot.slane %v270, 2
        %v1813 = vsel %vm1693, %v1811, %v1812
        %v1814 = vrot.slane %v275, 2
        %v1815 = vrot.slane %v276, 2
        %v1816 = vsel %vm1693, %v1814, %v1815
        %v1817 = vrot.slane %v277, 2
        %v1818 = vrot.slane %v278, 2
        %v1819 = vsel %vm1693, %v1817, %v1818
        %v1820 = vrot.slane %v279, 2
        %v1821 = vrot.slane %v280, 2
        %v1822 = vsel %vm1693, %v1820, %v1821
        %v1823 = vrot.slane %v281, 2
        %v1824 = vrot.slane %v282, 2
        %v1825 = vsel %vm1693, %v1823, %v1824
        %v1826 = vrot.slane %v283, 2
        %v1827 = vrot.slane %v284, 2
        %v1828 = vsel %vm1693, %v1826, %v1827
        %v1829 = vrot.slane %v285, 2
        %v1830 = vrot.slane %v286, 2
        %v1831 = vsel %vm1693, %v1829, %v1830
        %v1832 = vrot.slane %v287, 2
        %v1833 = vrot.slane %v288, 2
        %v1834 = vsel %vm1693, %v1832, %v1833
        %v1835 = vrot.slane %v289, 2
        %v1836 = vrot.slane %v290, 2
        %v1837 = vsel %vm1693, %v1835, %v1836
        %v1838 = vrot.slane %v295, 2
        %v1839 = vrot.slane %v296, 2
        %v1840 = vsel %vm1693, %v1838, %v1839
        %v1841 = vrot.slane %v297, 2
        %v1842 = vrot.slane %v298, 2
        %v1843 = vsel %vm1693, %v1841, %v1842
        %v1844 = vrot.slane %v299, 2
        %v1845 = vrot.slane %v300, 2
        %v1846 = vsel %vm1693, %v1844, %v1845
        %v1847 = vrot.slane %v301, 2
        %v1848 = vrot.slane %v302, 2
        %v1849 = vsel %vm1693, %v1847, %v1848
        %v1850 = vrot.slane %v303, 2
        %v1851 = vrot.slane %v304, 2
        %v1852 = vsel %vm1693, %v1850, %v1851
        %v1853 = vrot.slane %v305, 2
        %v1854 = vrot.slane %v306, 2
        %v1855 = vsel %vm1693, %v1853, %v1854
        %v1856 = vrot.slane %v307, 2
        %v1857 = vrot.slane %v308, 2
        %v1858 = vsel %vm1693, %v1856, %v1857
        %v1859 = vrot.slane %v309, 2
        %v1860 = vrot.slane %v310, 2
        %v1861 = vsel %vm1693, %v1859, %v1860
        %v1862 = vrot.slane %v315, 2
        %v1863 = vrot.slane %v316, 2
        %v1864 = vsel %vm1693, %v1862, %v1863
        %v1865 = vrot.slane %v317, 2
        %v1866 = vrot.slane %v318, 2
        %v1867 = vsel %vm1693, %v1865, %v1866
        %v1868 = vrot.slane %v319, 2
        %v1869 = vrot.slane %v320, 2
        %v1870 = vsel %vm1693, %v1868, %v1869
        %v1871 = vrot.slane %v321, 2
        %v1872 = vrot.slane %v322, 2
        %v1873 = vsel %vm1693, %v1871, %v1872
        %v1874 = vrot.slane %v323, 2
        %v1875 = vrot.slane %v324, 2
        %v1876 = vsel %vm1693, %v1874, %v1875
        %v1877 = vrot.slane %v325, 2
        %v1878 = vrot.slane %v326, 2
        %v1879 = vsel %vm1693, %v1877, %v1878
        %v1880 = vrot.slane %v327, 2
        %v1881 = vrot.slane %v328, 2
        %v1882 = vsel %vm1693, %v1880, %v1881
        %v1883 = vrot.slane %v329, 2
        %v1884 = vrot.slane %v330, 2
        %v1885 = vsel %vm1693, %v1883, %v1884
        %s1886 = scalar_lea.vmem %s1, 8
        %v1887 = vld [vmem:[%s1886] sm:$0xf]
        %v1888 = vsel %vm659, %v1696, 0
        %v1890 = vsel %vm659, %v1699, 0
        %v1892 = vsel %vm659, %v1702, 0
        %v1894 = vsel %vm659, %v1705, 0
        %v1896 = vsel %vm659, %v1708, 0
        %v1898 = vsel %vm659, %v1711, 0
        %v1900 = vsel %vm659, %v1714, 0
        %v1902 = vsel %vm659, %v1717, 0
        %v1904 = vsel %vm659, %v1720, 0
        %v1906 = vsel %vm659, %v1723, 0
        %v1908 = vsel %vm659, %v1726, 0
        %v1910 = vsel %vm659, %v1729, 0
        %v1912 = vsel %vm659, %v1732, 0
        %v1914 = vsel %vm659, %v1735, 0
        %v1916 = vsel %vm659, %v1738, 0
        %v1918 = vsel %vm659, %v1741, 0
        %v1920 = vsel %vm659, %v1744, 0
        %v1922 = vsel %vm659, %v1747, 0
        %v1924 = vsel %vm659, %v1750, 0
        %v1926 = vsel %vm659, %v1753, 0
        %v1928 = vsel %vm659, %v1756, 0
        %v1930 = vsel %vm659, %v1759, 0
        %v1932 = vsel %vm659, %v1762, 0
        %v1934 = vsel %vm659, %v1765, 0
        %v1936 = vsel %vm659, %v1768, 0
        %v1938 = vsel %vm659, %v1771, 0
        %v1940 = vsel %vm659, %v1774, 0
        %v1942 = vsel %vm659, %v1777, 0
        %v1944 = vsel %vm659, %v1780, 0
        %v1946 = vsel %vm659, %v1783, 0
        %v1948 = vsel %vm659, %v1786, 0
        %v1950 = vsel %vm659, %v1789, 0
        %v1952 = vsel %vm659, %v1792, 0
        %v1954 = vsel %vm659, %v1795, 0
        %v1956 = vsel %vm659, %v1798, 0
        %v1958 = vsel %vm659, %v1801, 0
        %v1960 = vsel %vm659, %v1804, 0
        %v1962 = vsel %vm659, %v1807, 0
        %v1964 = vsel %vm659, %v1810, 0
        %v1966 = vsel %vm659, %v1813, 0
        %v1968 = vsel %vm659, %v1816, 0
        %v1970 = vsel %vm659, %v1819, 0
        %v1972 = vsel %vm659, %v1822, 0
        %v1974 = vsel %vm659, %v1825, 0
        %v1976 = vsel %vm659, %v1828, 0
        %v1978 = vsel %vm659, %v1831, 0
        %v1980 = vsel %vm659, %v1834, 0
        %v1982 = vsel %vm659, %v1837, 0
        %v1984 = vsel %vm659, %v1840, 0
        %v1986 = vsel %vm659, %v1843, 0
        %v1988 = vsel %vm659, %v1846, 0
        %v1990 = vsel %vm659, %v1849, 0
        %v1992 = vsel %vm659, %v1852, 0
        %v1994 = vsel %vm659, %v1855, 0
        %v1996 = vsel %vm659, %v1858, 0
        %v1998 = vsel %vm659, %v1861, 0
        %v2000 = vsel %vm659, %v1864, 0
        %v2002 = vsel %vm659, %v1867, 0
        %v2004 = vsel %vm659, %v1870, 0
        %v2006 = vsel %vm659, %v1873, 0
        %v2008 = vsel %vm659, %v1876, 0
        %v2010 = vsel %vm659, %v1879, 0
        %v2012 = vsel %vm659, %v1882, 0
        %v2014 = vsel %vm659, %v1885, 0
        %v2017 = vsel %vm788, %v1887, 0
        %2019 = vmatprep.subr.mxu0 0.0
        %2020 = vmatpush1.msra.mxu0 0.0
        %2021 = vmatprep.subr.mxu0 0.0
        %2022 = vmatpush1.msra.mxu0 0.0
        %2023 = vmatprep.subr.mxu0 0.0
        %2024 = vmatpush1.msra.mxu0 0.0
        %2025 = vmatprep.subr.mxu0 0.0
        %2026 = vmatpush1.msra.mxu0 0.0
        %2027 = vmatprep.subr.mxu0 0.0
        %2028 = vmatpush1.msra.mxu0 0.0
        %2029 = vmatprep.subr.mxu0 0.0
        %2030 = vmatpush1.msra.mxu0 0.0
        %2031 = vmatprep.subr.mxu0 0.0
        %2032 = vmatpush1.msra.mxu0 0.0
        %2033 = vmatprep.subr.mxu0 0.0
        %2034 = vmatpush1.msra.mxu0 0.0
        %2035 = vmatprep.subr.mxu0 0.0
        %2036 = vmatpush1.msra.mxu0 0.0
        %2037 = vmatprep.subr.mxu0 0.0
        %2038 = vmatpush1.msra.mxu0 0.0
        %2039 = vmatprep.subr.mxu0 0.0
        %2040 = vmatpush1.msra.mxu0 0.0
        %2041 = vmatprep.subr.mxu0 0.0
        %2042 = vmatpush1.msra.mxu0 0.0
        %2043 = vmatprep.subr.mxu0 0.0
        %2044 = vmatpush1.msra.mxu0 0.0
        %2045 = vmatprep.subr.mxu0 0.0
        %2046 = vmatpush1.msra.mxu0 0.0
        %2047 = vmatprep.subr.mxu0 0.0
        %2048 = vmatpush1.msra.mxu0 0.0
        %2049 = vmatprep.subr.mxu0 0.0
        %2050 = vmatpush1.msra.mxu0 %v2017
        %2051 = vmatprep.subr.mxu0 0.0
        %2052 = vmatpush2.msra.mxu0 0.0
        %2053 = vmatprep.subr.mxu0 0.0
        %2054 = vmatpush2.msra.mxu0 0.0
        %2055 = vmatprep.subr.mxu0 0.0
        %2056 = vmatpush2.msra.mxu0 0.0
        %2057 = vmatprep.subr.mxu0 0.0
        %2058 = vmatpush2.msra.mxu0 0.0
        %2059 = vmatprep.subr.mxu0 0.0
        %2060 = vmatpush2.msra.mxu0 0.0
        %2061 = vmatprep.subr.mxu0 0.0
        %2062 = vmatpush2.msra.mxu0 0.0
        %2063 = vmatprep.subr.mxu0 0.0
        %2064 = vmatpush2.msra.mxu0 0.0
        %2065 = vmatprep.subr.mxu0 0.0
        %2066 = vmatpush2.msra.mxu0 0.0
        %2067 = vmatprep.subr.mxu0 0.0
        %2068 = vmatpush2.msra.mxu0 0.0
        %2069 = vmatprep.subr.mxu0 0.0
        %2070 = vmatpush2.msra.mxu0 0.0
        %2071 = vmatprep.subr.mxu0 0.0
        %2072 = vmatpush2.msra.mxu0 0.0
        %2073 = vmatprep.subr.mxu0 0.0
        %2074 = vmatpush2.msra.mxu0 0.0
        %2075 = vmatprep.subr.mxu0 0.0
        %2076 = vmatpush2.msra.mxu0 0.0
        %2077 = vmatprep.subr.mxu0 0.0
        %2078 = vmatpush2.msra.mxu0 0.0
        %2079 = vmatprep.subr.mxu0 0.0
        %2080 = vmatpush2.msra.mxu0 0.0
        %2081 = vmatprep.subr.mxu0 0.0
        %2082 = vmatpush2.msra.mxu0 0.0
        %2083 = vmatprep.mubr.f32.mxu0 0.0
        %2084 = vmatmul.mubr.f32.gmra.mxu0 %v1888
        %v2085 = vpop.f32.mrf.mxu0
        %v2086 = vadd.f32 0.0, %v2085
        %v2087 = vpop.f32.mrf.mxu0
        %2088 = vmatprep.mubr.f32.mxu0 0.0
        %2089 = vmatmul.mubr.f32.gmra.mxu0 %v1890
        %v2090 = vpop.f32.mrf.mxu0
        %v2091 = vadd.f32 0.0, %v2090
        %v2092 = vpop.f32.mrf.mxu0
        %2093 = vmatprep.mubr.f32.mxu0 0.0
        %2094 = vmatmul.mubr.f32.gmra.mxu0 %v1892
        %v2095 = vpop.f32.mrf.mxu0
        %v2096 = vadd.f32 0.0, %v2095
        %v2097 = vpop.f32.mrf.mxu0
        %2098 = vmatprep.mubr.f32.mxu0 0.0
        %2099 = vmatmul.mubr.f32.gmra.mxu0 %v1894
        %v2100 = vpop.f32.mrf.mxu0
        %v2101 = vadd.f32 0.0, %v2100
        %v2102 = vpop.f32.mrf.mxu0
        %2103 = vmatprep.mubr.f32.mxu0 0.0
        %2104 = vmatmul.mubr.f32.gmra.mxu0 %v1896
        %v2105 = vpop.f32.mrf.mxu0
        %v2106 = vadd.f32 0.0, %v2105
        %v2107 = vpop.f32.mrf.mxu0
        %2108 = vmatprep.mubr.f32.mxu0 0.0
        %2109 = vmatmul.mubr.f32.gmra.mxu0 %v1898
        %v2110 = vpop.f32.mrf.mxu0
        %v2111 = vadd.f32 0.0, %v2110
        %v2112 = vpop.f32.mrf.mxu0
        %2113 = vmatprep.mubr.f32.mxu0 0.0
        %2114 = vmatmul.mubr.f32.gmra.mxu0 %v1900
        %v2115 = vpop.f32.mrf.mxu0
        %v2116 = vadd.f32 0.0, %v2115
        %v2117 = vpop.f32.mrf.mxu0
        %2118 = vmatprep.mubr.f32.mxu0 0.0
        %2119 = vmatmul.mubr.f32.gmra.mxu0 %v1902
        %v2120 = vpop.f32.mrf.mxu0
        %v2121 = vadd.f32 0.0, %v2120
        %v2122 = vpop.f32.mrf.mxu0
        %2123 = vmatprep.mubr.f32.mxu0 0.0
        %2124 = vmatmul.mubr.f32.gmra.mxu0 %v1904
        %v2125 = vpop.f32.mrf.mxu0
        %v2126 = vadd.f32 0.0, %v2125
        %v2127 = vpop.f32.mrf.mxu0
        %2128 = vmatprep.mubr.f32.mxu0 0.0
        %2129 = vmatmul.mubr.f32.gmra.mxu0 %v1906
        %v2130 = vpop.f32.mrf.mxu0
        %v2131 = vadd.f32 0.0, %v2130
        %v2132 = vpop.f32.mrf.mxu0
        %2133 = vmatprep.mubr.f32.mxu0 0.0
        %2134 = vmatmul.mubr.f32.gmra.mxu0 %v1908
        %v2135 = vpop.f32.mrf.mxu0
        %v2136 = vadd.f32 0.0, %v2135
        %v2137 = vpop.f32.mrf.mxu0
        %2138 = vmatprep.mubr.f32.mxu0 0.0
        %2139 = vmatmul.mubr.f32.gmra.mxu0 %v1910
        %v2140 = vpop.f32.mrf.mxu0
        %v2141 = vadd.f32 0.0, %v2140
        %v2142 = vpop.f32.mrf.mxu0
        %2143 = vmatprep.mubr.f32.mxu0 0.0
        %2144 = vmatmul.mubr.f32.gmra.mxu0 %v1912
        %v2145 = vpop.f32.mrf.mxu0
        %v2146 = vadd.f32 0.0, %v2145
        %v2147 = vpop.f32.mrf.mxu0
        %2148 = vmatprep.mubr.f32.mxu0 0.0
        %2149 = vmatmul.mubr.f32.gmra.mxu0 %v1914
        %v2150 = vpop.f32.mrf.mxu0
        %v2151 = vadd.f32 0.0, %v2150
        %v2152 = vpop.f32.mrf.mxu0
        %2153 = vmatprep.mubr.f32.mxu0 0.0
        %2154 = vmatmul.mubr.f32.gmra.mxu0 %v1916
        %v2155 = vpop.f32.mrf.mxu0
        %v2156 = vadd.f32 0.0, %v2155
        %v2157 = vpop.f32.mrf.mxu0
        %2158 = vmatprep.mubr.f32.mxu0 0.0
        %2159 = vmatmul.mubr.f32.gmra.mxu0 %v1918
        %v2160 = vpop.f32.mrf.mxu0
        %v2161 = vadd.f32 0.0, %v2160
        %v2162 = vpop.f32.mrf.mxu0
        %2163 = vmatprep.mubr.f32.mxu0 0.0
        %2164 = vmatmul.mubr.f32.gmra.mxu0 %v1920
        %v2165 = vpop.f32.mrf.mxu0
        %v2166 = vadd.f32 0.0, %v2165
        %v2167 = vpop.f32.mrf.mxu0
        %2168 = vmatprep.mubr.f32.mxu0 0.0
        %2169 = vmatmul.mubr.f32.gmra.mxu0 %v1922
        %v2170 = vpop.f32.mrf.mxu0
        %v2171 = vadd.f32 0.0, %v2170
        %v2172 = vpop.f32.mrf.mxu0
        %2173 = vmatprep.mubr.f32.mxu0 0.0
        %2174 = vmatmul.mubr.f32.gmra.mxu0 %v1924
        %v2175 = vpop.f32.mrf.mxu0
        %v2176 = vadd.f32 0.0, %v2175
        %v2177 = vpop.f32.mrf.mxu0
        %2178 = vmatprep.mubr.f32.mxu0 0.0
        %2179 = vmatmul.mubr.f32.gmra.mxu0 %v1926
        %v2180 = vpop.f32.mrf.mxu0
        %v2181 = vadd.f32 0.0, %v2180
        %v2182 = vpop.f32.mrf.mxu0
        %2183 = vmatprep.mubr.f32.mxu0 0.0
        %2184 = vmatmul.mubr.f32.gmra.mxu0 %v1928
        %v2185 = vpop.f32.mrf.mxu0
        %v2186 = vadd.f32 0.0, %v2185
        %v2187 = vpop.f32.mrf.mxu0
        %2188 = vmatprep.mubr.f32.mxu0 0.0
        %2189 = vmatmul.mubr.f32.gmra.mxu0 %v1930
        %v2190 = vpop.f32.mrf.mxu0
        %v2191 = vadd.f32 0.0, %v2190
        %v2192 = vpop.f32.mrf.mxu0
        %2193 = vmatprep.mubr.f32.mxu0 0.0
        %2194 = vmatmul.mubr.f32.gmra.mxu0 %v1932
        %v2195 = vpop.f32.mrf.mxu0
        %v2196 = vadd.f32 0.0, %v2195
        %v2197 = vpop.f32.mrf.mxu0
        %2198 = vmatprep.mubr.f32.mxu0 0.0
        %2199 = vmatmul.mubr.f32.gmra.mxu0 %v1934
        %v2200 = vpop.f32.mrf.mxu0
        %v2201 = vadd.f32 0.0, %v2200
        %v2202 = vpop.f32.mrf.mxu0
        %2203 = vmatprep.mubr.f32.mxu0 0.0
        %2204 = vmatmul.mubr.f32.gmra.mxu0 %v1936
        %v2205 = vpop.f32.mrf.mxu0
        %v2206 = vadd.f32 0.0, %v2205
        %v2207 = vpop.f32.mrf.mxu0
        %2208 = vmatprep.mubr.f32.mxu0 0.0
        %2209 = vmatmul.mubr.f32.gmra.mxu0 %v1938
        %v2210 = vpop.f32.mrf.mxu0
        %v2211 = vadd.f32 0.0, %v2210
        %v2212 = vpop.f32.mrf.mxu0
        %2213 = vmatprep.mubr.f32.mxu0 0.0
        %2214 = vmatmul.mubr.f32.gmra.mxu0 %v1940
        %v2215 = vpop.f32.mrf.mxu0
        %v2216 = vadd.f32 0.0, %v2215
        %v2217 = vpop.f32.mrf.mxu0
        %2218 = vmatprep.mubr.f32.mxu0 0.0
        %2219 = vmatmul.mubr.f32.gmra.mxu0 %v1942
        %v2220 = vpop.f32.mrf.mxu0
        %v2221 = vadd.f32 0.0, %v2220
        %v2222 = vpop.f32.mrf.mxu0
        %2223 = vmatprep.mubr.f32.mxu0 0.0
        %2224 = vmatmul.mubr.f32.gmra.mxu0 %v1944
        %v2225 = vpop.f32.mrf.mxu0
        %v2226 = vadd.f32 0.0, %v2225
        %v2227 = vpop.f32.mrf.mxu0
        %2228 = vmatprep.mubr.f32.mxu0 0.0
        %2229 = vmatmul.mubr.f32.gmra.mxu0 %v1946
        %v2230 = vpop.f32.mrf.mxu0
        %v2231 = vadd.f32 0.0, %v2230
        %v2232 = vpop.f32.mrf.mxu0
        %2233 = vmatprep.mubr.f32.mxu0 0.0
        %2234 = vmatmul.mubr.f32.gmra.mxu0 %v1948
        %v2235 = vpop.f32.mrf.mxu0
        %v2236 = vadd.f32 0.0, %v2235
        %v2237 = vpop.f32.mrf.mxu0
        %2238 = vmatprep.mubr.f32.mxu0 0.0
        %2239 = vmatmul.mubr.f32.gmra.mxu0 %v1950
        %v2240 = vpop.f32.mrf.mxu0
        %v2241 = vadd.f32 0.0, %v2240
        %v2242 = vpop.f32.mrf.mxu0
        %2243 = vmatprep.mubr.f32.mxu0 0.0
        %2244 = vmatmul.mubr.f32.gmra.mxu0 %v1952
        %v2245 = vpop.f32.mrf.mxu0
        %v2246 = vadd.f32 0.0, %v2245
        %v2247 = vpop.f32.mrf.mxu0
        %2248 = vmatprep.mubr.f32.mxu0 0.0
        %2249 = vmatmul.mubr.f32.gmra.mxu0 %v1954
        %v2250 = vpop.f32.mrf.mxu0
        %v2251 = vadd.f32 0.0, %v2250
        %v2252 = vpop.f32.mrf.mxu0
        %2253 = vmatprep.mubr.f32.mxu0 0.0
        %2254 = vmatmul.mubr.f32.gmra.mxu0 %v1956
        %v2255 = vpop.f32.mrf.mxu0
        %v2256 = vadd.f32 0.0, %v2255
        %v2257 = vpop.f32.mrf.mxu0
        %2258 = vmatprep.mubr.f32.mxu0 0.0
        %2259 = vmatmul.mubr.f32.gmra.mxu0 %v1958
        %v2260 = vpop.f32.mrf.mxu0
        %v2261 = vadd.f32 0.0, %v2260
        %v2262 = vpop.f32.mrf.mxu0
        %2263 = vmatprep.mubr.f32.mxu0 0.0
        %2264 = vmatmul.mubr.f32.gmra.mxu0 %v1960
        %v2265 = vpop.f32.mrf.mxu0
        %v2266 = vadd.f32 0.0, %v2265
        %v2267 = vpop.f32.mrf.mxu0
        %2268 = vmatprep.mubr.f32.mxu0 0.0
        %2269 = vmatmul.mubr.f32.gmra.mxu0 %v1962
        %v2270 = vpop.f32.mrf.mxu0
        %v2271 = vadd.f32 0.0, %v2270
        %v2272 = vpop.f32.mrf.mxu0
        %2273 = vmatprep.mubr.f32.mxu0 0.0
        %2274 = vmatmul.mubr.f32.gmra.mxu0 %v1964
        %v2275 = vpop.f32.mrf.mxu0
        %v2276 = vadd.f32 0.0, %v2275
        %v2277 = vpop.f32.mrf.mxu0
        %2278 = vmatprep.mubr.f32.mxu0 0.0
        %2279 = vmatmul.mubr.f32.gmra.mxu0 %v1966
        %v2280 = vpop.f32.mrf.mxu0
        %v2281 = vadd.f32 0.0, %v2280
        %v2282 = vpop.f32.mrf.mxu0
        %2283 = vmatprep.mubr.f32.mxu0 0.0
        %2284 = vmatmul.mubr.f32.gmra.mxu0 %v1968
        %v2285 = vpop.f32.mrf.mxu0
        %v2286 = vadd.f32 0.0, %v2285
        %v2287 = vpop.f32.mrf.mxu0
        %2288 = vmatprep.mubr.f32.mxu0 0.0
        %2289 = vmatmul.mubr.f32.gmra.mxu0 %v1970
        %v2290 = vpop.f32.mrf.mxu0
        %v2291 = vadd.f32 0.0, %v2290
        %v2292 = vpop.f32.mrf.mxu0
        %2293 = vmatprep.mubr.f32.mxu0 0.0
        %2294 = vmatmul.mubr.f32.gmra.mxu0 %v1972
        %v2295 = vpop.f32.mrf.mxu0
        %v2296 = vadd.f32 0.0, %v2295
        %v2297 = vpop.f32.mrf.mxu0
        %2298 = vmatprep.mubr.f32.mxu0 0.0
        %2299 = vmatmul.mubr.f32.gmra.mxu0 %v1974
        %v2300 = vpop.f32.mrf.mxu0
        %v2301 = vadd.f32 0.0, %v2300
        %v2302 = vpop.f32.mrf.mxu0
        %2303 = vmatprep.mubr.f32.mxu0 0.0
        %2304 = vmatmul.mubr.f32.gmra.mxu0 %v1976
        %v2305 = vpop.f32.mrf.mxu0
        %v2306 = vadd.f32 0.0, %v2305
        %v2307 = vpop.f32.mrf.mxu0
        %2308 = vmatprep.mubr.f32.mxu0 0.0
        %2309 = vmatmul.mubr.f32.gmra.mxu0 %v1978
        %v2310 = vpop.f32.mrf.mxu0
        %v2311 = vadd.f32 0.0, %v2310
        %v2312 = vpop.f32.mrf.mxu0
        %2313 = vmatprep.mubr.f32.mxu0 0.0
        %2314 = vmatmul.mubr.f32.gmra.mxu0 %v1980
        %v2315 = vpop.f32.mrf.mxu0
        %v2316 = vadd.f32 0.0, %v2315
        %v2317 = vpop.f32.mrf.mxu0
        %2318 = vmatprep.mubr.f32.mxu0 0.0
        %2319 = vmatmul.mubr.f32.gmra.mxu0 %v1982
        %v2320 = vpop.f32.mrf.mxu0
        %v2321 = vadd.f32 0.0, %v2320
        %v2322 = vpop.f32.mrf.mxu0
        %2323 = vmatprep.mubr.f32.mxu0 0.0
        %2324 = vmatmul.mubr.f32.gmra.mxu0 %v1984
        %v2325 = vpop.f32.mrf.mxu0
        %v2326 = vadd.f32 0.0, %v2325
        %v2327 = vpop.f32.mrf.mxu0
        %2328 = vmatprep.mubr.f32.mxu0 0.0
        %2329 = vmatmul.mubr.f32.gmra.mxu0 %v1986
        %v2330 = vpop.f32.mrf.mxu0
        %v2331 = vadd.f32 0.0, %v2330
        %v2332 = vpop.f32.mrf.mxu0
        %2333 = vmatprep.mubr.f32.mxu0 0.0
        %2334 = vmatmul.mubr.f32.gmra.mxu0 %v1988
        %v2335 = vpop.f32.mrf.mxu0
        %v2336 = vadd.f32 0.0, %v2335
        %v2337 = vpop.f32.mrf.mxu0
        %2338 = vmatprep.mubr.f32.mxu0 0.0
        %2339 = vmatmul.mubr.f32.gmra.mxu0 %v1990
        %v2340 = vpop.f32.mrf.mxu0
        %v2341 = vadd.f32 0.0, %v2340
        %v2342 = vpop.f32.mrf.mxu0
        %2343 = vmatprep.mubr.f32.mxu0 0.0
        %2344 = vmatmul.mubr.f32.gmra.mxu0 %v1992
        %v2345 = vpop.f32.mrf.mxu0
        %v2346 = vadd.f32 0.0, %v2345
        %v2347 = vpop.f32.mrf.mxu0
        %2348 = vmatprep.mubr.f32.mxu0 0.0
        %2349 = vmatmul.mubr.f32.gmra.mxu0 %v1994
        %v2350 = vpop.f32.mrf.mxu0
        %v2351 = vadd.f32 0.0, %v2350
        %v2352 = vpop.f32.mrf.mxu0
        %2353 = vmatprep.mubr.f32.mxu0 0.0
        %2354 = vmatmul.mubr.f32.gmra.mxu0 %v1996
        %v2355 = vpop.f32.mrf.mxu0
        %v2356 = vadd.f32 0.0, %v2355
        %v2357 = vpop.f32.mrf.mxu0
        %2358 = vmatprep.mubr.f32.mxu0 0.0
        %2359 = vmatmul.mubr.f32.gmra.mxu0 %v1998
        %v2360 = vpop.f32.mrf.mxu0
        %v2361 = vadd.f32 0.0, %v2360
        %v2362 = vpop.f32.mrf.mxu0
        %2363 = vmatprep.mubr.f32.mxu0 0.0
        %2364 = vmatmul.mubr.f32.gmra.mxu0 %v2000
        %v2365 = vpop.f32.mrf.mxu0
        %v2366 = vadd.f32 0.0, %v2365
        %v2367 = vpop.f32.mrf.mxu0
        %2368 = vmatprep.mubr.f32.mxu0 0.0
        %2369 = vmatmul.mubr.f32.gmra.mxu0 %v2002
        %v2370 = vpop.f32.mrf.mxu0
        %v2371 = vadd.f32 0.0, %v2370
        %v2372 = vpop.f32.mrf.mxu0
        %2373 = vmatprep.mubr.f32.mxu0 0.0
        %2374 = vmatmul.mubr.f32.gmra.mxu0 %v2004
        %v2375 = vpop.f32.mrf.mxu0
        %v2376 = vadd.f32 0.0, %v2375
        %v2377 = vpop.f32.mrf.mxu0
        %2378 = vmatprep.mubr.f32.mxu0 0.0
        %2379 = vmatmul.mubr.f32.gmra.mxu0 %v2006
        %v2380 = vpop.f32.mrf.mxu0
        %v2381 = vadd.f32 0.0, %v2380
        %v2382 = vpop.f32.mrf.mxu0
        %2383 = vmatprep.mubr.f32.mxu0 0.0
        %2384 = vmatmul.mubr.f32.gmra.mxu0 %v2008
        %v2385 = vpop.f32.mrf.mxu0
        %v2386 = vadd.f32 0.0, %v2385
        %v2387 = vpop.f32.mrf.mxu0
        %2388 = vmatprep.mubr.f32.mxu0 0.0
        %2389 = vmatmul.mubr.f32.gmra.mxu0 %v2010
        %v2390 = vpop.f32.mrf.mxu0
        %v2391 = vadd.f32 0.0, %v2390
        %v2392 = vpop.f32.mrf.mxu0
        %2393 = vmatprep.mubr.f32.mxu0 0.0
        %2394 = vmatmul.mubr.f32.gmra.mxu0 %v2012
        %v2395 = vpop.f32.mrf.mxu0
        %v2396 = vadd.f32 0.0, %v2395
        %v2397 = vpop.f32.mrf.mxu0
        %2398 = vmatprep.mubr.f32.mxu0 0.0
        %2399 = vmatmul.mubr.f32.gmra.mxu0 %v2014
        %v2400 = vpop.f32.mrf.mxu0
        %v2401 = vadd.f32 0.0, %v2400
        %v2402 = vpop.f32.mrf.mxu0
        %2403 = vdwg.mxu0
        %v2404 = vadd.f32 %v1375, %v2086
        %v2405 = vadd.f32 %v1380, %v2091
        %v2406 = vadd.f32 %v1385, %v2096
        %v2407 = vadd.f32 %v1390, %v2101
        %v2408 = vadd.f32 %v1395, %v2106
        %v2409 = vadd.f32 %v1400, %v2111
        %v2410 = vadd.f32 %v1405, %v2116
        %v2411 = vadd.f32 %v1410, %v2121
        %v2412 = vadd.f32 %v1415, %v2126
        %v2413 = vadd.f32 %v1420, %v2131
        %v2414 = vadd.f32 %v1425, %v2136
        %v2415 = vadd.f32 %v1430, %v2141
        %v2416 = vadd.f32 %v1435, %v2146
        %v2417 = vadd.f32 %v1440, %v2151
        %v2418 = vadd.f32 %v1445, %v2156
        %v2419 = vadd.f32 %v1450, %v2161
        %v2420 = vadd.f32 %v1455, %v2166
        %v2421 = vadd.f32 %v1460, %v2171
        %v2422 = vadd.f32 %v1465, %v2176
        %v2423 = vadd.f32 %v1470, %v2181
        %v2424 = vadd.f32 %v1475, %v2186
        %v2425 = vadd.f32 %v1480, %v2191
        %v2426 = vadd.f32 %v1485, %v2196
        %v2427 = vadd.f32 %v1490, %v2201
        %v2428 = vadd.f32 %v1495, %v2206
        %v2429 = vadd.f32 %v1500, %v2211
        %v2430 = vadd.f32 %v1505, %v2216
        %v2431 = vadd.f32 %v1510, %v2221
        %v2432 = vadd.f32 %v1515, %v2226
        %v2433 = vadd.f32 %v1520, %v2231
        %v2434 = vadd.f32 %v1525, %v2236
        %v2435 = vadd.f32 %v1530, %v2241
        %v2436 = vadd.f32 %v1535, %v2246
        %v2437 = vadd.f32 %v1540, %v2251
        %v2438 = vadd.f32 %v1545, %v2256
        %v2439 = vadd.f32 %v1550, %v2261
        %v2440 = vadd.f32 %v1555, %v2266
        %v2441 = vadd.f32 %v1560, %v2271
        %v2442 = vadd.f32 %v1565, %v2276
        %v2443 = vadd.f32 %v1570, %v2281
        %v2444 = vadd.f32 %v1575, %v2286
        %v2445 = vadd.f32 %v1580, %v2291
        %v2446 = vadd.f32 %v1585, %v2296
        %v2447 = vadd.f32 %v1590, %v2301
        %v2448 = vadd.f32 %v1595, %v2306
        %v2449 = vadd.f32 %v1600, %v2311
        %v2450 = vadd.f32 %v1605, %v2316
        %v2451 = vadd.f32 %v1610, %v2321
        %v2452 = vadd.f32 %v1615, %v2326
        %v2453 = vadd.f32 %v1620, %v2331
        %v2454 = vadd.f32 %v1625, %v2336
        %v2455 = vadd.f32 %v1630, %v2341
        %v2456 = vadd.f32 %v1635, %v2346
        %v2457 = vadd.f32 %v1640, %v2351
        %v2458 = vadd.f32 %v1645, %v2356
        %v2459 = vadd.f32 %v1650, %v2361
        %v2460 = vadd.f32 %v1655, %v2366
        %v2461 = vadd.f32 %v1660, %v2371
        %v2462 = vadd.f32 %v1665, %v2376
        %v2463 = vadd.f32 %v1670, %v2381
        %v2464 = vadd.f32 %v1675, %v2386
        %v2465 = vadd.f32 %v1680, %v2391
        %v2466 = vadd.f32 %v1685, %v2396
        %v2467 = vadd.f32 %v1690, %v2401
        %s2468 = scalar_lea.vmem %s1, 12
        %v2469 = vld [vmem:[%s2468] sm:$0xf]
        %v2471 = vsel %vm659, %v191, 0
        %v2474 = vsel %vm659, %v211, 0
        %v2477 = vsel %vm659, %v231, 0
        %v2480 = vsel %vm659, %v251, 0
        %v2483 = vsel %vm659, %v271, 0
        %v2486 = vsel %vm659, %v291, 0
        %v2489 = vsel %vm659, %v311, 0
        %v2492 = vsel %vm659, %v331, 0
        %v2495 = vsel %vm788, %v2469, 0
        %2497 = vmatprep.subr.mxu0 0.0
        %2498 = vmatpush1.msra.mxu0 0.0
        %2499 = vmatprep.subr.mxu0 0.0
        %2500 = vmatpush1.msra.mxu0 0.0
        %2501 = vmatprep.subr.mxu0 0.0
        %2502 = vmatpush1.msra.mxu0 0.0
        %2503 = vmatprep.subr.mxu0 0.0
        %2504 = vmatpush1.msra.mxu0 0.0
        %2505 = vmatprep.subr.mxu0 0.0
        %2506 = vmatpush1.msra.mxu0 0.0
        %2507 = vmatprep.subr.mxu0 0.0
        %2508 = vmatpush1.msra.mxu0 0.0
        %2509 = vmatprep.subr.mxu0 0.0
        %2510 = vmatpush1.msra.mxu0 0.0
        %2511 = vmatprep.subr.mxu0 0.0
        %2512 = vmatpush1.msra.mxu0 0.0
        %2513 = vmatprep.subr.mxu0 0.0
        %2514 = vmatpush1.msra.mxu0 0.0
        %2515 = vmatprep.subr.mxu0 0.0
        %2516 = vmatpush1.msra.mxu0 0.0
        %2517 = vmatprep.subr.mxu0 0.0
        %2518 = vmatpush1.msra.mxu0 0.0
        %2519 = vmatprep.subr.mxu0 0.0
        %2520 = vmatpush1.msra.mxu0 0.0
        %2521 = vmatprep.subr.mxu0 0.0
        %2522 = vmatpush1.msra.mxu0 0.0
        %2523 = vmatprep.subr.mxu0 0.0
        %2524 = vmatpush1.msra.mxu0 0.0
        %2525 = vmatprep.subr.mxu0 0.0
        %2526 = vmatpush1.msra.mxu0 0.0
        %2527 = vmatprep.subr.mxu0 0.0
        %2528 = vmatpush1.msra.mxu0 %v2495
        %2529 = vmatprep.subr.mxu0 0.0
        %2530 = vmatpush2.msra.mxu0 0.0
        %2531 = vmatprep.subr.mxu0 0.0
        %2532 = vmatpush2.msra.mxu0 0.0
        %2533 = vmatprep.subr.mxu0 0.0
        %2534 = vmatpush2.msra.mxu0 0.0
        %2535 = vmatprep.subr.mxu0 0.0
        %2536 = vmatpush2.msra.mxu0 0.0
        %2537 = vmatprep.subr.mxu0 0.0
        %2538 = vmatpush2.msra.mxu0 0.0
        %2539 = vmatprep.subr.mxu0 0.0
        %2540 = vmatpush2.msra.mxu0 0.0
        %2541 = vmatprep.subr.mxu0 0.0
        %2542 = vmatpush2.msra.mxu0 0.0
        %2543 = vmatprep.subr.mxu0 0.0
        %2544 = vmatpush2.msra.mxu0 0.0
        %2545 = vmatprep.subr.mxu0 0.0
        %2546 = vmatpush2.msra.mxu0 0.0
        %2547 = vmatprep.subr.mxu0 0.0
        %2548 = vmatpush2.msra.mxu0 0.0
        %2549 = vmatprep.subr.mxu0 0.0
        %2550 = vmatpush2.msra.mxu0 0.0
        %2551 = vmatprep.subr.mxu0 0.0
        %2552 = vmatpush2.msra.mxu0 0.0
        %2553 = vmatprep.subr.mxu0 0.0
        %2554 = vmatpush2.msra.mxu0 0.0
        %2555 = vmatprep.subr.mxu0 0.0
        %2556 = vmatpush2.msra.mxu0 0.0
        %2557 = vmatprep.subr.mxu0 0.0
        %2558 = vmatpush2.msra.mxu0 0.0
        %2559 = vmatprep.subr.mxu0 0.0
        %2560 = vmatpush2.msra.mxu0 0.0
        %2561 = vmatprep.mubr.f32.mxu0 0.0
        %2562 = vmatmul.mubr.f32.gmra.mxu0 %v1179
        %v2563 = vpop.f32.mrf.mxu0
        %v2564 = vadd.f32 0.0, %v2563
        %v2565 = vpop.f32.mrf.mxu0
        %2566 = vmatprep.mubr.f32.mxu0 0.0
        %2567 = vmatmul.mubr.f32.gmra.mxu0 %v1181
        %v2568 = vpop.f32.mrf.mxu0
        %v2569 = vadd.f32 0.0, %v2568
        %v2570 = vpop.f32.mrf.mxu0
        %2571 = vmatprep.mubr.f32.mxu0 0.0
        %2572 = vmatmul.mubr.f32.gmra.mxu0 %v1183
        %v2573 = vpop.f32.mrf.mxu0
        %v2574 = vadd.f32 0.0, %v2573
        %v2575 = vpop.f32.mrf.mxu0
        %2576 = vmatprep.mubr.f32.mxu0 0.0
        %2577 = vmatmul.mubr.f32.gmra.mxu0 %v1185
        %v2578 = vpop.f32.mrf.mxu0
        %v2579 = vadd.f32 0.0, %v2578
        %v2580 = vpop.f32.mrf.mxu0
        %2581 = vmatprep.mubr.f32.mxu0 0.0
        %2582 = vmatmul.mubr.f32.gmra.mxu0 %v1187
        %v2583 = vpop.f32.mrf.mxu0
        %v2584 = vadd.f32 0.0, %v2583
        %v2585 = vpop.f32.mrf.mxu0
        %2586 = vmatprep.mubr.f32.mxu0 0.0
        %2587 = vmatmul.mubr.f32.gmra.mxu0 %v1189
        %v2588 = vpop.f32.mrf.mxu0
        %v2589 = vadd.f32 0.0, %v2588
        %v2590 = vpop.f32.mrf.mxu0
        %2591 = vmatprep.mubr.f32.mxu0 0.0
        %2592 = vmatmul.mubr.f32.gmra.mxu0 %v1191
        %v2593 = vpop.f32.mrf.mxu0
        %v2594 = vadd.f32 0.0, %v2593
        %v2595 = vpop.f32.mrf.mxu0
        %2596 = vmatprep.mubr.f32.mxu0 0.0
        %2597 = vmatmul.mubr.f32.gmra.mxu0 %v2471
        %v2598 = vpop.f32.mrf.mxu0
        %v2599 = vadd.f32 0.0, %v2598
        %v2600 = vpop.f32.mrf.mxu0
        %2601 = vmatprep.mubr.f32.mxu0 0.0
        %2602 = vmatmul.mubr.f32.gmra.mxu0 %v1195
        %v2603 = vpop.f32.mrf.mxu0
        %v2604 = vadd.f32 0.0, %v2603
        %v2605 = vpop.f32.mrf.mxu0
        %2606 = vmatprep.mubr.f32.mxu0 0.0
        %2607 = vmatmul.mubr.f32.gmra.mxu0 %v1197
        %v2608 = vpop.f32.mrf.mxu0
        %v2609 = vadd.f32 0.0, %v2608
        %v2610 = vpop.f32.mrf.mxu0
        %2611 = vmatprep.mubr.f32.mxu0 0.0
        %2612 = vmatmul.mubr.f32.gmra.mxu0 %v1199
        %v2613 = vpop.f32.mrf.mxu0
        %v2614 = vadd.f32 0.0, %v2613
        %v2615 = vpop.f32.mrf.mxu0
        %2616 = vmatprep.mubr.f32.mxu0 0.0
        %2617 = vmatmul.mubr.f32.gmra.mxu0 %v1201
        %v2618 = vpop.f32.mrf.mxu0
        %v2619 = vadd.f32 0.0, %v2618
        %v2620 = vpop.f32.mrf.mxu0
        %2621 = vmatprep.mubr.f32.mxu0 0.0
        %2622 = vmatmul.mubr.f32.gmra.mxu0 %v1203
        %v2623 = vpop.f32.mrf.mxu0
        %v2624 = vadd.f32 0.0, %v2623
        %v2625 = vpop.f32.mrf.mxu0
        %2626 = vmatprep.mubr.f32.mxu0 0.0
        %2627 = vmatmul.mubr.f32.gmra.mxu0 %v1205
        %v2628 = vpop.f32.mrf.mxu0
        %v2629 = vadd.f32 0.0, %v2628
        %v2630 = vpop.f32.mrf.mxu0
        %2631 = vmatprep.mubr.f32.mxu0 0.0
        %2632 = vmatmul.mubr.f32.gmra.mxu0 %v1207
        %v2633 = vpop.f32.mrf.mxu0
        %v2634 = vadd.f32 0.0, %v2633
        %v2635 = vpop.f32.mrf.mxu0
        %2636 = vmatprep.mubr.f32.mxu0 0.0
        %2637 = vmatmul.mubr.f32.gmra.mxu0 %v2474
        %v2638 = vpop.f32.mrf.mxu0
        %v2639 = vadd.f32 0.0, %v2638
        %v2640 = vpop.f32.mrf.mxu0
        %2641 = vmatprep.mubr.f32.mxu0 0.0
        %2642 = vmatmul.mubr.f32.gmra.mxu0 %v1211
        %v2643 = vpop.f32.mrf.mxu0
        %v2644 = vadd.f32 0.0, %v2643
        %v2645 = vpop.f32.mrf.mxu0
        %2646 = vmatprep.mubr.f32.mxu0 0.0
        %2647 = vmatmul.mubr.f32.gmra.mxu0 %v1213
        %v2648 = vpop.f32.mrf.mxu0
        %v2649 = vadd.f32 0.0, %v2648
        %v2650 = vpop.f32.mrf.mxu0
        %2651 = vmatprep.mubr.f32.mxu0 0.0
        %2652 = vmatmul.mubr.f32.gmra.mxu0 %v1215
        %v2653 = vpop.f32.mrf.mxu0
        %v2654 = vadd.f32 0.0, %v2653
        %v2655 = vpop.f32.mrf.mxu0
        %2656 = vmatprep.mubr.f32.mxu0 0.0
        %2657 = vmatmul.mubr.f32.gmra.mxu0 %v1217
        %v2658 = vpop.f32.mrf.mxu0
        %v2659 = vadd.f32 0.0, %v2658
        %v2660 = vpop.f32.mrf.mxu0
        %2661 = vmatprep.mubr.f32.mxu0 0.0
        %2662 = vmatmul.mubr.f32.gmra.mxu0 %v1219
        %v2663 = vpop.f32.mrf.mxu0
        %v2664 = vadd.f32 0.0, %v2663
        %v2665 = vpop.f32.mrf.mxu0
        %2666 = vmatprep.mubr.f32.mxu0 0.0
        %2667 = vmatmul.mubr.f32.gmra.mxu0 %v1221
        %v2668 = vpop.f32.mrf.mxu0
        %v2669 = vadd.f32 0.0, %v2668
        %v2670 = vpop.f32.mrf.mxu0
        %2671 = vmatprep.mubr.f32.mxu0 0.0
        %2672 = vmatmul.mubr.f32.gmra.mxu0 %v1223
        %v2673 = vpop.f32.mrf.mxu0
        %v2674 = vadd.f32 0.0, %v2673
        %v2675 = vpop.f32.mrf.mxu0
        %2676 = vmatprep.mubr.f32.mxu0 0.0
        %2677 = vmatmul.mubr.f32.gmra.mxu0 %v2477
        %v2678 = vpop.f32.mrf.mxu0
        %v2679 = vadd.f32 0.0, %v2678
        %v2680 = vpop.f32.mrf.mxu0
        %2681 = vmatprep.mubr.f32.mxu0 0.0
        %2682 = vmatmul.mubr.f32.gmra.mxu0 %v1227
        %v2683 = vpop.f32.mrf.mxu0
        %v2684 = vadd.f32 0.0, %v2683
        %v2685 = vpop.f32.mrf.mxu0
        %2686 = vmatprep.mubr.f32.mxu0 0.0
        %2687 = vmatmul.mubr.f32.gmra.mxu0 %v1229
        %v2688 = vpop.f32.mrf.mxu0
        %v2689 = vadd.f32 0.0, %v2688
        %v2690 = vpop.f32.mrf.mxu0
        %2691 = vmatprep.mubr.f32.mxu0 0.0
        %2692 = vmatmul.mubr.f32.gmra.mxu0 %v1231
        %v2693 = vpop.f32.mrf.mxu0
        %v2694 = vadd.f32 0.0, %v2693
        %v2695 = vpop.f32.mrf.mxu0
        %2696 = vmatprep.mubr.f32.mxu0 0.0
        %2697 = vmatmul.mubr.f32.gmra.mxu0 %v1233
        %v2698 = vpop.f32.mrf.mxu0
        %v2699 = vadd.f32 0.0, %v2698
        %v2700 = vpop.f32.mrf.mxu0
        %2701 = vmatprep.mubr.f32.mxu0 0.0
        %2702 = vmatmul.mubr.f32.gmra.mxu0 %v1235
        %v2703 = vpop.f32.mrf.mxu0
        %v2704 = vadd.f32 0.0, %v2703
        %v2705 = vpop.f32.mrf.mxu0
        %2706 = vmatprep.mubr.f32.mxu0 0.0
        %2707 = vmatmul.mubr.f32.gmra.mxu0 %v1237
        %v2708 = vpop.f32.mrf.mxu0
        %v2709 = vadd.f32 0.0, %v2708
        %v2710 = vpop.f32.mrf.mxu0
        %2711 = vmatprep.mubr.f32.mxu0 0.0
        %2712 = vmatmul.mubr.f32.gmra.mxu0 %v1239
        %v2713 = vpop.f32.mrf.mxu0
        %v2714 = vadd.f32 0.0, %v2713
        %v2715 = vpop.f32.mrf.mxu0
        %2716 = vmatprep.mubr.f32.mxu0 0.0
        %2717 = vmatmul.mubr.f32.gmra.mxu0 %v2480
        %v2718 = vpop.f32.mrf.mxu0
        %v2719 = vadd.f32 0.0, %v2718
        %v2720 = vpop.f32.mrf.mxu0
        %2721 = vmatprep.mubr.f32.mxu0 0.0
        %2722 = vmatmul.mubr.f32.gmra.mxu0 %v1243
        %v2723 = vpop.f32.mrf.mxu0
        %v2724 = vadd.f32 0.0, %v2723
        %v2725 = vpop.f32.mrf.mxu0
        %2726 = vmatprep.mubr.f32.mxu0 0.0
        %2727 = vmatmul.mubr.f32.gmra.mxu0 %v1245
        %v2728 = vpop.f32.mrf.mxu0
        %v2729 = vadd.f32 0.0, %v2728
        %v2730 = vpop.f32.mrf.mxu0
        %2731 = vmatprep.mubr.f32.mxu0 0.0
        %2732 = vmatmul.mubr.f32.gmra.mxu0 %v1247
        %v2733 = vpop.f32.mrf.mxu0
        %v2734 = vadd.f32 0.0, %v2733
        %v2735 = vpop.f32.mrf.mxu0
        %2736 = vmatprep.mubr.f32.mxu0 0.0
        %2737 = vmatmul.mubr.f32.gmra.mxu0 %v1249
        %v2738 = vpop.f32.mrf.mxu0
        %v2739 = vadd.f32 0.0, %v2738
        %v2740 = vpop.f32.mrf.mxu0
        %2741 = vmatprep.mubr.f32.mxu0 0.0
        %2742 = vmatmul.mubr.f32.gmra.mxu0 %v1251
        %v2743 = vpop.f32.mrf.mxu0
        %v2744 = vadd.f32 0.0, %v2743
        %v2745 = vpop.f32.mrf.mxu0
        %2746 = vmatprep.mubr.f32.mxu0 0.0
        %2747 = vmatmul.mubr.f32.gmra.mxu0 %v1253
        %v2748 = vpop.f32.mrf.mxu0
        %v2749 = vadd.f32 0.0, %v2748
        %v2750 = vpop.f32.mrf.mxu0
        %2751 = vmatprep.mubr.f32.mxu0 0.0
        %2752 = vmatmul.mubr.f32.gmra.mxu0 %v1255
        %v2753 = vpop.f32.mrf.mxu0
        %v2754 = vadd.f32 0.0, %v2753
        %v2755 = vpop.f32.mrf.mxu0
        %2756 = vmatprep.mubr.f32.mxu0 0.0
        %2757 = vmatmul.mubr.f32.gmra.mxu0 %v2483
        %v2758 = vpop.f32.mrf.mxu0
        %v2759 = vadd.f32 0.0, %v2758
        %v2760 = vpop.f32.mrf.mxu0
        %2761 = vmatprep.mubr.f32.mxu0 0.0
        %2762 = vmatmul.mubr.f32.gmra.mxu0 %v1259
        %v2763 = vpop.f32.mrf.mxu0
        %v2764 = vadd.f32 0.0, %v2763
        %v2765 = vpop.f32.mrf.mxu0
        %2766 = vmatprep.mubr.f32.mxu0 0.0
        %2767 = vmatmul.mubr.f32.gmra.mxu0 %v1261
        %v2768 = vpop.f32.mrf.mxu0
        %v2769 = vadd.f32 0.0, %v2768
        %v2770 = vpop.f32.mrf.mxu0
        %2771 = vmatprep.mubr.f32.mxu0 0.0
        %2772 = vmatmul.mubr.f32.gmra.mxu0 %v1263
        %v2773 = vpop.f32.mrf.mxu0
        %v2774 = vadd.f32 0.0, %v2773
        %v2775 = vpop.f32.mrf.mxu0
        %2776 = vmatprep.mubr.f32.mxu0 0.0
        %2777 = vmatmul.mubr.f32.gmra.mxu0 %v1265
        %v2778 = vpop.f32.mrf.mxu0
        %v2779 = vadd.f32 0.0, %v2778
        %v2780 = vpop.f32.mrf.mxu0
        %2781 = vmatprep.mubr.f32.mxu0 0.0
        %2782 = vmatmul.mubr.f32.gmra.mxu0 %v1267
        %v2783 = vpop.f32.mrf.mxu0
        %v2784 = vadd.f32 0.0, %v2783
        %v2785 = vpop.f32.mrf.mxu0
        %2786 = vmatprep.mubr.f32.mxu0 0.0
        %2787 = vmatmul.mubr.f32.gmra.mxu0 %v1269
        %v2788 = vpop.f32.mrf.mxu0
        %v2789 = vadd.f32 0.0, %v2788
        %v2790 = vpop.f32.mrf.mxu0
        %2791 = vmatprep.mubr.f32.mxu0 0.0
        %2792 = vmatmul.mubr.f32.gmra.mxu0 %v1271
        %v2793 = vpop.f32.mrf.mxu0
        %v2794 = vadd.f32 0.0, %v2793
        %v2795 = vpop.f32.mrf.mxu0
        %2796 = vmatprep.mubr.f32.mxu0 0.0
        %2797 = vmatmul.mubr.f32.gmra.mxu0 %v2486
        %v2798 = vpop.f32.mrf.mxu0
        %v2799 = vadd.f32 0.0, %v2798
        %v2800 = vpop.f32.mrf.mxu0
        %2801 = vmatprep.mubr.f32.mxu0 0.0
        %2802 = vmatmul.mubr.f32.gmra.mxu0 %v1275
        %v2803 = vpop.f32.mrf.mxu0
        %v2804 = vadd.f32 0.0, %v2803
        %v2805 = vpop.f32.mrf.mxu0
        %2806 = vmatprep.mubr.f32.mxu0 0.0
        %2807 = vmatmul.mubr.f32.gmra.mxu0 %v1277
        %v2808 = vpop.f32.mrf.mxu0
        %v2809 = vadd.f32 0.0, %v2808
        %v2810 = vpop.f32.mrf.mxu0
        %2811 = vmatprep.mubr.f32.mxu0 0.0
        %2812 = vmatmul.mubr.f32.gmra.mxu0 %v1279
        %v2813 = vpop.f32.mrf.mxu0
        %v2814 = vadd.f32 0.0, %v2813
        %v2815 = vpop.f32.mrf.mxu0
        %2816 = vmatprep.mubr.f32.mxu0 0.0
        %2817 = vmatmul.mubr.f32.gmra.mxu0 %v1281
        %v2818 = vpop.f32.mrf.mxu0
        %v2819 = vadd.f32 0.0, %v2818
        %v2820 = vpop.f32.mrf.mxu0
        %2821 = vmatprep.mubr.f32.mxu0 0.0
        %2822 = vmatmul.mubr.f32.gmra.mxu0 %v1283
        %v2823 = vpop.f32.mrf.mxu0
        %v2824 = vadd.f32 0.0, %v2823
        %v2825 = vpop.f32.mrf.mxu0
        %2826 = vmatprep.mubr.f32.mxu0 0.0
        %2827 = vmatmul.mubr.f32.gmra.mxu0 %v1285
        %v2828 = vpop.f32.mrf.mxu0
        %v2829 = vadd.f32 0.0, %v2828
        %v2830 = vpop.f32.mrf.mxu0
        %2831 = vmatprep.mubr.f32.mxu0 0.0
        %2832 = vmatmul.mubr.f32.gmra.mxu0 %v1287
        %v2833 = vpop.f32.mrf.mxu0
        %v2834 = vadd.f32 0.0, %v2833
        %v2835 = vpop.f32.mrf.mxu0
        %2836 = vmatprep.mubr.f32.mxu0 0.0
        %2837 = vmatmul.mubr.f32.gmra.mxu0 %v2489
        %v2838 = vpop.f32.mrf.mxu0
        %v2839 = vadd.f32 0.0, %v2838
        %v2840 = vpop.f32.mrf.mxu0
        %2841 = vmatprep.mubr.f32.mxu0 0.0
        %2842 = vmatmul.mubr.f32.gmra.mxu0 %v1291
        %v2843 = vpop.f32.mrf.mxu0
        %v2844 = vadd.f32 0.0, %v2843
        %v2845 = vpop.f32.mrf.mxu0
        %2846 = vmatprep.mubr.f32.mxu0 0.0
        %2847 = vmatmul.mubr.f32.gmra.mxu0 %v1293
        %v2848 = vpop.f32.mrf.mxu0
        %v2849 = vadd.f32 0.0, %v2848
        %v2850 = vpop.f32.mrf.mxu0
        %2851 = vmatprep.mubr.f32.mxu0 0.0
        %2852 = vmatmul.mubr.f32.gmra.mxu0 %v1295
        %v2853 = vpop.f32.mrf.mxu0
        %v2854 = vadd.f32 0.0, %v2853
        %v2855 = vpop.f32.mrf.mxu0
        %2856 = vmatprep.mubr.f32.mxu0 0.0
        %2857 = vmatmul.mubr.f32.gmra.mxu0 %v1297
        %v2858 = vpop.f32.mrf.mxu0
        %v2859 = vadd.f32 0.0, %v2858
        %v2860 = vpop.f32.mrf.mxu0
        %2861 = vmatprep.mubr.f32.mxu0 0.0
        %2862 = vmatmul.mubr.f32.gmra.mxu0 %v1299
        %v2863 = vpop.f32.mrf.mxu0
        %v2864 = vadd.f32 0.0, %v2863
        %v2865 = vpop.f32.mrf.mxu0
        %2866 = vmatprep.mubr.f32.mxu0 0.0
        %2867 = vmatmul.mubr.f32.gmra.mxu0 %v1301
        %v2868 = vpop.f32.mrf.mxu0
        %v2869 = vadd.f32 0.0, %v2868
        %v2870 = vpop.f32.mrf.mxu0
        %2871 = vmatprep.mubr.f32.mxu0 0.0
        %2872 = vmatmul.mubr.f32.gmra.mxu0 %v1303
        %v2873 = vpop.f32.mrf.mxu0
        %v2874 = vadd.f32 0.0, %v2873
        %v2875 = vpop.f32.mrf.mxu0
        %2876 = vmatprep.mubr.f32.mxu0 0.0
        %2877 = vmatmul.mubr.f32.gmra.mxu0 %v2492
        %v2878 = vpop.f32.mrf.mxu0
        %v2879 = vadd.f32 0.0, %v2878
        %v2880 = vpop.f32.mrf.mxu0
        %2881 = vdwg.mxu0
        %v2882 = vadd.f32 %v2404, %v2564
        %v2883 = vadd.f32 %v2405, %v2569
        %v2884 = vadd.f32 %v2406, %v2574
        %v2885 = vadd.f32 %v2407, %v2579
        %v2886 = vadd.f32 %v2408, %v2584
        %v2887 = vadd.f32 %v2409, %v2589
        %v2888 = vadd.f32 %v2410, %v2594
        %v2889 = vadd.f32 %v2411, %v2599
        %v2890 = vadd.f32 %v2412, %v2604
        %v2891 = vadd.f32 %v2413, %v2609
        %v2892 = vadd.f32 %v2414, %v2614
        %v2893 = vadd.f32 %v2415, %v2619
        %v2894 = vadd.f32 %v2416, %v2624
        %v2895 = vadd.f32 %v2417, %v2629
        %v2896 = vadd.f32 %v2418, %v2634
        %v2897 = vadd.f32 %v2419, %v2639
        %v2898 = vadd.f32 %v2420, %v2644
        %v2899 = vadd.f32 %v2421, %v2649
        %v2900 = vadd.f32 %v2422, %v2654
        %v2901 = vadd.f32 %v2423, %v2659
        %v2902 = vadd.f32 %v2424, %v2664
        %v2903 = vadd.f32 %v2425, %v2669
        %v2904 = vadd.f32 %v2426, %v2674
        %v2905 = vadd.f32 %v2427, %v2679
        %v2906 = vadd.f32 %v2428, %v2684
        %v2907 = vadd.f32 %v2429, %v2689
        %v2908 = vadd.f32 %v2430, %v2694
        %v2909 = vadd.f32 %v2431, %v2699
        %v2910 = vadd.f32 %v2432, %v2704
        %v2911 = vadd.f32 %v2433, %v2709
        %v2912 = vadd.f32 %v2434, %v2714
        %v2913 = vadd.f32 %v2435, %v2719
        %v2914 = vadd.f32 %v2436, %v2724
        %v2915 = vadd.f32 %v2437, %v2729
        %v2916 = vadd.f32 %v2438, %v2734
        %v2917 = vadd.f32 %v2439, %v2739
        %v2918 = vadd.f32 %v2440, %v2744
        %v2919 = vadd.f32 %v2441, %v2749
        %v2920 = vadd.f32 %v2442, %v2754
        %v2921 = vadd.f32 %v2443, %v2759
        %v2922 = vadd.f32 %v2444, %v2764
        %v2923 = vadd.f32 %v2445, %v2769
        %v2924 = vadd.f32 %v2446, %v2774
        %v2925 = vadd.f32 %v2447, %v2779
        %v2926 = vadd.f32 %v2448, %v2784
        %v2927 = vadd.f32 %v2449, %v2789
        %v2928 = vadd.f32 %v2450, %v2794
        %v2929 = vadd.f32 %v2451, %v2799
        %v2930 = vadd.f32 %v2452, %v2804
        %v2931 = vadd.f32 %v2453, %v2809
        %v2932 = vadd.f32 %v2454, %v2814
        %v2933 = vadd.f32 %v2455, %v2819
        %v2934 = vadd.f32 %v2456, %v2824
        %v2935 = vadd.f32 %v2457, %v2829
        %v2936 = vadd.f32 %v2458, %v2834
        %v2937 = vadd.f32 %v2459, %v2839
        %v2938 = vadd.f32 %v2460, %v2844
        %v2939 = vadd.f32 %v2461, %v2849
        %v2940 = vadd.f32 %v2462, %v2854
        %v2941 = vadd.f32 %v2463, %v2859
        %v2942 = vadd.f32 %v2464, %v2864
        %v2943 = vadd.f32 %v2465, %v2869
        %v2944 = vadd.f32 %v2466, %v2874
        %v2945 = vadd.f32 %v2467, %v2879
        %v2954 = vrot.slane %v191, 1
        %v2955 = vrot.slane %v192, 1
        %v2956 = vsel %vm464, %v2954, %v2955
        %v2957 = vrot.slane %v211, 1
        %v2958 = vrot.slane %v212, 1
        %v2959 = vsel %vm464, %v2957, %v2958
        %v2960 = vrot.slane %v231, 1
        %v2961 = vrot.slane %v232, 1
        %v2962 = vsel %vm464, %v2960, %v2961
        %v2963 = vrot.slane %v251, 1
        %v2964 = vrot.slane %v252, 1
        %v2965 = vsel %vm464, %v2963, %v2964
        %v2966 = vrot.slane %v271, 1
        %v2967 = vrot.slane %v272, 1
        %v2968 = vsel %vm464, %v2966, %v2967
        %v2969 = vrot.slane %v291, 1
        %v2970 = vrot.slane %v292, 1
        %v2971 = vsel %vm464, %v2969, %v2970
        %v2972 = vrot.slane %v311, 1
        %v2973 = vrot.slane %v312, 1
        %v2974 = vsel %vm464, %v2972, %v2973
        %v2975 = vrot.slane %v331, 1
        %v2976 = vrot.slane %v332, 1
        %v2977 = vsel %vm464, %v2975, %v2976
        %s2978 = scalar_lea.vmem %s1, 16
        %v2979 = vld [vmem:[%s2978] sm:$0xf]
        %v2980 = vsel %vm659, %v2956, 0
        %v2982 = vsel %vm659, %v2959, 0
        %v2984 = vsel %vm659, %v2962, 0
        %v2986 = vsel %vm659, %v2965, 0
        %v2988 = vsel %vm659, %v2968, 0
        %v2990 = vsel %vm659, %v2971, 0
        %v2992 = vsel %vm659, %v2974, 0
        %v2994 = vsel %vm659, %v2977, 0
        %v2997 = vsel %vm788, %v2979, 0
        %2999 = vmatprep.subr.mxu0 0.0
        %3000 = vmatpush1.msra.mxu0 0.0
        %3001 = vmatprep.subr.mxu0 0.0
        %3002 = vmatpush1.msra.mxu0 0.0
        %3003 = vmatprep.subr.mxu0 0.0
        %3004 = vmatpush1.msra.mxu0 0.0
        %3005 = vmatprep.subr.mxu0 0.0
        %3006 = vmatpush1.msra.mxu0 0.0
        %3007 = vmatprep.subr.mxu0 0.0
        %3008 = vmatpush1.msra.mxu0 0.0
        %3009 = vmatprep.subr.mxu0 0.0
        %3010 = vmatpush1.msra.mxu0 0.0
        %3011 = vmatprep.subr.mxu0 0.0
        %3012 = vmatpush1.msra.mxu0 0.0
        %3013 = vmatprep.subr.mxu0 0.0
        %3014 = vmatpush1.msra.mxu0 0.0
        %3015 = vmatprep.subr.mxu0 0.0
        %3016 = vmatpush1.msra.mxu0 0.0
        %3017 = vmatprep.subr.mxu0 0.0
        %3018 = vmatpush1.msra.mxu0 0.0
        %3019 = vmatprep.subr.mxu0 0.0
        %3020 = vmatpush1.msra.mxu0 0.0
        %3021 = vmatprep.subr.mxu0 0.0
        %3022 = vmatpush1.msra.mxu0 0.0
        %3023 = vmatprep.subr.mxu0 0.0
        %3024 = vmatpush1.msra.mxu0 0.0
        %3025 = vmatprep.subr.mxu0 0.0
        %3026 = vmatpush1.msra.mxu0 0.0
        %3027 = vmatprep.subr.mxu0 0.0
        %3028 = vmatpush1.msra.mxu0 0.0
        %3029 = vmatprep.subr.mxu0 0.0
        %3030 = vmatpush1.msra.mxu0 %v2997
        %3031 = vmatprep.subr.mxu0 0.0
        %3032 = vmatpush2.msra.mxu0 0.0
        %3033 = vmatprep.subr.mxu0 0.0
        %3034 = vmatpush2.msra.mxu0 0.0
        %3035 = vmatprep.subr.mxu0 0.0
        %3036 = vmatpush2.msra.mxu0 0.0
        %3037 = vmatprep.subr.mxu0 0.0
        %3038 = vmatpush2.msra.mxu0 0.0
        %3039 = vmatprep.subr.mxu0 0.0
        %3040 = vmatpush2.msra.mxu0 0.0
        %3041 = vmatprep.subr.mxu0 0.0
        %3042 = vmatpush2.msra.mxu0 0.0
        %3043 = vmatprep.subr.mxu0 0.0
        %3044 = vmatpush2.msra.mxu0 0.0
        %3045 = vmatprep.subr.mxu0 0.0
        %3046 = vmatpush2.msra.mxu0 0.0
        %3047 = vmatprep.subr.mxu0 0.0
        %3048 = vmatpush2.msra.mxu0 0.0
        %3049 = vmatprep.subr.mxu0 0.0
        %3050 = vmatpush2.msra.mxu0 0.0
        %3051 = vmatprep.subr.mxu0 0.0
        %3052 = vmatpush2.msra.mxu0 0.0
        %3053 = vmatprep.subr.mxu0 0.0
        %3054 = vmatpush2.msra.mxu0 0.0
        %3055 = vmatprep.subr.mxu0 0.0
        %3056 = vmatpush2.msra.mxu0 0.0
        %3057 = vmatprep.subr.mxu0 0.0
        %3058 = vmatpush2.msra.mxu0 0.0
        %3059 = vmatprep.subr.mxu0 0.0
        %3060 = vmatpush2.msra.mxu0 0.0
        %3061 = vmatprep.subr.mxu0 0.0
        %3062 = vmatpush2.msra.mxu0 0.0
        %3063 = vmatprep.mubr.f32.mxu0 0.0
        %3064 = vmatmul.mubr.f32.gmra.mxu0 %v662
        %v3065 = vpop.f32.mrf.mxu0
        %v3066 = vadd.f32 0.0, %v3065
        %v3067 = vpop.f32.mrf.mxu0
        %3068 = vmatprep.mubr.f32.mxu0 0.0
        %3069 = vmatmul.mubr.f32.gmra.mxu0 %v664
        %v3070 = vpop.f32.mrf.mxu0
        %v3071 = vadd.f32 0.0, %v3070
        %v3072 = vpop.f32.mrf.mxu0
        %3073 = vmatprep.mubr.f32.mxu0 0.0
        %3074 = vmatmul.mubr.f32.gmra.mxu0 %v666
        %v3075 = vpop.f32.mrf.mxu0
        %v3076 = vadd.f32 0.0, %v3075
        %v3077 = vpop.f32.mrf.mxu0
        %3078 = vmatprep.mubr.f32.mxu0 0.0
        %3079 = vmatmul.mubr.f32.gmra.mxu0 %v668
        %v3080 = vpop.f32.mrf.mxu0
        %v3081 = vadd.f32 0.0, %v3080
        %v3082 = vpop.f32.mrf.mxu0
        %3083 = vmatprep.mubr.f32.mxu0 0.0
        %3084 = vmatmul.mubr.f32.gmra.mxu0 %v670
        %v3085 = vpop.f32.mrf.mxu0
        %v3086 = vadd.f32 0.0, %v3085
        %v3087 = vpop.f32.mrf.mxu0
        %3088 = vmatprep.mubr.f32.mxu0 0.0
        %3089 = vmatmul.mubr.f32.gmra.mxu0 %v672
        %v3090 = vpop.f32.mrf.mxu0
        %v3091 = vadd.f32 0.0, %v3090
        %v3092 = vpop.f32.mrf.mxu0
        %3093 = vmatprep.mubr.f32.mxu0 0.0
        %3094 = vmatmul.mubr.f32.gmra.mxu0 %v674
        %v3095 = vpop.f32.mrf.mxu0
        %v3096 = vadd.f32 0.0, %v3095
        %v3097 = vpop.f32.mrf.mxu0
        %3098 = vmatprep.mubr.f32.mxu0 0.0
        %3099 = vmatmul.mubr.f32.gmra.mxu0 %v2980
        %v3100 = vpop.f32.mrf.mxu0
        %v3101 = vadd.f32 0.0, %v3100
        %v3102 = vpop.f32.mrf.mxu0
        %3103 = vmatprep.mubr.f32.mxu0 0.0
        %3104 = vmatmul.mubr.f32.gmra.mxu0 %v678
        %v3105 = vpop.f32.mrf.mxu0
        %v3106 = vadd.f32 0.0, %v3105
        %v3107 = vpop.f32.mrf.mxu0
        %3108 = vmatprep.mubr.f32.mxu0 0.0
        %3109 = vmatmul.mubr.f32.gmra.mxu0 %v680
        %v3110 = vpop.f32.mrf.mxu0
        %v3111 = vadd.f32 0.0, %v3110
        %v3112 = vpop.f32.mrf.mxu0
        %3113 = vmatprep.mubr.f32.mxu0 0.0
        %3114 = vmatmul.mubr.f32.gmra.mxu0 %v682
        %v3115 = vpop.f32.mrf.mxu0
        %v3116 = vadd.f32 0.0, %v3115
        %v3117 = vpop.f32.mrf.mxu0
        %3118 = vmatprep.mubr.f32.mxu0 0.0
        %3119 = vmatmul.mubr.f32.gmra.mxu0 %v684
        %v3120 = vpop.f32.mrf.mxu0
        %v3121 = vadd.f32 0.0, %v3120
        %v3122 = vpop.f32.mrf.mxu0
        %3123 = vmatprep.mubr.f32.mxu0 0.0
        %3124 = vmatmul.mubr.f32.gmra.mxu0 %v686
        %v3125 = vpop.f32.mrf.mxu0
        %v3126 = vadd.f32 0.0, %v3125
        %v3127 = vpop.f32.mrf.mxu0
        %3128 = vmatprep.mubr.f32.mxu0 0.0
        %3129 = vmatmul.mubr.f32.gmra.mxu0 %v688
        %v3130 = vpop.f32.mrf.mxu0
        %v3131 = vadd.f32 0.0, %v3130
        %v3132 = vpop.f32.mrf.mxu0
        %3133 = vmatprep.mubr.f32.mxu0 0.0
        %3134 = vmatmul.mubr.f32.gmra.mxu0 %v690
        %v3135 = vpop.f32.mrf.mxu0
        %v3136 = vadd.f32 0.0, %v3135
        %v3137 = vpop.f32.mrf.mxu0
        %3138 = vmatprep.mubr.f32.mxu0 0.0
        %3139 = vmatmul.mubr.f32.gmra.mxu0 %v2982
        %v3140 = vpop.f32.mrf.mxu0
        %v3141 = vadd.f32 0.0, %v3140
        %v3142 = vpop.f32.mrf.mxu0
        %3143 = vmatprep.mubr.f32.mxu0 0.0
        %3144 = vmatmul.mubr.f32.gmra.mxu0 %v694
        %v3145 = vpop.f32.mrf.mxu0
        %v3146 = vadd.f32 0.0, %v3145
        %v3147 = vpop.f32.mrf.mxu0
        %3148 = vmatprep.mubr.f32.mxu0 0.0
        %3149 = vmatmul.mubr.f32.gmra.mxu0 %v696
        %v3150 = vpop.f32.mrf.mxu0
        %v3151 = vadd.f32 0.0, %v3150
        %v3152 = vpop.f32.mrf.mxu0
        %3153 = vmatprep.mubr.f32.mxu0 0.0
        %3154 = vmatmul.mubr.f32.gmra.mxu0 %v698
        %v3155 = vpop.f32.mrf.mxu0
        %v3156 = vadd.f32 0.0, %v3155
        %v3157 = vpop.f32.mrf.mxu0
        %3158 = vmatprep.mubr.f32.mxu0 0.0
        %3159 = vmatmul.mubr.f32.gmra.mxu0 %v700
        %v3160 = vpop.f32.mrf.mxu0
        %v3161 = vadd.f32 0.0, %v3160
        %v3162 = vpop.f32.mrf.mxu0
        %3163 = vmatprep.mubr.f32.mxu0 0.0
        %3164 = vmatmul.mubr.f32.gmra.mxu0 %v702
        %v3165 = vpop.f32.mrf.mxu0
        %v3166 = vadd.f32 0.0, %v3165
        %v3167 = vpop.f32.mrf.mxu0
        %3168 = vmatprep.mubr.f32.mxu0 0.0
        %3169 = vmatmul.mubr.f32.gmra.mxu0 %v704
        %v3170 = vpop.f32.mrf.mxu0
        %v3171 = vadd.f32 0.0, %v3170
        %v3172 = vpop.f32.mrf.mxu0
        %3173 = vmatprep.mubr.f32.mxu0 0.0
        %3174 = vmatmul.mubr.f32.gmra.mxu0 %v706
        %v3175 = vpop.f32.mrf.mxu0
        %v3176 = vadd.f32 0.0, %v3175
        %v3177 = vpop.f32.mrf.mxu0
        %3178 = vmatprep.mubr.f32.mxu0 0.0
        %3179 = vmatmul.mubr.f32.gmra.mxu0 %v2984
        %v3180 = vpop.f32.mrf.mxu0
        %v3181 = vadd.f32 0.0, %v3180
        %v3182 = vpop.f32.mrf.mxu0
        %3183 = vmatprep.mubr.f32.mxu0 0.0
        %3184 = vmatmul.mubr.f32.gmra.mxu0 %v710
        %v3185 = vpop.f32.mrf.mxu0
        %v3186 = vadd.f32 0.0, %v3185
        %v3187 = vpop.f32.mrf.mxu0
        %3188 = vmatprep.mubr.f32.mxu0 0.0
        %3189 = vmatmul.mubr.f32.gmra.mxu0 %v712
        %v3190 = vpop.f32.mrf.mxu0
        %v3191 = vadd.f32 0.0, %v3190
        %v3192 = vpop.f32.mrf.mxu0
        %3193 = vmatprep.mubr.f32.mxu0 0.0
        %3194 = vmatmul.mubr.f32.gmra.mxu0 %v714
        %v3195 = vpop.f32.mrf.mxu0
        %v3196 = vadd.f32 0.0, %v3195
        %v3197 = vpop.f32.mrf.mxu0
        %3198 = vmatprep.mubr.f32.mxu0 0.0
        %3199 = vmatmul.mubr.f32.gmra.mxu0 %v716
        %v3200 = vpop.f32.mrf.mxu0
        %v3201 = vadd.f32 0.0, %v3200
        %v3202 = vpop.f32.mrf.mxu0
        %3203 = vmatprep.mubr.f32.mxu0 0.0
        %3204 = vmatmul.mubr.f32.gmra.mxu0 %v718
        %v3205 = vpop.f32.mrf.mxu0
        %v3206 = vadd.f32 0.0, %v3205
        %v3207 = vpop.f32.mrf.mxu0
        %3208 = vmatprep.mubr.f32.mxu0 0.0
        %3209 = vmatmul.mubr.f32.gmra.mxu0 %v720
        %v3210 = vpop.f32.mrf.mxu0
        %v3211 = vadd.f32 0.0, %v3210
        %v3212 = vpop.f32.mrf.mxu0
        %3213 = vmatprep.mubr.f32.mxu0 0.0
        %3214 = vmatmul.mubr.f32.gmra.mxu0 %v722
        %v3215 = vpop.f32.mrf.mxu0
        %v3216 = vadd.f32 0.0, %v3215
        %v3217 = vpop.f32.mrf.mxu0
        %3218 = vmatprep.mubr.f32.mxu0 0.0
        %3219 = vmatmul.mubr.f32.gmra.mxu0 %v2986
        %v3220 = vpop.f32.mrf.mxu0
        %v3221 = vadd.f32 0.0, %v3220
        %v3222 = vpop.f32.mrf.mxu0
        %3223 = vmatprep.mubr.f32.mxu0 0.0
        %3224 = vmatmul.mubr.f32.gmra.mxu0 %v726
        %v3225 = vpop.f32.mrf.mxu0
        %v3226 = vadd.f32 0.0, %v3225
        %v3227 = vpop.f32.mrf.mxu0
        %3228 = vmatprep.mubr.f32.mxu0 0.0
        %3229 = vmatmul.mubr.f32.gmra.mxu0 %v728
        %v3230 = vpop.f32.mrf.mxu0
        %v3231 = vadd.f32 0.0, %v3230
        %v3232 = vpop.f32.mrf.mxu0
        %3233 = vmatprep.mubr.f32.mxu0 0.0
        %3234 = vmatmul.mubr.f32.gmra.mxu0 %v730
        %v3235 = vpop.f32.mrf.mxu0
        %v3236 = vadd.f32 0.0, %v3235
        %v3237 = vpop.f32.mrf.mxu0
        %3238 = vmatprep.mubr.f32.mxu0 0.0
        %3239 = vmatmul.mubr.f32.gmra.mxu0 %v732
        %v3240 = vpop.f32.mrf.mxu0
        %v3241 = vadd.f32 0.0, %v3240
        %v3242 = vpop.f32.mrf.mxu0
        %3243 = vmatprep.mubr.f32.mxu0 0.0
        %3244 = vmatmul.mubr.f32.gmra.mxu0 %v734
        %v3245 = vpop.f32.mrf.mxu0
        %v3246 = vadd.f32 0.0, %v3245
        %v3247 = vpop.f32.mrf.mxu0
        %3248 = vmatprep.mubr.f32.mxu0 0.0
        %3249 = vmatmul.mubr.f32.gmra.mxu0 %v736
        %v3250 = vpop.f32.mrf.mxu0
        %v3251 = vadd.f32 0.0, %v3250
        %v3252 = vpop.f32.mrf.mxu0
        %3253 = vmatprep.mubr.f32.mxu0 0.0
        %3254 = vmatmul.mubr.f32.gmra.mxu0 %v738
        %v3255 = vpop.f32.mrf.mxu0
        %v3256 = vadd.f32 0.0, %v3255
        %v3257 = vpop.f32.mrf.mxu0
        %3258 = vmatprep.mubr.f32.mxu0 0.0
        %3259 = vmatmul.mubr.f32.gmra.mxu0 %v2988
        %v3260 = vpop.f32.mrf.mxu0
        %v3261 = vadd.f32 0.0, %v3260
        %v3262 = vpop.f32.mrf.mxu0
        %3263 = vmatprep.mubr.f32.mxu0 0.0
        %3264 = vmatmul.mubr.f32.gmra.mxu0 %v742
        %v3265 = vpop.f32.mrf.mxu0
        %v3266 = vadd.f32 0.0, %v3265
        %v3267 = vpop.f32.mrf.mxu0
        %3268 = vmatprep.mubr.f32.mxu0 0.0
        %3269 = vmatmul.mubr.f32.gmra.mxu0 %v744
        %v3270 = vpop.f32.mrf.mxu0
        %v3271 = vadd.f32 0.0, %v3270
        %v3272 = vpop.f32.mrf.mxu0
        %3273 = vmatprep.mubr.f32.mxu0 0.0
        %3274 = vmatmul.mubr.f32.gmra.mxu0 %v746
        %v3275 = vpop.f32.mrf.mxu0
        %v3276 = vadd.f32 0.0, %v3275
        %v3277 = vpop.f32.mrf.mxu0
        %3278 = vmatprep.mubr.f32.mxu0 0.0
        %3279 = vmatmul.mubr.f32.gmra.mxu0 %v748
        %v3280 = vpop.f32.mrf.mxu0
        %v3281 = vadd.f32 0.0, %v3280
        %v3282 = vpop.f32.mrf.mxu0
        %3283 = vmatprep.mubr.f32.mxu0 0.0
        %3284 = vmatmul.mubr.f32.gmra.mxu0 %v750
        %v3285 = vpop.f32.mrf.mxu0
        %v3286 = vadd.f32 0.0, %v3285
        %v3287 = vpop.f32.mrf.mxu0
        %3288 = vmatprep.mubr.f32.mxu0 0.0
        %3289 = vmatmul.mubr.f32.gmra.mxu0 %v752
        %v3290 = vpop.f32.mrf.mxu0
        %v3291 = vadd.f32 0.0, %v3290
        %v3292 = vpop.f32.mrf.mxu0
        %3293 = vmatprep.mubr.f32.mxu0 0.0
        %3294 = vmatmul.mubr.f32.gmra.mxu0 %v754
        %v3295 = vpop.f32.mrf.mxu0
        %v3296 = vadd.f32 0.0, %v3295
        %v3297 = vpop.f32.mrf.mxu0
        %3298 = vmatprep.mubr.f32.mxu0 0.0
        %3299 = vmatmul.mubr.f32.gmra.mxu0 %v2990
        %v3300 = vpop.f32.mrf.mxu0
        %v3301 = vadd.f32 0.0, %v3300
        %v3302 = vpop.f32.mrf.mxu0
        %3303 = vmatprep.mubr.f32.mxu0 0.0
        %3304 = vmatmul.mubr.f32.gmra.mxu0 %v758
        %v3305 = vpop.f32.mrf.mxu0
        %v3306 = vadd.f32 0.0, %v3305
        %v3307 = vpop.f32.mrf.mxu0
        %3308 = vmatprep.mubr.f32.mxu0 0.0
        %3309 = vmatmul.mubr.f32.gmra.mxu0 %v760
        %v3310 = vpop.f32.mrf.mxu0
        %v3311 = vadd.f32 0.0, %v3310
        %v3312 = vpop.f32.mrf.mxu0
        %3313 = vmatprep.mubr.f32.mxu0 0.0
        %3314 = vmatmul.mubr.f32.gmra.mxu0 %v762
        %v3315 = vpop.f32.mrf.mxu0
        %v3316 = vadd.f32 0.0, %v3315
        %v3317 = vpop.f32.mrf.mxu0
        %3318 = vmatprep.mubr.f32.mxu0 0.0
        %3319 = vmatmul.mubr.f32.gmra.mxu0 %v764
        %v3320 = vpop.f32.mrf.mxu0
        %v3321 = vadd.f32 0.0, %v3320
        %v3322 = vpop.f32.mrf.mxu0
        %3323 = vmatprep.mubr.f32.mxu0 0.0
        %3324 = vmatmul.mubr.f32.gmra.mxu0 %v766
        %v3325 = vpop.f32.mrf.mxu0
        %v3326 = vadd.f32 0.0, %v3325
        %v3327 = vpop.f32.mrf.mxu0
        %3328 = vmatprep.mubr.f32.mxu0 0.0
        %3329 = vmatmul.mubr.f32.gmra.mxu0 %v768
        %v3330 = vpop.f32.mrf.mxu0
        %v3331 = vadd.f32 0.0, %v3330
        %v3332 = vpop.f32.mrf.mxu0
        %3333 = vmatprep.mubr.f32.mxu0 0.0
        %3334 = vmatmul.mubr.f32.gmra.mxu0 %v770
        %v3335 = vpop.f32.mrf.mxu0
        %v3336 = vadd.f32 0.0, %v3335
        %v3337 = vpop.f32.mrf.mxu0
        %3338 = vmatprep.mubr.f32.mxu0 0.0
        %3339 = vmatmul.mubr.f32.gmra.mxu0 %v2992
        %v3340 = vpop.f32.mrf.mxu0
        %v3341 = vadd.f32 0.0, %v3340
        %v3342 = vpop.f32.mrf.mxu0
        %3343 = vmatprep.mubr.f32.mxu0 0.0
        %3344 = vmatmul.mubr.f32.gmra.mxu0 %v774
        %v3345 = vpop.f32.mrf.mxu0
        %v3346 = vadd.f32 0.0, %v3345
        %v3347 = vpop.f32.mrf.mxu0
        %3348 = vmatprep.mubr.f32.mxu0 0.0
        %3349 = vmatmul.mubr.f32.gmra.mxu0 %v776
        %v3350 = vpop.f32.mrf.mxu0
        %v3351 = vadd.f32 0.0, %v3350
        %v3352 = vpop.f32.mrf.mxu0
        %3353 = vmatprep.mubr.f32.mxu0 0.0
        %3354 = vmatmul.mubr.f32.gmra.mxu0 %v778
        %v3355 = vpop.f32.mrf.mxu0
        %v3356 = vadd.f32 0.0, %v3355
        %v3357 = vpop.f32.mrf.mxu0
        %3358 = vmatprep.mubr.f32.mxu0 0.0
        %3359 = vmatmul.mubr.f32.gmra.mxu0 %v780
        %v3360 = vpop.f32.mrf.mxu0
        %v3361 = vadd.f32 0.0, %v3360
        %v3362 = vpop.f32.mrf.mxu0
        %3363 = vmatprep.mubr.f32.mxu0 0.0
        %3364 = vmatmul.mubr.f32.gmra.mxu0 %v782
        %v3365 = vpop.f32.mrf.mxu0
        %v3366 = vadd.f32 0.0, %v3365
        %v3367 = vpop.f32.mrf.mxu0
        %3368 = vmatprep.mubr.f32.mxu0 0.0
        %3369 = vmatmul.mubr.f32.gmra.mxu0 %v784
        %v3370 = vpop.f32.mrf.mxu0
        %v3371 = vadd.f32 0.0, %v3370
        %v3372 = vpop.f32.mrf.mxu0
        %3373 = vmatprep.mubr.f32.mxu0 0.0
        %3374 = vmatmul.mubr.f32.gmra.mxu0 %v786
        %v3375 = vpop.f32.mrf.mxu0
        %v3376 = vadd.f32 0.0, %v3375
        %v3377 = vpop.f32.mrf.mxu0
        %3378 = vmatprep.mubr.f32.mxu0 0.0
        %3379 = vmatmul.mubr.f32.gmra.mxu0 %v2994
        %v3380 = vpop.f32.mrf.mxu0
        %v3381 = vadd.f32 0.0, %v3380
        %v3382 = vpop.f32.mrf.mxu0
        %3383 = vdwg.mxu0
        %v3384 = vadd.f32 %v2882, %v3066
        %v3385 = vadd.f32 %v2883, %v3071
        %v3386 = vadd.f32 %v2884, %v3076
        %v3387 = vadd.f32 %v2885, %v3081
        %v3388 = vadd.f32 %v2886, %v3086
        %v3389 = vadd.f32 %v2887, %v3091
        %v3390 = vadd.f32 %v2888, %v3096
        %v3391 = vadd.f32 %v2889, %v3101
        %v3392 = vadd.f32 %v2890, %v3106
        %v3393 = vadd.f32 %v2891, %v3111
        %v3394 = vadd.f32 %v2892, %v3116
        %v3395 = vadd.f32 %v2893, %v3121
        %v3396 = vadd.f32 %v2894, %v3126
        %v3397 = vadd.f32 %v2895, %v3131
        %v3398 = vadd.f32 %v2896, %v3136
        %v3399 = vadd.f32 %v2897, %v3141
        %v3400 = vadd.f32 %v2898, %v3146
        %v3401 = vadd.f32 %v2899, %v3151
        %v3402 = vadd.f32 %v2900, %v3156
        %v3403 = vadd.f32 %v2901, %v3161
        %v3404 = vadd.f32 %v2902, %v3166
        %v3405 = vadd.f32 %v2903, %v3171
        %v3406 = vadd.f32 %v2904, %v3176
        %v3407 = vadd.f32 %v2905, %v3181
        %v3408 = vadd.f32 %v2906, %v3186
        %v3409 = vadd.f32 %v2907, %v3191
        %v3410 = vadd.f32 %v2908, %v3196
        %v3411 = vadd.f32 %v2909, %v3201
        %v3412 = vadd.f32 %v2910, %v3206
        %v3413 = vadd.f32 %v2911, %v3211
        %v3414 = vadd.f32 %v2912, %v3216
        %v3415 = vadd.f32 %v2913, %v3221
        %v3416 = vadd.f32 %v2914, %v3226
        %v3417 = vadd.f32 %v2915, %v3231
        %v3418 = vadd.f32 %v2916, %v3236
        %v3419 = vadd.f32 %v2917, %v3241
        %v3420 = vadd.f32 %v2918, %v3246
        %v3421 = vadd.f32 %v2919, %v3251
        %v3422 = vadd.f32 %v2920, %v3256
        %v3423 = vadd.f32 %v2921, %v3261
        %v3424 = vadd.f32 %v2922, %v3266
        %v3425 = vadd.f32 %v2923, %v3271
        %v3426 = vadd.f32 %v2924, %v3276
        %v3427 = vadd.f32 %v2925, %v3281
        %v3428 = vadd.f32 %v2926, %v3286
        %v3429 = vadd.f32 %v2927, %v3291
        %v3430 = vadd.f32 %v2928, %v3296
        %v3431 = vadd.f32 %v2929, %v3301
        %v3432 = vadd.f32 %v2930, %v3306
        %v3433 = vadd.f32 %v2931, %v3311
        %v3434 = vadd.f32 %v2932, %v3316
        %v3435 = vadd.f32 %v2933, %v3321
        %v3436 = vadd.f32 %v2934, %v3326
        %v3437 = vadd.f32 %v2935, %v3331
        %v3438 = vadd.f32 %v2936, %v3336
        %v3439 = vadd.f32 %v2937, %v3341
        %v3440 = vadd.f32 %v2938, %v3346
        %v3441 = vadd.f32 %v2939, %v3351
        %v3442 = vadd.f32 %v2940, %v3356
        %v3443 = vadd.f32 %v2941, %v3361
        %v3444 = vadd.f32 %v2942, %v3366
        %v3445 = vadd.f32 %v2943, %v3371
        %v3446 = vadd.f32 %v2944, %v3376
        %v3447 = vadd.f32 %v2945, %v3381
        %v3448 = vrot.slane %v191, 2
        %v3449 = vrot.slane %v192, 2
        %v3450 = vsel %vm1693, %v3448, %v3449
        %v3451 = vrot.slane %v211, 2
        %v3452 = vrot.slane %v212, 2
        %v3453 = vsel %vm1693, %v3451, %v3452
        %v3454 = vrot.slane %v231, 2
        %v3455 = vrot.slane %v232, 2
        %v3456 = vsel %vm1693, %v3454, %v3455
        %v3457 = vrot.slane %v251, 2
        %v3458 = vrot.slane %v252, 2
        %v3459 = vsel %vm1693, %v3457, %v3458
        %v3460 = vrot.slane %v271, 2
        %v3461 = vrot.slane %v272, 2
        %v3462 = vsel %vm1693, %v3460, %v3461
        %v3463 = vrot.slane %v291, 2
        %v3464 = vrot.slane %v292, 2
        %v3465 = vsel %vm1693, %v3463, %v3464
        %v3466 = vrot.slane %v311, 2
        %v3467 = vrot.slane %v312, 2
        %v3468 = vsel %vm1693, %v3466, %v3467
        %v3469 = vrot.slane %v331, 2
        %v3470 = vrot.slane %v332, 2
        %v3471 = vsel %vm1693, %v3469, %v3470
        %s3472 = scalar_lea.vmem %s1, 20
        %v3473 = vld [vmem:[%s3472] sm:$0xf]
        %v3474 = vsel %vm659, %v3450, 0
        %v3476 = vsel %vm659, %v3453, 0
        %v3478 = vsel %vm659, %v3456, 0
        %v3480 = vsel %vm659, %v3459, 0
        %v3482 = vsel %vm659, %v3462, 0
        %v3484 = vsel %vm659, %v3465, 0
        %v3486 = vsel %vm659, %v3468, 0
        %v3488 = vsel %vm659, %v3471, 0
        %v3491 = vsel %vm788, %v3473, 0
        %3493 = vmatprep.subr.mxu0 0.0
        %3494 = vmatpush1.msra.mxu0 0.0
        %3495 = vmatprep.subr.mxu0 0.0
        %3496 = vmatpush1.msra.mxu0 0.0
        %3497 = vmatprep.subr.mxu0 0.0
        %3498 = vmatpush1.msra.mxu0 0.0
        %3499 = vmatprep.subr.mxu0 0.0
        %3500 = vmatpush1.msra.mxu0 0.0
        %3501 = vmatprep.subr.mxu0 0.0
        %3502 = vmatpush1.msra.mxu0 0.0
        %3503 = vmatprep.subr.mxu0 0.0
        %3504 = vmatpush1.msra.mxu0 0.0
        %3505 = vmatprep.subr.mxu0 0.0
        %3506 = vmatpush1.msra.mxu0 0.0
        %3507 = vmatprep.subr.mxu0 0.0
        %3508 = vmatpush1.msra.mxu0 0.0
        %3509 = vmatprep.subr.mxu0 0.0
        %3510 = vmatpush1.msra.mxu0 0.0
        %3511 = vmatprep.subr.mxu0 0.0
        %3512 = vmatpush1.msra.mxu0 0.0
        %3513 = vmatprep.subr.mxu0 0.0
        %3514 = vmatpush1.msra.mxu0 0.0
        %3515 = vmatprep.subr.mxu0 0.0
        %3516 = vmatpush1.msra.mxu0 0.0
        %3517 = vmatprep.subr.mxu0 0.0
        %3518 = vmatpush1.msra.mxu0 0.0
        %3519 = vmatprep.subr.mxu0 0.0
        %3520 = vmatpush1.msra.mxu0 0.0
        %3521 = vmatprep.subr.mxu0 0.0
        %3522 = vmatpush1.msra.mxu0 0.0
        %3523 = vmatprep.subr.mxu0 0.0
        %3524 = vmatpush1.msra.mxu0 %v3491
        %3525 = vmatprep.subr.mxu0 0.0
        %3526 = vmatpush2.msra.mxu0 0.0
        %3527 = vmatprep.subr.mxu0 0.0
        %3528 = vmatpush2.msra.mxu0 0.0
        %3529 = vmatprep.subr.mxu0 0.0
        %3530 = vmatpush2.msra.mxu0 0.0
        %3531 = vmatprep.subr.mxu0 0.0
        %3532 = vmatpush2.msra.mxu0 0.0
        %3533 = vmatprep.subr.mxu0 0.0
        %3534 = vmatpush2.msra.mxu0 0.0
        %3535 = vmatprep.subr.mxu0 0.0
        %3536 = vmatpush2.msra.mxu0 0.0
        %3537 = vmatprep.subr.mxu0 0.0
        %3538 = vmatpush2.msra.mxu0 0.0
        %3539 = vmatprep.subr.mxu0 0.0
        %3540 = vmatpush2.msra.mxu0 0.0
        %3541 = vmatprep.subr.mxu0 0.0
        %3542 = vmatpush2.msra.mxu0 0.0
        %3543 = vmatprep.subr.mxu0 0.0
        %3544 = vmatpush2.msra.mxu0 0.0
        %3545 = vmatprep.subr.mxu0 0.0
        %3546 = vmatpush2.msra.mxu0 0.0
        %3547 = vmatprep.subr.mxu0 0.0
        %3548 = vmatpush2.msra.mxu0 0.0
        %3549 = vmatprep.subr.mxu0 0.0
        %3550 = vmatpush2.msra.mxu0 0.0
        %3551 = vmatprep.subr.mxu0 0.0
        %3552 = vmatpush2.msra.mxu0 0.0
        %3553 = vmatprep.subr.mxu0 0.0
        %3554 = vmatpush2.msra.mxu0 0.0
        %3555 = vmatprep.subr.mxu0 0.0
        %3556 = vmatpush2.msra.mxu0 0.0
        %3557 = vmatprep.mubr.f32.mxu0 0.0
        %3558 = vmatmul.mubr.f32.gmra.mxu0 %v1890
        %v3559 = vpop.f32.mrf.mxu0
        %v3560 = vadd.f32 0.0, %v3559
        %v3561 = vpop.f32.mrf.mxu0
        %3562 = vmatprep.mubr.f32.mxu0 0.0
        %3563 = vmatmul.mubr.f32.gmra.mxu0 %v1892
        %v3564 = vpop.f32.mrf.mxu0
        %v3565 = vadd.f32 0.0, %v3564
        %v3566 = vpop.f32.mrf.mxu0
        %3567 = vmatprep.mubr.f32.mxu0 0.0
        %3568 = vmatmul.mubr.f32.gmra.mxu0 %v1894
        %v3569 = vpop.f32.mrf.mxu0
        %v3570 = vadd.f32 0.0, %v3569
        %v3571 = vpop.f32.mrf.mxu0
        %3572 = vmatprep.mubr.f32.mxu0 0.0
        %3573 = vmatmul.mubr.f32.gmra.mxu0 %v1896
        %v3574 = vpop.f32.mrf.mxu0
        %v3575 = vadd.f32 0.0, %v3574
        %v3576 = vpop.f32.mrf.mxu0
        %3577 = vmatprep.mubr.f32.mxu0 0.0
        %3578 = vmatmul.mubr.f32.gmra.mxu0 %v1898
        %v3579 = vpop.f32.mrf.mxu0
        %v3580 = vadd.f32 0.0, %v3579
        %v3581 = vpop.f32.mrf.mxu0
        %3582 = vmatprep.mubr.f32.mxu0 0.0
        %3583 = vmatmul.mubr.f32.gmra.mxu0 %v1900
        %v3584 = vpop.f32.mrf.mxu0
        %v3585 = vadd.f32 0.0, %v3584
        %v3586 = vpop.f32.mrf.mxu0
        %3587 = vmatprep.mubr.f32.mxu0 0.0
        %3588 = vmatmul.mubr.f32.gmra.mxu0 %v1902
        %v3589 = vpop.f32.mrf.mxu0
        %v3590 = vadd.f32 0.0, %v3589
        %v3591 = vpop.f32.mrf.mxu0
        %3592 = vmatprep.mubr.f32.mxu0 0.0
        %3593 = vmatmul.mubr.f32.gmra.mxu0 %v3474
        %v3594 = vpop.f32.mrf.mxu0
        %v3595 = vadd.f32 0.0, %v3594
        %v3596 = vpop.f32.mrf.mxu0
        %3597 = vmatprep.mubr.f32.mxu0 0.0
        %3598 = vmatmul.mubr.f32.gmra.mxu0 %v1906
        %v3599 = vpop.f32.mrf.mxu0
        %v3600 = vadd.f32 0.0, %v3599
        %v3601 = vpop.f32.mrf.mxu0
        %3602 = vmatprep.mubr.f32.mxu0 0.0
        %3603 = vmatmul.mubr.f32.gmra.mxu0 %v1908
        %v3604 = vpop.f32.mrf.mxu0
        %v3605 = vadd.f32 0.0, %v3604
        %v3606 = vpop.f32.mrf.mxu0
        %3607 = vmatprep.mubr.f32.mxu0 0.0
        %3608 = vmatmul.mubr.f32.gmra.mxu0 %v1910
        %v3609 = vpop.f32.mrf.mxu0
        %v3610 = vadd.f32 0.0, %v3609
        %v3611 = vpop.f32.mrf.mxu0
        %3612 = vmatprep.mubr.f32.mxu0 0.0
        %3613 = vmatmul.mubr.f32.gmra.mxu0 %v1912
        %v3614 = vpop.f32.mrf.mxu0
        %v3615 = vadd.f32 0.0, %v3614
        %v3616 = vpop.f32.mrf.mxu0
        %3617 = vmatprep.mubr.f32.mxu0 0.0
        %3618 = vmatmul.mubr.f32.gmra.mxu0 %v1914
        %v3619 = vpop.f32.mrf.mxu0
        %v3620 = vadd.f32 0.0, %v3619
        %v3621 = vpop.f32.mrf.mxu0
        %3622 = vmatprep.mubr.f32.mxu0 0.0
        %3623 = vmatmul.mubr.f32.gmra.mxu0 %v1916
        %v3624 = vpop.f32.mrf.mxu0
        %v3625 = vadd.f32 0.0, %v3624
        %v3626 = vpop.f32.mrf.mxu0
        %3627 = vmatprep.mubr.f32.mxu0 0.0
        %3628 = vmatmul.mubr.f32.gmra.mxu0 %v1918
        %v3629 = vpop.f32.mrf.mxu0
        %v3630 = vadd.f32 0.0, %v3629
        %v3631 = vpop.f32.mrf.mxu0
        %3632 = vmatprep.mubr.f32.mxu0 0.0
        %3633 = vmatmul.mubr.f32.gmra.mxu0 %v3476
        %v3634 = vpop.f32.mrf.mxu0
        %v3635 = vadd.f32 0.0, %v3634
        %v3636 = vpop.f32.mrf.mxu0
        %3637 = vmatprep.mubr.f32.mxu0 0.0
        %3638 = vmatmul.mubr.f32.gmra.mxu0 %v1922
        %v3639 = vpop.f32.mrf.mxu0
        %v3640 = vadd.f32 0.0, %v3639
        %v3641 = vpop.f32.mrf.mxu0
        %3642 = vmatprep.mubr.f32.mxu0 0.0
        %3643 = vmatmul.mubr.f32.gmra.mxu0 %v1924
        %v3644 = vpop.f32.mrf.mxu0
        %v3645 = vadd.f32 0.0, %v3644
        %v3646 = vpop.f32.mrf.mxu0
        %3647 = vmatprep.mubr.f32.mxu0 0.0
        %3648 = vmatmul.mubr.f32.gmra.mxu0 %v1926
        %v3649 = vpop.f32.mrf.mxu0
        %v3650 = vadd.f32 0.0, %v3649
        %v3651 = vpop.f32.mrf.mxu0
        %3652 = vmatprep.mubr.f32.mxu0 0.0
        %3653 = vmatmul.mubr.f32.gmra.mxu0 %v1928
        %v3654 = vpop.f32.mrf.mxu0
        %v3655 = vadd.f32 0.0, %v3654
        %v3656 = vpop.f32.mrf.mxu0
        %3657 = vmatprep.mubr.f32.mxu0 0.0
        %3658 = vmatmul.mubr.f32.gmra.mxu0 %v1930
        %v3659 = vpop.f32.mrf.mxu0
        %v3660 = vadd.f32 0.0, %v3659
        %v3661 = vpop.f32.mrf.mxu0
        %3662 = vmatprep.mubr.f32.mxu0 0.0
        %3663 = vmatmul.mubr.f32.gmra.mxu0 %v1932
        %v3664 = vpop.f32.mrf.mxu0
        %v3665 = vadd.f32 0.0, %v3664
        %v3666 = vpop.f32.mrf.mxu0
        %3667 = vmatprep.mubr.f32.mxu0 0.0
        %3668 = vmatmul.mubr.f32.gmra.mxu0 %v1934
        %v3669 = vpop.f32.mrf.mxu0
        %v3670 = vadd.f32 0.0, %v3669
        %v3671 = vpop.f32.mrf.mxu0
        %3672 = vmatprep.mubr.f32.mxu0 0.0
        %3673 = vmatmul.mubr.f32.gmra.mxu0 %v3478
        %v3674 = vpop.f32.mrf.mxu0
        %v3675 = vadd.f32 0.0, %v3674
        %v3676 = vpop.f32.mrf.mxu0
        %3677 = vmatprep.mubr.f32.mxu0 0.0
        %3678 = vmatmul.mubr.f32.gmra.mxu0 %v1938
        %v3679 = vpop.f32.mrf.mxu0
        %v3680 = vadd.f32 0.0, %v3679
        %v3681 = vpop.f32.mrf.mxu0
        %3682 = vmatprep.mubr.f32.mxu0 0.0
        %3683 = vmatmul.mubr.f32.gmra.mxu0 %v1940
        %v3684 = vpop.f32.mrf.mxu0
        %v3685 = vadd.f32 0.0, %v3684
        %v3686 = vpop.f32.mrf.mxu0
        %3687 = vmatprep.mubr.f32.mxu0 0.0
        %3688 = vmatmul.mubr.f32.gmra.mxu0 %v1942
        %v3689 = vpop.f32.mrf.mxu0
        %v3690 = vadd.f32 0.0, %v3689
        %v3691 = vpop.f32.mrf.mxu0
        %3692 = vmatprep.mubr.f32.mxu0 0.0
        %3693 = vmatmul.mubr.f32.gmra.mxu0 %v1944
        %v3694 = vpop.f32.mrf.mxu0
        %v3695 = vadd.f32 0.0, %v3694
        %v3696 = vpop.f32.mrf.mxu0
        %3697 = vmatprep.mubr.f32.mxu0 0.0
        %3698 = vmatmul.mubr.f32.gmra.mxu0 %v1946
        %v3699 = vpop.f32.mrf.mxu0
        %v3700 = vadd.f32 0.0, %v3699
        %v3701 = vpop.f32.mrf.mxu0
        %3702 = vmatprep.mubr.f32.mxu0 0.0
        %3703 = vmatmul.mubr.f32.gmra.mxu0 %v1948
        %v3704 = vpop.f32.mrf.mxu0
        %v3705 = vadd.f32 0.0, %v3704
        %v3706 = vpop.f32.mrf.mxu0
        %3707 = vmatprep.mubr.f32.mxu0 0.0
        %3708 = vmatmul.mubr.f32.gmra.mxu0 %v1950
        %v3709 = vpop.f32.mrf.mxu0
        %v3710 = vadd.f32 0.0, %v3709
        %v3711 = vpop.f32.mrf.mxu0
        %3712 = vmatprep.mubr.f32.mxu0 0.0
        %3713 = vmatmul.mubr.f32.gmra.mxu0 %v3480
        %v3714 = vpop.f32.mrf.mxu0
        %v3715 = vadd.f32 0.0, %v3714
        %v3716 = vpop.f32.mrf.mxu0
        %3717 = vmatprep.mubr.f32.mxu0 0.0
        %3718 = vmatmul.mubr.f32.gmra.mxu0 %v1954
        %v3719 = vpop.f32.mrf.mxu0
        %v3720 = vadd.f32 0.0, %v3719
        %v3721 = vpop.f32.mrf.mxu0
        %3722 = vmatprep.mubr.f32.mxu0 0.0
        %3723 = vmatmul.mubr.f32.gmra.mxu0 %v1956
        %v3724 = vpop.f32.mrf.mxu0
        %v3725 = vadd.f32 0.0, %v3724
        %v3726 = vpop.f32.mrf.mxu0
        %3727 = vmatprep.mubr.f32.mxu0 0.0
        %3728 = vmatmul.mubr.f32.gmra.mxu0 %v1958
        %v3729 = vpop.f32.mrf.mxu0
        %v3730 = vadd.f32 0.0, %v3729
        %v3731 = vpop.f32.mrf.mxu0
        %3732 = vmatprep.mubr.f32.mxu0 0.0
        %3733 = vmatmul.mubr.f32.gmra.mxu0 %v1960
        %v3734 = vpop.f32.mrf.mxu0
        %v3735 = vadd.f32 0.0, %v3734
        %v3736 = vpop.f32.mrf.mxu0
        %3737 = vmatprep.mubr.f32.mxu0 0.0
        %3738 = vmatmul.mubr.f32.gmra.mxu0 %v1962
        %v3739 = vpop.f32.mrf.mxu0
        %v3740 = vadd.f32 0.0, %v3739
        %v3741 = vpop.f32.mrf.mxu0
        %3742 = vmatprep.mubr.f32.mxu0 0.0
        %3743 = vmatmul.mubr.f32.gmra.mxu0 %v1964
        %v3744 = vpop.f32.mrf.mxu0
        %v3745 = vadd.f32 0.0, %v3744
        %v3746 = vpop.f32.mrf.mxu0
        %3747 = vmatprep.mubr.f32.mxu0 0.0
        %3748 = vmatmul.mubr.f32.gmra.mxu0 %v1966
        %v3749 = vpop.f32.mrf.mxu0
        %v3750 = vadd.f32 0.0, %v3749
        %v3751 = vpop.f32.mrf.mxu0
        %3752 = vmatprep.mubr.f32.mxu0 0.0
        %3753 = vmatmul.mubr.f32.gmra.mxu0 %v3482
        %v3754 = vpop.f32.mrf.mxu0
        %v3755 = vadd.f32 0.0, %v3754
        %v3756 = vpop.f32.mrf.mxu0
        %3757 = vmatprep.mubr.f32.mxu0 0.0
        %3758 = vmatmul.mubr.f32.gmra.mxu0 %v1970
        %v3759 = vpop.f32.mrf.mxu0
        %v3760 = vadd.f32 0.0, %v3759
        %v3761 = vpop.f32.mrf.mxu0
        %3762 = vmatprep.mubr.f32.mxu0 0.0
        %3763 = vmatmul.mubr.f32.gmra.mxu0 %v1972
        %v3764 = vpop.f32.mrf.mxu0
        %v3765 = vadd.f32 0.0, %v3764
        %v3766 = vpop.f32.mrf.mxu0
        %3767 = vmatprep.mubr.f32.mxu0 0.0
        %3768 = vmatmul.mubr.f32.gmra.mxu0 %v1974
        %v3769 = vpop.f32.mrf.mxu0
        %v3770 = vadd.f32 0.0, %v3769
        %v3771 = vpop.f32.mrf.mxu0
        %3772 = vmatprep.mubr.f32.mxu0 0.0
        %3773 = vmatmul.mubr.f32.gmra.mxu0 %v1976
        %v3774 = vpop.f32.mrf.mxu0
        %v3775 = vadd.f32 0.0, %v3774
        %v3776 = vpop.f32.mrf.mxu0
        %3777 = vmatprep.mubr.f32.mxu0 0.0
        %3778 = vmatmul.mubr.f32.gmra.mxu0 %v1978
        %v3779 = vpop.f32.mrf.mxu0
        %v3780 = vadd.f32 0.0, %v3779
        %v3781 = vpop.f32.mrf.mxu0
        %3782 = vmatprep.mubr.f32.mxu0 0.0
        %3783 = vmatmul.mubr.f32.gmra.mxu0 %v1980
        %v3784 = vpop.f32.mrf.mxu0
        %v3785 = vadd.f32 0.0, %v3784
        %v3786 = vpop.f32.mrf.mxu0
        %3787 = vmatprep.mubr.f32.mxu0 0.0
        %3788 = vmatmul.mubr.f32.gmra.mxu0 %v1982
        %v3789 = vpop.f32.mrf.mxu0
        %v3790 = vadd.f32 0.0, %v3789
        %v3791 = vpop.f32.mrf.mxu0
        %3792 = vmatprep.mubr.f32.mxu0 0.0
        %3793 = vmatmul.mubr.f32.gmra.mxu0 %v3484
        %v3794 = vpop.f32.mrf.mxu0
        %v3795 = vadd.f32 0.0, %v3794
        %v3796 = vpop.f32.mrf.mxu0
        %3797 = vmatprep.mubr.f32.mxu0 0.0
        %3798 = vmatmul.mubr.f32.gmra.mxu0 %v1986
        %v3799 = vpop.f32.mrf.mxu0
        %v3800 = vadd.f32 0.0, %v3799
        %v3801 = vpop.f32.mrf.mxu0
        %3802 = vmatprep.mubr.f32.mxu0 0.0
        %3803 = vmatmul.mubr.f32.gmra.mxu0 %v1988
        %v3804 = vpop.f32.mrf.mxu0
        %v3805 = vadd.f32 0.0, %v3804
        %v3806 = vpop.f32.mrf.mxu0
        %3807 = vmatprep.mubr.f32.mxu0 0.0
        %3808 = vmatmul.mubr.f32.gmra.mxu0 %v1990
        %v3809 = vpop.f32.mrf.mxu0
        %v3810 = vadd.f32 0.0, %v3809
        %v3811 = vpop.f32.mrf.mxu0
        %3812 = vmatprep.mubr.f32.mxu0 0.0
        %3813 = vmatmul.mubr.f32.gmra.mxu0 %v1992
        %v3814 = vpop.f32.mrf.mxu0
        %v3815 = vadd.f32 0.0, %v3814
        %v3816 = vpop.f32.mrf.mxu0
        %3817 = vmatprep.mubr.f32.mxu0 0.0
        %3818 = vmatmul.mubr.f32.gmra.mxu0 %v1994
        %v3819 = vpop.f32.mrf.mxu0
        %v3820 = vadd.f32 0.0, %v3819
        %v3821 = vpop.f32.mrf.mxu0
        %3822 = vmatprep.mubr.f32.mxu0 0.0
        %3823 = vmatmul.mubr.f32.gmra.mxu0 %v1996
        %v3824 = vpop.f32.mrf.mxu0
        %v3825 = vadd.f32 0.0, %v3824
        %v3826 = vpop.f32.mrf.mxu0
        %3827 = vmatprep.mubr.f32.mxu0 0.0
        %3828 = vmatmul.mubr.f32.gmra.mxu0 %v1998
        %v3829 = vpop.f32.mrf.mxu0
        %v3830 = vadd.f32 0.0, %v3829
        %v3831 = vpop.f32.mrf.mxu0
        %3832 = vmatprep.mubr.f32.mxu0 0.0
        %3833 = vmatmul.mubr.f32.gmra.mxu0 %v3486
        %v3834 = vpop.f32.mrf.mxu0
        %v3835 = vadd.f32 0.0, %v3834
        %v3836 = vpop.f32.mrf.mxu0
        %3837 = vmatprep.mubr.f32.mxu0 0.0
        %3838 = vmatmul.mubr.f32.gmra.mxu0 %v2002
        %v3839 = vpop.f32.mrf.mxu0
        %v3840 = vadd.f32 0.0, %v3839
        %v3841 = vpop.f32.mrf.mxu0
        %3842 = vmatprep.mubr.f32.mxu0 0.0
        %3843 = vmatmul.mubr.f32.gmra.mxu0 %v2004
        %v3844 = vpop.f32.mrf.mxu0
        %v3845 = vadd.f32 0.0, %v3844
        %v3846 = vpop.f32.mrf.mxu0
        %3847 = vmatprep.mubr.f32.mxu0 0.0
        %3848 = vmatmul.mubr.f32.gmra.mxu0 %v2006
        %v3849 = vpop.f32.mrf.mxu0
        %v3850 = vadd.f32 0.0, %v3849
        %v3851 = vpop.f32.mrf.mxu0
        %3852 = vmatprep.mubr.f32.mxu0 0.0
        %3853 = vmatmul.mubr.f32.gmra.mxu0 %v2008
        %v3854 = vpop.f32.mrf.mxu0
        %v3855 = vadd.f32 0.0, %v3854
        %v3856 = vpop.f32.mrf.mxu0
        %3857 = vmatprep.mubr.f32.mxu0 0.0
        %3858 = vmatmul.mubr.f32.gmra.mxu0 %v2010
        %v3859 = vpop.f32.mrf.mxu0
        %v3860 = vadd.f32 0.0, %v3859
        %v3861 = vpop.f32.mrf.mxu0
        %3862 = vmatprep.mubr.f32.mxu0 0.0
        %3863 = vmatmul.mubr.f32.gmra.mxu0 %v2012
        %v3864 = vpop.f32.mrf.mxu0
        %v3865 = vadd.f32 0.0, %v3864
        %v3866 = vpop.f32.mrf.mxu0
        %3867 = vmatprep.mubr.f32.mxu0 0.0
        %3868 = vmatmul.mubr.f32.gmra.mxu0 %v2014
        %v3869 = vpop.f32.mrf.mxu0
        %v3870 = vadd.f32 0.0, %v3869
        %v3871 = vpop.f32.mrf.mxu0
        %3872 = vmatprep.mubr.f32.mxu0 0.0
        %3873 = vmatmul.mubr.f32.gmra.mxu0 %v3488
        %v3874 = vpop.f32.mrf.mxu0
        %v3875 = vadd.f32 0.0, %v3874
        %v3876 = vpop.f32.mrf.mxu0
        %3877 = vdwg.mxu0
        %v3878 = vadd.f32 %v3384, %v3560
        %v3879 = vadd.f32 %v3385, %v3565
        %v3880 = vadd.f32 %v3386, %v3570
        %v3881 = vadd.f32 %v3387, %v3575
        %v3882 = vadd.f32 %v3388, %v3580
        %v3883 = vadd.f32 %v3389, %v3585
        %v3884 = vadd.f32 %v3390, %v3590
        %v3885 = vadd.f32 %v3391, %v3595
        %v3886 = vadd.f32 %v3392, %v3600
        %v3887 = vadd.f32 %v3393, %v3605
        %v3888 = vadd.f32 %v3394, %v3610
        %v3889 = vadd.f32 %v3395, %v3615
        %v3890 = vadd.f32 %v3396, %v3620
        %v3891 = vadd.f32 %v3397, %v3625
        %v3892 = vadd.f32 %v3398, %v3630
        %v3893 = vadd.f32 %v3399, %v3635
        %v3894 = vadd.f32 %v3400, %v3640
        %v3895 = vadd.f32 %v3401, %v3645
        %v3896 = vadd.f32 %v3402, %v3650
        %v3897 = vadd.f32 %v3403, %v3655
        %v3898 = vadd.f32 %v3404, %v3660
        %v3899 = vadd.f32 %v3405, %v3665
        %v3900 = vadd.f32 %v3406, %v3670
        %v3901 = vadd.f32 %v3407, %v3675
        %v3902 = vadd.f32 %v3408, %v3680
        %v3903 = vadd.f32 %v3409, %v3685
        %v3904 = vadd.f32 %v3410, %v3690
        %v3905 = vadd.f32 %v3411, %v3695
        %v3906 = vadd.f32 %v3412, %v3700
        %v3907 = vadd.f32 %v3413, %v3705
        %v3908 = vadd.f32 %v3414, %v3710
        %v3909 = vadd.f32 %v3415, %v3715
        %v3910 = vadd.f32 %v3416, %v3720
        %v3911 = vadd.f32 %v3417, %v3725
        %v3912 = vadd.f32 %v3418, %v3730
        %v3913 = vadd.f32 %v3419, %v3735
        %v3914 = vadd.f32 %v3420, %v3740
        %v3915 = vadd.f32 %v3421, %v3745
        %v3916 = vadd.f32 %v3422, %v3750
        %v3917 = vadd.f32 %v3423, %v3755
        %v3918 = vadd.f32 %v3424, %v3760
        %v3919 = vadd.f32 %v3425, %v3765
        %v3920 = vadd.f32 %v3426, %v3770
        %v3921 = vadd.f32 %v3427, %v3775
        %v3922 = vadd.f32 %v3428, %v3780
        %v3923 = vadd.f32 %v3429, %v3785
        %v3924 = vadd.f32 %v3430, %v3790
        %v3925 = vadd.f32 %v3431, %v3795
        %v3926 = vadd.f32 %v3432, %v3800
        %v3927 = vadd.f32 %v3433, %v3805
        %v3928 = vadd.f32 %v3434, %v3810
        %v3929 = vadd.f32 %v3435, %v3815
        %v3930 = vadd.f32 %v3436, %v3820
        %v3931 = vadd.f32 %v3437, %v3825
        %v3932 = vadd.f32 %v3438, %v3830
        %v3933 = vadd.f32 %v3439, %v3835
        %v3934 = vadd.f32 %v3440, %v3840
        %v3935 = vadd.f32 %v3441, %v3845
        %v3936 = vadd.f32 %v3442, %v3850
        %v3937 = vadd.f32 %v3443, %v3855
        %v3938 = vadd.f32 %v3444, %v3860
        %v3939 = vadd.f32 %v3445, %v3865
        %v3940 = vadd.f32 %v3446, %v3870
        %v3941 = vadd.f32 %v3447, %v3875
        %s3942 = scalar_lea.vmem %s1, 24
        %v3943 = vld [vmem:[%s3942] sm:$0xf]
        %v3945 = vsel %vm659, %v193, 0
        %v3948 = vsel %vm659, %v213, 0
        %v3951 = vsel %vm659, %v233, 0
        %v3954 = vsel %vm659, %v253, 0
        %v3957 = vsel %vm659, %v273, 0
        %v3960 = vsel %vm659, %v293, 0
        %v3963 = vsel %vm659, %v313, 0
        %v3966 = vsel %vm659, %v333, 0
        %v3969 = vsel %vm788, %v3943, 0
        %3971 = vmatprep.subr.mxu0 0.0
        %3972 = vmatpush1.msra.mxu0 0.0
        %3973 = vmatprep.subr.mxu0 0.0
        %3974 = vmatpush1.msra.mxu0 0.0
        %3975 = vmatprep.subr.mxu0 0.0
        %3976 = vmatpush1.msra.mxu0 0.0
        %3977 = vmatprep.subr.mxu0 0.0
        %3978 = vmatpush1.msra.mxu0 0.0
        %3979 = vmatprep.subr.mxu0 0.0
        %3980 = vmatpush1.msra.mxu0 0.0
        %3981 = vmatprep.subr.mxu0 0.0
        %3982 = vmatpush1.msra.mxu0 0.0
        %3983 = vmatprep.subr.mxu0 0.0
        %3984 = vmatpush1.msra.mxu0 0.0
        %3985 = vmatprep.subr.mxu0 0.0
        %3986 = vmatpush1.msra.mxu0 0.0
        %3987 = vmatprep.subr.mxu0 0.0
        %3988 = vmatpush1.msra.mxu0 0.0
        %3989 = vmatprep.subr.mxu0 0.0
        %3990 = vmatpush1.msra.mxu0 0.0
        %3991 = vmatprep.subr.mxu0 0.0
        %3992 = vmatpush1.msra.mxu0 0.0
        %3993 = vmatprep.subr.mxu0 0.0
        %3994 = vmatpush1.msra.mxu0 0.0
        %3995 = vmatprep.subr.mxu0 0.0
        %3996 = vmatpush1.msra.mxu0 0.0
        %3997 = vmatprep.subr.mxu0 0.0
        %3998 = vmatpush1.msra.mxu0 0.0
        %3999 = vmatprep.subr.mxu0 0.0
        %4000 = vmatpush1.msra.mxu0 0.0
        %4001 = vmatprep.subr.mxu0 0.0
        %4002 = vmatpush1.msra.mxu0 %v3969
        %4003 = vmatprep.subr.mxu0 0.0
        %4004 = vmatpush2.msra.mxu0 0.0
        %4005 = vmatprep.subr.mxu0 0.0
        %4006 = vmatpush2.msra.mxu0 0.0
        %4007 = vmatprep.subr.mxu0 0.0
        %4008 = vmatpush2.msra.mxu0 0.0
        %4009 = vmatprep.subr.mxu0 0.0
        %4010 = vmatpush2.msra.mxu0 0.0
        %4011 = vmatprep.subr.mxu0 0.0
        %4012 = vmatpush2.msra.mxu0 0.0
        %4013 = vmatprep.subr.mxu0 0.0
        %4014 = vmatpush2.msra.mxu0 0.0
        %4015 = vmatprep.subr.mxu0 0.0
        %4016 = vmatpush2.msra.mxu0 0.0
        %4017 = vmatprep.subr.mxu0 0.0
        %4018 = vmatpush2.msra.mxu0 0.0
        %4019 = vmatprep.subr.mxu0 0.0
        %4020 = vmatpush2.msra.mxu0 0.0
        %4021 = vmatprep.subr.mxu0 0.0
        %4022 = vmatpush2.msra.mxu0 0.0
        %4023 = vmatprep.subr.mxu0 0.0
        %4024 = vmatpush2.msra.mxu0 0.0
        %4025 = vmatprep.subr.mxu0 0.0
        %4026 = vmatpush2.msra.mxu0 0.0
        %4027 = vmatprep.subr.mxu0 0.0
        %4028 = vmatpush2.msra.mxu0 0.0
        %4029 = vmatprep.subr.mxu0 0.0
        %4030 = vmatpush2.msra.mxu0 0.0
        %4031 = vmatprep.subr.mxu0 0.0
        %4032 = vmatpush2.msra.mxu0 0.0
        %4033 = vmatprep.subr.mxu0 0.0
        %4034 = vmatpush2.msra.mxu0 0.0
        %4035 = vmatprep.mubr.f32.mxu0 0.0
        %4036 = vmatmul.mubr.f32.gmra.mxu0 %v1181
        %v4037 = vpop.f32.mrf.mxu0
        %v4038 = vadd.f32 0.0, %v4037
        %v4039 = vpop.f32.mrf.mxu0
        %4040 = vmatprep.mubr.f32.mxu0 0.0
        %4041 = vmatmul.mubr.f32.gmra.mxu0 %v1183
        %v4042 = vpop.f32.mrf.mxu0
        %v4043 = vadd.f32 0.0, %v4042
        %v4044 = vpop.f32.mrf.mxu0
        %4045 = vmatprep.mubr.f32.mxu0 0.0
        %4046 = vmatmul.mubr.f32.gmra.mxu0 %v1185
        %v4047 = vpop.f32.mrf.mxu0
        %v4048 = vadd.f32 0.0, %v4047
        %v4049 = vpop.f32.mrf.mxu0
        %4050 = vmatprep.mubr.f32.mxu0 0.0
        %4051 = vmatmul.mubr.f32.gmra.mxu0 %v1187
        %v4052 = vpop.f32.mrf.mxu0
        %v4053 = vadd.f32 0.0, %v4052
        %v4054 = vpop.f32.mrf.mxu0
        %4055 = vmatprep.mubr.f32.mxu0 0.0
        %4056 = vmatmul.mubr.f32.gmra.mxu0 %v1189
        %v4057 = vpop.f32.mrf.mxu0
        %v4058 = vadd.f32 0.0, %v4057
        %v4059 = vpop.f32.mrf.mxu0
        %4060 = vmatprep.mubr.f32.mxu0 0.0
        %4061 = vmatmul.mubr.f32.gmra.mxu0 %v1191
        %v4062 = vpop.f32.mrf.mxu0
        %v4063 = vadd.f32 0.0, %v4062
        %v4064 = vpop.f32.mrf.mxu0
        %4065 = vmatprep.mubr.f32.mxu0 0.0
        %4066 = vmatmul.mubr.f32.gmra.mxu0 %v2471
        %v4067 = vpop.f32.mrf.mxu0
        %v4068 = vadd.f32 0.0, %v4067
        %v4069 = vpop.f32.mrf.mxu0
        %4070 = vmatprep.mubr.f32.mxu0 0.0
        %4071 = vmatmul.mubr.f32.gmra.mxu0 %v3945
        %v4072 = vpop.f32.mrf.mxu0
        %v4073 = vadd.f32 0.0, %v4072
        %v4074 = vpop.f32.mrf.mxu0
        %4075 = vmatprep.mubr.f32.mxu0 0.0
        %4076 = vmatmul.mubr.f32.gmra.mxu0 %v1197
        %v4077 = vpop.f32.mrf.mxu0
        %v4078 = vadd.f32 0.0, %v4077
        %v4079 = vpop.f32.mrf.mxu0
        %4080 = vmatprep.mubr.f32.mxu0 0.0
        %4081 = vmatmul.mubr.f32.gmra.mxu0 %v1199
        %v4082 = vpop.f32.mrf.mxu0
        %v4083 = vadd.f32 0.0, %v4082
        %v4084 = vpop.f32.mrf.mxu0
        %4085 = vmatprep.mubr.f32.mxu0 0.0
        %4086 = vmatmul.mubr.f32.gmra.mxu0 %v1201
        %v4087 = vpop.f32.mrf.mxu0
        %v4088 = vadd.f32 0.0, %v4087
        %v4089 = vpop.f32.mrf.mxu0
        %4090 = vmatprep.mubr.f32.mxu0 0.0
        %4091 = vmatmul.mubr.f32.gmra.mxu0 %v1203
        %v4092 = vpop.f32.mrf.mxu0
        %v4093 = vadd.f32 0.0, %v4092
        %v4094 = vpop.f32.mrf.mxu0
        %4095 = vmatprep.mubr.f32.mxu0 0.0
        %4096 = vmatmul.mubr.f32.gmra.mxu0 %v1205
        %v4097 = vpop.f32.mrf.mxu0
        %v4098 = vadd.f32 0.0, %v4097
        %v4099 = vpop.f32.mrf.mxu0
        %4100 = vmatprep.mubr.f32.mxu0 0.0
        %4101 = vmatmul.mubr.f32.gmra.mxu0 %v1207
        %v4102 = vpop.f32.mrf.mxu0
        %v4103 = vadd.f32 0.0, %v4102
        %v4104 = vpop.f32.mrf.mxu0
        %4105 = vmatprep.mubr.f32.mxu0 0.0
        %4106 = vmatmul.mubr.f32.gmra.mxu0 %v2474
        %v4107 = vpop.f32.mrf.mxu0
        %v4108 = vadd.f32 0.0, %v4107
        %v4109 = vpop.f32.mrf.mxu0
        %4110 = vmatprep.mubr.f32.mxu0 0.0
        %4111 = vmatmul.mubr.f32.gmra.mxu0 %v3948
        %v4112 = vpop.f32.mrf.mxu0
        %v4113 = vadd.f32 0.0, %v4112
        %v4114 = vpop.f32.mrf.mxu0
        %4115 = vmatprep.mubr.f32.mxu0 0.0
        %4116 = vmatmul.mubr.f32.gmra.mxu0 %v1213
        %v4117 = vpop.f32.mrf.mxu0
        %v4118 = vadd.f32 0.0, %v4117
        %v4119 = vpop.f32.mrf.mxu0
        %4120 = vmatprep.mubr.f32.mxu0 0.0
        %4121 = vmatmul.mubr.f32.gmra.mxu0 %v1215
        %v4122 = vpop.f32.mrf.mxu0
        %v4123 = vadd.f32 0.0, %v4122
        %v4124 = vpop.f32.mrf.mxu0
        %4125 = vmatprep.mubr.f32.mxu0 0.0
        %4126 = vmatmul.mubr.f32.gmra.mxu0 %v1217
        %v4127 = vpop.f32.mrf.mxu0
        %v4128 = vadd.f32 0.0, %v4127
        %v4129 = vpop.f32.mrf.mxu0
        %4130 = vmatprep.mubr.f32.mxu0 0.0
        %4131 = vmatmul.mubr.f32.gmra.mxu0 %v1219
        %v4132 = vpop.f32.mrf.mxu0
        %v4133 = vadd.f32 0.0, %v4132
        %v4134 = vpop.f32.mrf.mxu0
        %4135 = vmatprep.mubr.f32.mxu0 0.0
        %4136 = vmatmul.mubr.f32.gmra.mxu0 %v1221
        %v4137 = vpop.f32.mrf.mxu0
        %v4138 = vadd.f32 0.0, %v4137
        %v4139 = vpop.f32.mrf.mxu0
        %4140 = vmatprep.mubr.f32.mxu0 0.0
        %4141 = vmatmul.mubr.f32.gmra.mxu0 %v1223
        %v4142 = vpop.f32.mrf.mxu0
        %v4143 = vadd.f32 0.0, %v4142
        %v4144 = vpop.f32.mrf.mxu0
        %4145 = vmatprep.mubr.f32.mxu0 0.0
        %4146 = vmatmul.mubr.f32.gmra.mxu0 %v2477
        %v4147 = vpop.f32.mrf.mxu0
        %v4148 = vadd.f32 0.0, %v4147
        %v4149 = vpop.f32.mrf.mxu0
        %4150 = vmatprep.mubr.f32.mxu0 0.0
        %4151 = vmatmul.mubr.f32.gmra.mxu0 %v3951
        %v4152 = vpop.f32.mrf.mxu0
        %v4153 = vadd.f32 0.0, %v4152
        %v4154 = vpop.f32.mrf.mxu0
        %4155 = vmatprep.mubr.f32.mxu0 0.0
        %4156 = vmatmul.mubr.f32.gmra.mxu0 %v1229
        %v4157 = vpop.f32.mrf.mxu0
        %v4158 = vadd.f32 0.0, %v4157
        %v4159 = vpop.f32.mrf.mxu0
        %4160 = vmatprep.mubr.f32.mxu0 0.0
        %4161 = vmatmul.mubr.f32.gmra.mxu0 %v1231
        %v4162 = vpop.f32.mrf.mxu0
        %v4163 = vadd.f32 0.0, %v4162
        %v4164 = vpop.f32.mrf.mxu0
        %4165 = vmatprep.mubr.f32.mxu0 0.0
        %4166 = vmatmul.mubr.f32.gmra.mxu0 %v1233
        %v4167 = vpop.f32.mrf.mxu0
        %v4168 = vadd.f32 0.0, %v4167
        %v4169 = vpop.f32.mrf.mxu0
        %4170 = vmatprep.mubr.f32.mxu0 0.0
        %4171 = vmatmul.mubr.f32.gmra.mxu0 %v1235
        %v4172 = vpop.f32.mrf.mxu0
        %v4173 = vadd.f32 0.0, %v4172
        %v4174 = vpop.f32.mrf.mxu0
        %4175 = vmatprep.mubr.f32.mxu0 0.0
        %4176 = vmatmul.mubr.f32.gmra.mxu0 %v1237
        %v4177 = vpop.f32.mrf.mxu0
        %v4178 = vadd.f32 0.0, %v4177
        %v4179 = vpop.f32.mrf.mxu0
        %4180 = vmatprep.mubr.f32.mxu0 0.0
        %4181 = vmatmul.mubr.f32.gmra.mxu0 %v1239
        %v4182 = vpop.f32.mrf.mxu0
        %v4183 = vadd.f32 0.0, %v4182
        %v4184 = vpop.f32.mrf.mxu0
        %4185 = vmatprep.mubr.f32.mxu0 0.0
        %4186 = vmatmul.mubr.f32.gmra.mxu0 %v2480
        %v4187 = vpop.f32.mrf.mxu0
        %v4188 = vadd.f32 0.0, %v4187
        %v4189 = vpop.f32.mrf.mxu0
        %4190 = vmatprep.mubr.f32.mxu0 0.0
        %4191 = vmatmul.mubr.f32.gmra.mxu0 %v3954
        %v4192 = vpop.f32.mrf.mxu0
        %v4193 = vadd.f32 0.0, %v4192
        %v4194 = vpop.f32.mrf.mxu0
        %4195 = vmatprep.mubr.f32.mxu0 0.0
        %4196 = vmatmul.mubr.f32.gmra.mxu0 %v1245
        %v4197 = vpop.f32.mrf.mxu0
        %v4198 = vadd.f32 0.0, %v4197
        %v4199 = vpop.f32.mrf.mxu0
        %4200 = vmatprep.mubr.f32.mxu0 0.0
        %4201 = vmatmul.mubr.f32.gmra.mxu0 %v1247
        %v4202 = vpop.f32.mrf.mxu0
        %v4203 = vadd.f32 0.0, %v4202
        %v4204 = vpop.f32.mrf.mxu0
        %4205 = vmatprep.mubr.f32.mxu0 0.0
        %4206 = vmatmul.mubr.f32.gmra.mxu0 %v1249
        %v4207 = vpop.f32.mrf.mxu0
        %v4208 = vadd.f32 0.0, %v4207
        %v4209 = vpop.f32.mrf.mxu0
        %4210 = vmatprep.mubr.f32.mxu0 0.0
        %4211 = vmatmul.mubr.f32.gmra.mxu0 %v1251
        %v4212 = vpop.f32.mrf.mxu0
        %v4213 = vadd.f32 0.0, %v4212
        %v4214 = vpop.f32.mrf.mxu0
        %4215 = vmatprep.mubr.f32.mxu0 0.0
        %4216 = vmatmul.mubr.f32.gmra.mxu0 %v1253
        %v4217 = vpop.f32.mrf.mxu0
        %v4218 = vadd.f32 0.0, %v4217
        %v4219 = vpop.f32.mrf.mxu0
        %4220 = vmatprep.mubr.f32.mxu0 0.0
        %4221 = vmatmul.mubr.f32.gmra.mxu0 %v1255
        %v4222 = vpop.f32.mrf.mxu0
        %v4223 = vadd.f32 0.0, %v4222
        %v4224 = vpop.f32.mrf.mxu0
        %4225 = vmatprep.mubr.f32.mxu0 0.0
        %4226 = vmatmul.mubr.f32.gmra.mxu0 %v2483
        %v4227 = vpop.f32.mrf.mxu0
        %v4228 = vadd.f32 0.0, %v4227
        %v4229 = vpop.f32.mrf.mxu0
        %4230 = vmatprep.mubr.f32.mxu0 0.0
        %4231 = vmatmul.mubr.f32.gmra.mxu0 %v3957
        %v4232 = vpop.f32.mrf.mxu0
        %v4233 = vadd.f32 0.0, %v4232
        %v4234 = vpop.f32.mrf.mxu0
        %4235 = vmatprep.mubr.f32.mxu0 0.0
        %4236 = vmatmul.mubr.f32.gmra.mxu0 %v1261
        %v4237 = vpop.f32.mrf.mxu0
        %v4238 = vadd.f32 0.0, %v4237
        %v4239 = vpop.f32.mrf.mxu0
        %4240 = vmatprep.mubr.f32.mxu0 0.0
        %4241 = vmatmul.mubr.f32.gmra.mxu0 %v1263
        %v4242 = vpop.f32.mrf.mxu0
        %v4243 = vadd.f32 0.0, %v4242
        %v4244 = vpop.f32.mrf.mxu0
        %4245 = vmatprep.mubr.f32.mxu0 0.0
        %4246 = vmatmul.mubr.f32.gmra.mxu0 %v1265
        %v4247 = vpop.f32.mrf.mxu0
        %v4248 = vadd.f32 0.0, %v4247
        %v4249 = vpop.f32.mrf.mxu0
        %4250 = vmatprep.mubr.f32.mxu0 0.0
        %4251 = vmatmul.mubr.f32.gmra.mxu0 %v1267
        %v4252 = vpop.f32.mrf.mxu0
        %v4253 = vadd.f32 0.0, %v4252
        %v4254 = vpop.f32.mrf.mxu0
        %4255 = vmatprep.mubr.f32.mxu0 0.0
        %4256 = vmatmul.mubr.f32.gmra.mxu0 %v1269
        %v4257 = vpop.f32.mrf.mxu0
        %v4258 = vadd.f32 0.0, %v4257
        %v4259 = vpop.f32.mrf.mxu0
        %4260 = vmatprep.mubr.f32.mxu0 0.0
        %4261 = vmatmul.mubr.f32.gmra.mxu0 %v1271
        %v4262 = vpop.f32.mrf.mxu0
        %v4263 = vadd.f32 0.0, %v4262
        %v4264 = vpop.f32.mrf.mxu0
        %4265 = vmatprep.mubr.f32.mxu0 0.0
        %4266 = vmatmul.mubr.f32.gmra.mxu0 %v2486
        %v4267 = vpop.f32.mrf.mxu0
        %v4268 = vadd.f32 0.0, %v4267
        %v4269 = vpop.f32.mrf.mxu0
        %4270 = vmatprep.mubr.f32.mxu0 0.0
        %4271 = vmatmul.mubr.f32.gmra.mxu0 %v3960
        %v4272 = vpop.f32.mrf.mxu0
        %v4273 = vadd.f32 0.0, %v4272
        %v4274 = vpop.f32.mrf.mxu0
        %4275 = vmatprep.mubr.f32.mxu0 0.0
        %4276 = vmatmul.mubr.f32.gmra.mxu0 %v1277
        %v4277 = vpop.f32.mrf.mxu0
        %v4278 = vadd.f32 0.0, %v4277
        %v4279 = vpop.f32.mrf.mxu0
        %4280 = vmatprep.mubr.f32.mxu0 0.0
        %4281 = vmatmul.mubr.f32.gmra.mxu0 %v1279
        %v4282 = vpop.f32.mrf.mxu0
        %v4283 = vadd.f32 0.0, %v4282
        %v4284 = vpop.f32.mrf.mxu0
        %4285 = vmatprep.mubr.f32.mxu0 0.0
        %4286 = vmatmul.mubr.f32.gmra.mxu0 %v1281
        %v4287 = vpop.f32.mrf.mxu0
        %v4288 = vadd.f32 0.0, %v4287
        %v4289 = vpop.f32.mrf.mxu0
        %4290 = vmatprep.mubr.f32.mxu0 0.0
        %4291 = vmatmul.mubr.f32.gmra.mxu0 %v1283
        %v4292 = vpop.f32.mrf.mxu0
        %v4293 = vadd.f32 0.0, %v4292
        %v4294 = vpop.f32.mrf.mxu0
        %4295 = vmatprep.mubr.f32.mxu0 0.0
        %4296 = vmatmul.mubr.f32.gmra.mxu0 %v1285
        %v4297 = vpop.f32.mrf.mxu0
        %v4298 = vadd.f32 0.0, %v4297
        %v4299 = vpop.f32.mrf.mxu0
        %4300 = vmatprep.mubr.f32.mxu0 0.0
        %4301 = vmatmul.mubr.f32.gmra.mxu0 %v1287
        %v4302 = vpop.f32.mrf.mxu0
        %v4303 = vadd.f32 0.0, %v4302
        %v4304 = vpop.f32.mrf.mxu0
        %4305 = vmatprep.mubr.f32.mxu0 0.0
        %4306 = vmatmul.mubr.f32.gmra.mxu0 %v2489
        %v4307 = vpop.f32.mrf.mxu0
        %v4308 = vadd.f32 0.0, %v4307
        %v4309 = vpop.f32.mrf.mxu0
        %4310 = vmatprep.mubr.f32.mxu0 0.0
        %4311 = vmatmul.mubr.f32.gmra.mxu0 %v3963
        %v4312 = vpop.f32.mrf.mxu0
        %v4313 = vadd.f32 0.0, %v4312
        %v4314 = vpop.f32.mrf.mxu0
        %4315 = vmatprep.mubr.f32.mxu0 0.0
        %4316 = vmatmul.mubr.f32.gmra.mxu0 %v1293
        %v4317 = vpop.f32.mrf.mxu0
        %v4318 = vadd.f32 0.0, %v4317
        %v4319 = vpop.f32.mrf.mxu0
        %4320 = vmatprep.mubr.f32.mxu0 0.0
        %4321 = vmatmul.mubr.f32.gmra.mxu0 %v1295
        %v4322 = vpop.f32.mrf.mxu0
        %v4323 = vadd.f32 0.0, %v4322
        %v4324 = vpop.f32.mrf.mxu0
        %4325 = vmatprep.mubr.f32.mxu0 0.0
        %4326 = vmatmul.mubr.f32.gmra.mxu0 %v1297
        %v4327 = vpop.f32.mrf.mxu0
        %v4328 = vadd.f32 0.0, %v4327
        %v4329 = vpop.f32.mrf.mxu0
        %4330 = vmatprep.mubr.f32.mxu0 0.0
        %4331 = vmatmul.mubr.f32.gmra.mxu0 %v1299
        %v4332 = vpop.f32.mrf.mxu0
        %v4333 = vadd.f32 0.0, %v4332
        %v4334 = vpop.f32.mrf.mxu0
        %4335 = vmatprep.mubr.f32.mxu0 0.0
        %4336 = vmatmul.mubr.f32.gmra.mxu0 %v1301
        %v4337 = vpop.f32.mrf.mxu0
        %v4338 = vadd.f32 0.0, %v4337
        %v4339 = vpop.f32.mrf.mxu0
        %4340 = vmatprep.mubr.f32.mxu0 0.0
        %4341 = vmatmul.mubr.f32.gmra.mxu0 %v1303
        %v4342 = vpop.f32.mrf.mxu0
        %v4343 = vadd.f32 0.0, %v4342
        %v4344 = vpop.f32.mrf.mxu0
        %4345 = vmatprep.mubr.f32.mxu0 0.0
        %4346 = vmatmul.mubr.f32.gmra.mxu0 %v2492
        %v4347 = vpop.f32.mrf.mxu0
        %v4348 = vadd.f32 0.0, %v4347
        %v4349 = vpop.f32.mrf.mxu0
        %4350 = vmatprep.mubr.f32.mxu0 0.0
        %4351 = vmatmul.mubr.f32.gmra.mxu0 %v3966
        %v4352 = vpop.f32.mrf.mxu0
        %v4353 = vadd.f32 0.0, %v4352
        %v4354 = vpop.f32.mrf.mxu0
        %4355 = vdwg.mxu0
        %v4356 = vadd.f32 %v3878, %v4038
        %v4357 = vadd.f32 %v3879, %v4043
        %v4358 = vadd.f32 %v3880, %v4048
        %v4359 = vadd.f32 %v3881, %v4053
        %v4360 = vadd.f32 %v3882, %v4058
        %v4361 = vadd.f32 %v3883, %v4063
        %v4362 = vadd.f32 %v3884, %v4068
        %v4363 = vadd.f32 %v3885, %v4073
        %v4364 = vadd.f32 %v3886, %v4078
        %v4365 = vadd.f32 %v3887, %v4083
        %v4366 = vadd.f32 %v3888, %v4088
        %v4367 = vadd.f32 %v3889, %v4093
        %v4368 = vadd.f32 %v3890, %v4098
        %v4369 = vadd.f32 %v3891, %v4103
        %v4370 = vadd.f32 %v3892, %v4108
        %v4371 = vadd.f32 %v3893, %v4113
        %v4372 = vadd.f32 %v3894, %v4118
        %v4373 = vadd.f32 %v3895, %v4123
        %v4374 = vadd.f32 %v3896, %v4128
        %v4375 = vadd.f32 %v3897, %v4133
        %v4376 = vadd.f32 %v3898, %v4138
        %v4377 = vadd.f32 %v3899, %v4143
        %v4378 = vadd.f32 %v3900, %v4148
        %v4379 = vadd.f32 %v3901, %v4153
        %v4380 = vadd.f32 %v3902, %v4158
        %v4381 = vadd.f32 %v3903, %v4163
        %v4382 = vadd.f32 %v3904, %v4168
        %v4383 = vadd.f32 %v3905, %v4173
        %v4384 = vadd.f32 %v3906, %v4178
        %v4385 = vadd.f32 %v3907, %v4183
        %v4386 = vadd.f32 %v3908, %v4188
        %v4387 = vadd.f32 %v3909, %v4193
        %v4388 = vadd.f32 %v3910, %v4198
        %v4389 = vadd.f32 %v3911, %v4203
        %v4390 = vadd.f32 %v3912, %v4208
        %v4391 = vadd.f32 %v3913, %v4213
        %v4392 = vadd.f32 %v3914, %v4218
        %v4393 = vadd.f32 %v3915, %v4223
        %v4394 = vadd.f32 %v3916, %v4228
        %v4395 = vadd.f32 %v3917, %v4233
        %v4396 = vadd.f32 %v3918, %v4238
        %v4397 = vadd.f32 %v3919, %v4243
        %v4398 = vadd.f32 %v3920, %v4248
        %v4399 = vadd.f32 %v3921, %v4253
        %v4400 = vadd.f32 %v3922, %v4258
        %v4401 = vadd.f32 %v3923, %v4263
        %v4402 = vadd.f32 %v3924, %v4268
        %v4403 = vadd.f32 %v3925, %v4273
        %v4404 = vadd.f32 %v3926, %v4278
        %v4405 = vadd.f32 %v3927, %v4283
        %v4406 = vadd.f32 %v3928, %v4288
        %v4407 = vadd.f32 %v3929, %v4293
        %v4408 = vadd.f32 %v3930, %v4298
        %v4409 = vadd.f32 %v3931, %v4303
        %v4410 = vadd.f32 %v3932, %v4308
        %v4411 = vadd.f32 %v3933, %v4313
        %v4412 = vadd.f32 %v3934, %v4318
        %v4413 = vadd.f32 %v3935, %v4323
        %v4414 = vadd.f32 %v3936, %v4328
        %v4415 = vadd.f32 %v3937, %v4333
        %v4416 = vadd.f32 %v3938, %v4338
        %v4417 = vadd.f32 %v3939, %v4343
        %v4418 = vadd.f32 %v3940, %v4348
        %v4419 = vadd.f32 %v3941, %v4353
        %v4428 = vrot.slane %v193, 1
        %v4429 = vrot.slane %v194, 1
        %v4430 = vsel %vm464, %v4428, %v4429
        %v4431 = vrot.slane %v213, 1
        %v4432 = vrot.slane %v214, 1
        %v4433 = vsel %vm464, %v4431, %v4432
        %v4434 = vrot.slane %v233, 1
        %v4435 = vrot.slane %v234, 1
        %v4436 = vsel %vm464, %v4434, %v4435
        %v4437 = vrot.slane %v253, 1
        %v4438 = vrot.slane %v254, 1
        %v4439 = vsel %vm464, %v4437, %v4438
        %v4440 = vrot.slane %v273, 1
        %v4441 = vrot.slane %v274, 1
        %v4442 = vsel %vm464, %v4440, %v4441
        %v4443 = vrot.slane %v293, 1
        %v4444 = vrot.slane %v294, 1
        %v4445 = vsel %vm464, %v4443, %v4444
        %v4446 = vrot.slane %v313, 1
        %v4447 = vrot.slane %v314, 1
        %v4448 = vsel %vm464, %v4446, %v4447
        %v4449 = vrot.slane %v333, 1
        %v4450 = vrot.slane %v334, 1
        %v4451 = vsel %vm464, %v4449, %v4450
        %s4452 = scalar_lea.vmem %s1, 28
        %v4453 = vld [vmem:[%s4452] sm:$0xf]
        %v4454 = vsel %vm659, %v4430, 0
        %v4456 = vsel %vm659, %v4433, 0
        %v4458 = vsel %vm659, %v4436, 0
        %v4460 = vsel %vm659, %v4439, 0
        %v4462 = vsel %vm659, %v4442, 0
        %v4464 = vsel %vm659, %v4445, 0
        %v4466 = vsel %vm659, %v4448, 0
        %v4468 = vsel %vm659, %v4451, 0
        %v4471 = vsel %vm788, %v4453, 0
        %4473 = vmatprep.subr.mxu0 0.0
        %4474 = vmatpush1.msra.mxu0 0.0
        %4475 = vmatprep.subr.mxu0 0.0
        %4476 = vmatpush1.msra.mxu0 0.0
        %4477 = vmatprep.subr.mxu0 0.0
        %4478 = vmatpush1.msra.mxu0 0.0
        %4479 = vmatprep.subr.mxu0 0.0
        %4480 = vmatpush1.msra.mxu0 0.0
        %4481 = vmatprep.subr.mxu0 0.0
        %4482 = vmatpush1.msra.mxu0 0.0
        %4483 = vmatprep.subr.mxu0 0.0
        %4484 = vmatpush1.msra.mxu0 0.0
        %4485 = vmatprep.subr.mxu0 0.0
        %4486 = vmatpush1.msra.mxu0 0.0
        %4487 = vmatprep.subr.mxu0 0.0
        %4488 = vmatpush1.msra.mxu0 0.0
        %4489 = vmatprep.subr.mxu0 0.0
        %4490 = vmatpush1.msra.mxu0 0.0
        %4491 = vmatprep.subr.mxu0 0.0
        %4492 = vmatpush1.msra.mxu0 0.0
        %4493 = vmatprep.subr.mxu0 0.0
        %4494 = vmatpush1.msra.mxu0 0.0
        %4495 = vmatprep.subr.mxu0 0.0
        %4496 = vmatpush1.msra.mxu0 0.0
        %4497 = vmatprep.subr.mxu0 0.0
        %4498 = vmatpush1.msra.mxu0 0.0
        %4499 = vmatprep.subr.mxu0 0.0
        %4500 = vmatpush1.msra.mxu0 0.0
        %4501 = vmatprep.subr.mxu0 0.0
        %4502 = vmatpush1.msra.mxu0 0.0
        %4503 = vmatprep.subr.mxu0 0.0
        %4504 = vmatpush1.msra.mxu0 %v4471
        %4505 = vmatprep.subr.mxu0 0.0
        %4506 = vmatpush2.msra.mxu0 0.0
        %4507 = vmatprep.subr.mxu0 0.0
        %4508 = vmatpush2.msra.mxu0 0.0
        %4509 = vmatprep.subr.mxu0 0.0
        %4510 = vmatpush2.msra.mxu0 0.0
        %4511 = vmatprep.subr.mxu0 0.0
        %4512 = vmatpush2.msra.mxu0 0.0
        %4513 = vmatprep.subr.mxu0 0.0
        %4514 = vmatpush2.msra.mxu0 0.0
        %4515 = vmatprep.subr.mxu0 0.0
        %4516 = vmatpush2.msra.mxu0 0.0
        %4517 = vmatprep.subr.mxu0 0.0
        %4518 = vmatpush2.msra.mxu0 0.0
        %4519 = vmatprep.subr.mxu0 0.0
        %4520 = vmatpush2.msra.mxu0 0.0
        %4521 = vmatprep.subr.mxu0 0.0
        %4522 = vmatpush2.msra.mxu0 0.0
        %4523 = vmatprep.subr.mxu0 0.0
        %4524 = vmatpush2.msra.mxu0 0.0
        %4525 = vmatprep.subr.mxu0 0.0
        %4526 = vmatpush2.msra.mxu0 0.0
        %4527 = vmatprep.subr.mxu0 0.0
        %4528 = vmatpush2.msra.mxu0 0.0
        %4529 = vmatprep.subr.mxu0 0.0
        %4530 = vmatpush2.msra.mxu0 0.0
        %4531 = vmatprep.subr.mxu0 0.0
        %4532 = vmatpush2.msra.mxu0 0.0
        %4533 = vmatprep.subr.mxu0 0.0
        %4534 = vmatpush2.msra.mxu0 0.0
        %4535 = vmatprep.subr.mxu0 0.0
        %4536 = vmatpush2.msra.mxu0 0.0
        %4537 = vmatprep.mubr.f32.mxu0 0.0
        %4538 = vmatmul.mubr.f32.gmra.mxu0 %v664
        %v4539 = vpop.f32.mrf.mxu0
        %v4540 = vadd.f32 0.0, %v4539
        %v4541 = vpop.f32.mrf.mxu0
        %4542 = vmatprep.mubr.f32.mxu0 0.0
        %4543 = vmatmul.mubr.f32.gmra.mxu0 %v666
        %v4544 = vpop.f32.mrf.mxu0
        %v4545 = vadd.f32 0.0, %v4544
        %v4546 = vpop.f32.mrf.mxu0
        %4547 = vmatprep.mubr.f32.mxu0 0.0
        %4548 = vmatmul.mubr.f32.gmra.mxu0 %v668
        %v4549 = vpop.f32.mrf.mxu0
        %v4550 = vadd.f32 0.0, %v4549
        %v4551 = vpop.f32.mrf.mxu0
        %4552 = vmatprep.mubr.f32.mxu0 0.0
        %4553 = vmatmul.mubr.f32.gmra.mxu0 %v670
        %v4554 = vpop.f32.mrf.mxu0
        %v4555 = vadd.f32 0.0, %v4554
        %v4556 = vpop.f32.mrf.mxu0
        %4557 = vmatprep.mubr.f32.mxu0 0.0
        %4558 = vmatmul.mubr.f32.gmra.mxu0 %v672
        %v4559 = vpop.f32.mrf.mxu0
        %v4560 = vadd.f32 0.0, %v4559
        %v4561 = vpop.f32.mrf.mxu0
        %4562 = vmatprep.mubr.f32.mxu0 0.0
        %4563 = vmatmul.mubr.f32.gmra.mxu0 %v674
        %v4564 = vpop.f32.mrf.mxu0
        %v4565 = vadd.f32 0.0, %v4564
        %v4566 = vpop.f32.mrf.mxu0
        %4567 = vmatprep.mubr.f32.mxu0 0.0
        %4568 = vmatmul.mubr.f32.gmra.mxu0 %v2980
        %v4569 = vpop.f32.mrf.mxu0
        %v4570 = vadd.f32 0.0, %v4569
        %v4571 = vpop.f32.mrf.mxu0
        %4572 = vmatprep.mubr.f32.mxu0 0.0
        %4573 = vmatmul.mubr.f32.gmra.mxu0 %v4454
        %v4574 = vpop.f32.mrf.mxu0
        %v4575 = vadd.f32 0.0, %v4574
        %v4576 = vpop.f32.mrf.mxu0
        %4577 = vmatprep.mubr.f32.mxu0 0.0
        %4578 = vmatmul.mubr.f32.gmra.mxu0 %v680
        %v4579 = vpop.f32.mrf.mxu0
        %v4580 = vadd.f32 0.0, %v4579
        %v4581 = vpop.f32.mrf.mxu0
        %4582 = vmatprep.mubr.f32.mxu0 0.0
        %4583 = vmatmul.mubr.f32.gmra.mxu0 %v682
        %v4584 = vpop.f32.mrf.mxu0
        %v4585 = vadd.f32 0.0, %v4584
        %v4586 = vpop.f32.mrf.mxu0
        %4587 = vmatprep.mubr.f32.mxu0 0.0
        %4588 = vmatmul.mubr.f32.gmra.mxu0 %v684
        %v4589 = vpop.f32.mrf.mxu0
        %v4590 = vadd.f32 0.0, %v4589
        %v4591 = vpop.f32.mrf.mxu0
        %4592 = vmatprep.mubr.f32.mxu0 0.0
        %4593 = vmatmul.mubr.f32.gmra.mxu0 %v686
        %v4594 = vpop.f32.mrf.mxu0
        %v4595 = vadd.f32 0.0, %v4594
        %v4596 = vpop.f32.mrf.mxu0
        %4597 = vmatprep.mubr.f32.mxu0 0.0
        %4598 = vmatmul.mubr.f32.gmra.mxu0 %v688
        %v4599 = vpop.f32.mrf.mxu0
        %v4600 = vadd.f32 0.0, %v4599
        %v4601 = vpop.f32.mrf.mxu0
        %4602 = vmatprep.mubr.f32.mxu0 0.0
        %4603 = vmatmul.mubr.f32.gmra.mxu0 %v690
        %v4604 = vpop.f32.mrf.mxu0
        %v4605 = vadd.f32 0.0, %v4604
        %v4606 = vpop.f32.mrf.mxu0
        %4607 = vmatprep.mubr.f32.mxu0 0.0
        %4608 = vmatmul.mubr.f32.gmra.mxu0 %v2982
        %v4609 = vpop.f32.mrf.mxu0
        %v4610 = vadd.f32 0.0, %v4609
        %v4611 = vpop.f32.mrf.mxu0
        %4612 = vmatprep.mubr.f32.mxu0 0.0
        %4613 = vmatmul.mubr.f32.gmra.mxu0 %v4456
        %v4614 = vpop.f32.mrf.mxu0
        %v4615 = vadd.f32 0.0, %v4614
        %v4616 = vpop.f32.mrf.mxu0
        %4617 = vmatprep.mubr.f32.mxu0 0.0
        %4618 = vmatmul.mubr.f32.gmra.mxu0 %v696
        %v4619 = vpop.f32.mrf.mxu0
        %v4620 = vadd.f32 0.0, %v4619
        %v4621 = vpop.f32.mrf.mxu0
        %4622 = vmatprep.mubr.f32.mxu0 0.0
        %4623 = vmatmul.mubr.f32.gmra.mxu0 %v698
        %v4624 = vpop.f32.mrf.mxu0
        %v4625 = vadd.f32 0.0, %v4624
        %v4626 = vpop.f32.mrf.mxu0
        %4627 = vmatprep.mubr.f32.mxu0 0.0
        %4628 = vmatmul.mubr.f32.gmra.mxu0 %v700
        %v4629 = vpop.f32.mrf.mxu0
        %v4630 = vadd.f32 0.0, %v4629
        %v4631 = vpop.f32.mrf.mxu0
        %4632 = vmatprep.mubr.f32.mxu0 0.0
        %4633 = vmatmul.mubr.f32.gmra.mxu0 %v702
        %v4634 = vpop.f32.mrf.mxu0
        %v4635 = vadd.f32 0.0, %v4634
        %v4636 = vpop.f32.mrf.mxu0
        %4637 = vmatprep.mubr.f32.mxu0 0.0
        %4638 = vmatmul.mubr.f32.gmra.mxu0 %v704
        %v4639 = vpop.f32.mrf.mxu0
        %v4640 = vadd.f32 0.0, %v4639
        %v4641 = vpop.f32.mrf.mxu0
        %4642 = vmatprep.mubr.f32.mxu0 0.0
        %4643 = vmatmul.mubr.f32.gmra.mxu0 %v706
        %v4644 = vpop.f32.mrf.mxu0
        %v4645 = vadd.f32 0.0, %v4644
        %v4646 = vpop.f32.mrf.mxu0
        %4647 = vmatprep.mubr.f32.mxu0 0.0
        %4648 = vmatmul.mubr.f32.gmra.mxu0 %v2984
        %v4649 = vpop.f32.mrf.mxu0
        %v4650 = vadd.f32 0.0, %v4649
        %v4651 = vpop.f32.mrf.mxu0
        %4652 = vmatprep.mubr.f32.mxu0 0.0
        %4653 = vmatmul.mubr.f32.gmra.mxu0 %v4458
        %v4654 = vpop.f32.mrf.mxu0
        %v4655 = vadd.f32 0.0, %v4654
        %v4656 = vpop.f32.mrf.mxu0
        %4657 = vmatprep.mubr.f32.mxu0 0.0
        %4658 = vmatmul.mubr.f32.gmra.mxu0 %v712
        %v4659 = vpop.f32.mrf.mxu0
        %v4660 = vadd.f32 0.0, %v4659
        %v4661 = vpop.f32.mrf.mxu0
        %4662 = vmatprep.mubr.f32.mxu0 0.0
        %4663 = vmatmul.mubr.f32.gmra.mxu0 %v714
        %v4664 = vpop.f32.mrf.mxu0
        %v4665 = vadd.f32 0.0, %v4664
        %v4666 = vpop.f32.mrf.mxu0
        %4667 = vmatprep.mubr.f32.mxu0 0.0
        %4668 = vmatmul.mubr.f32.gmra.mxu0 %v716
        %v4669 = vpop.f32.mrf.mxu0
        %v4670 = vadd.f32 0.0, %v4669
        %v4671 = vpop.f32.mrf.mxu0
        %4672 = vmatprep.mubr.f32.mxu0 0.0
        %4673 = vmatmul.mubr.f32.gmra.mxu0 %v718
        %v4674 = vpop.f32.mrf.mxu0
        %v4675 = vadd.f32 0.0, %v4674
        %v4676 = vpop.f32.mrf.mxu0
        %4677 = vmatprep.mubr.f32.mxu0 0.0
        %4678 = vmatmul.mubr.f32.gmra.mxu0 %v720
        %v4679 = vpop.f32.mrf.mxu0
        %v4680 = vadd.f32 0.0, %v4679
        %v4681 = vpop.f32.mrf.mxu0
        %4682 = vmatprep.mubr.f32.mxu0 0.0
        %4683 = vmatmul.mubr.f32.gmra.mxu0 %v722
        %v4684 = vpop.f32.mrf.mxu0
        %v4685 = vadd.f32 0.0, %v4684
        %v4686 = vpop.f32.mrf.mxu0
        %4687 = vmatprep.mubr.f32.mxu0 0.0
        %4688 = vmatmul.mubr.f32.gmra.mxu0 %v2986
        %v4689 = vpop.f32.mrf.mxu0
        %v4690 = vadd.f32 0.0, %v4689
        %v4691 = vpop.f32.mrf.mxu0
        %4692 = vmatprep.mubr.f32.mxu0 0.0
        %4693 = vmatmul.mubr.f32.gmra.mxu0 %v4460
        %v4694 = vpop.f32.mrf.mxu0
        %v4695 = vadd.f32 0.0, %v4694
        %v4696 = vpop.f32.mrf.mxu0
        %4697 = vmatprep.mubr.f32.mxu0 0.0
        %4698 = vmatmul.mubr.f32.gmra.mxu0 %v728
        %v4699 = vpop.f32.mrf.mxu0
        %v4700 = vadd.f32 0.0, %v4699
        %v4701 = vpop.f32.mrf.mxu0
        %4702 = vmatprep.mubr.f32.mxu0 0.0
        %4703 = vmatmul.mubr.f32.gmra.mxu0 %v730
        %v4704 = vpop.f32.mrf.mxu0
        %v4705 = vadd.f32 0.0, %v4704
        %v4706 = vpop.f32.mrf.mxu0
        %4707 = vmatprep.mubr.f32.mxu0 0.0
        %4708 = vmatmul.mubr.f32.gmra.mxu0 %v732
        %v4709 = vpop.f32.mrf.mxu0
        %v4710 = vadd.f32 0.0, %v4709
        %v4711 = vpop.f32.mrf.mxu0
        %4712 = vmatprep.mubr.f32.mxu0 0.0
        %4713 = vmatmul.mubr.f32.gmra.mxu0 %v734
        %v4714 = vpop.f32.mrf.mxu0
        %v4715 = vadd.f32 0.0, %v4714
        %v4716 = vpop.f32.mrf.mxu0
        %4717 = vmatprep.mubr.f32.mxu0 0.0
        %4718 = vmatmul.mubr.f32.gmra.mxu0 %v736
        %v4719 = vpop.f32.mrf.mxu0
        %v4720 = vadd.f32 0.0, %v4719
        %v4721 = vpop.f32.mrf.mxu0
        %4722 = vmatprep.mubr.f32.mxu0 0.0
        %4723 = vmatmul.mubr.f32.gmra.mxu0 %v738
        %v4724 = vpop.f32.mrf.mxu0
        %v4725 = vadd.f32 0.0, %v4724
        %v4726 = vpop.f32.mrf.mxu0
        %4727 = vmatprep.mubr.f32.mxu0 0.0
        %4728 = vmatmul.mubr.f32.gmra.mxu0 %v2988
        %v4729 = vpop.f32.mrf.mxu0
        %v4730 = vadd.f32 0.0, %v4729
        %v4731 = vpop.f32.mrf.mxu0
        %4732 = vmatprep.mubr.f32.mxu0 0.0
        %4733 = vmatmul.mubr.f32.gmra.mxu0 %v4462
        %v4734 = vpop.f32.mrf.mxu0
        %v4735 = vadd.f32 0.0, %v4734
        %v4736 = vpop.f32.mrf.mxu0
        %4737 = vmatprep.mubr.f32.mxu0 0.0
        %4738 = vmatmul.mubr.f32.gmra.mxu0 %v744
        %v4739 = vpop.f32.mrf.mxu0
        %v4740 = vadd.f32 0.0, %v4739
        %v4741 = vpop.f32.mrf.mxu0
        %4742 = vmatprep.mubr.f32.mxu0 0.0
        %4743 = vmatmul.mubr.f32.gmra.mxu0 %v746
        %v4744 = vpop.f32.mrf.mxu0
        %v4745 = vadd.f32 0.0, %v4744
        %v4746 = vpop.f32.mrf.mxu0
        %4747 = vmatprep.mubr.f32.mxu0 0.0
        %4748 = vmatmul.mubr.f32.gmra.mxu0 %v748
        %v4749 = vpop.f32.mrf.mxu0
        %v4750 = vadd.f32 0.0, %v4749
        %v4751 = vpop.f32.mrf.mxu0
        %4752 = vmatprep.mubr.f32.mxu0 0.0
        %4753 = vmatmul.mubr.f32.gmra.mxu0 %v750
        %v4754 = vpop.f32.mrf.mxu0
        %v4755 = vadd.f32 0.0, %v4754
        %v4756 = vpop.f32.mrf.mxu0
        %4757 = vmatprep.mubr.f32.mxu0 0.0
        %4758 = vmatmul.mubr.f32.gmra.mxu0 %v752
        %v4759 = vpop.f32.mrf.mxu0
        %v4760 = vadd.f32 0.0, %v4759
        %v4761 = vpop.f32.mrf.mxu0
        %4762 = vmatprep.mubr.f32.mxu0 0.0
        %4763 = vmatmul.mubr.f32.gmra.mxu0 %v754
        %v4764 = vpop.f32.mrf.mxu0
        %v4765 = vadd.f32 0.0, %v4764
        %v4766 = vpop.f32.mrf.mxu0
        %4767 = vmatprep.mubr.f32.mxu0 0.0
        %4768 = vmatmul.mubr.f32.gmra.mxu0 %v2990
        %v4769 = vpop.f32.mrf.mxu0
        %v4770 = vadd.f32 0.0, %v4769
        %v4771 = vpop.f32.mrf.mxu0
        %4772 = vmatprep.mubr.f32.mxu0 0.0
        %4773 = vmatmul.mubr.f32.gmra.mxu0 %v4464
        %v4774 = vpop.f32.mrf.mxu0
        %v4775 = vadd.f32 0.0, %v4774
        %v4776 = vpop.f32.mrf.mxu0
        %4777 = vmatprep.mubr.f32.mxu0 0.0
        %4778 = vmatmul.mubr.f32.gmra.mxu0 %v760
        %v4779 = vpop.f32.mrf.mxu0
        %v4780 = vadd.f32 0.0, %v4779
        %v4781 = vpop.f32.mrf.mxu0
        %4782 = vmatprep.mubr.f32.mxu0 0.0
        %4783 = vmatmul.mubr.f32.gmra.mxu0 %v762
        %v4784 = vpop.f32.mrf.mxu0
        %v4785 = vadd.f32 0.0, %v4784
        %v4786 = vpop.f32.mrf.mxu0
        %4787 = vmatprep.mubr.f32.mxu0 0.0
        %4788 = vmatmul.mubr.f32.gmra.mxu0 %v764
        %v4789 = vpop.f32.mrf.mxu0
        %v4790 = vadd.f32 0.0, %v4789
        %v4791 = vpop.f32.mrf.mxu0
        %4792 = vmatprep.mubr.f32.mxu0 0.0
        %4793 = vmatmul.mubr.f32.gmra.mxu0 %v766
        %v4794 = vpop.f32.mrf.mxu0
        %v4795 = vadd.f32 0.0, %v4794
        %v4796 = vpop.f32.mrf.mxu0
        %4797 = vmatprep.mubr.f32.mxu0 0.0
        %4798 = vmatmul.mubr.f32.gmra.mxu0 %v768
        %v4799 = vpop.f32.mrf.mxu0
        %v4800 = vadd.f32 0.0, %v4799
        %v4801 = vpop.f32.mrf.mxu0
        %4802 = vmatprep.mubr.f32.mxu0 0.0
        %4803 = vmatmul.mubr.f32.gmra.mxu0 %v770
        %v4804 = vpop.f32.mrf.mxu0
        %v4805 = vadd.f32 0.0, %v4804
        %v4806 = vpop.f32.mrf.mxu0
        %4807 = vmatprep.mubr.f32.mxu0 0.0
        %4808 = vmatmul.mubr.f32.gmra.mxu0 %v2992
        %v4809 = vpop.f32.mrf.mxu0
        %v4810 = vadd.f32 0.0, %v4809
        %v4811 = vpop.f32.mrf.mxu0
        %4812 = vmatprep.mubr.f32.mxu0 0.0
        %4813 = vmatmul.mubr.f32.gmra.mxu0 %v4466
        %v4814 = vpop.f32.mrf.mxu0
        %v4815 = vadd.f32 0.0, %v4814
        %v4816 = vpop.f32.mrf.mxu0
        %4817 = vmatprep.mubr.f32.mxu0 0.0
        %4818 = vmatmul.mubr.f32.gmra.mxu0 %v776
        %v4819 = vpop.f32.mrf.mxu0
        %v4820 = vadd.f32 0.0, %v4819
        %v4821 = vpop.f32.mrf.mxu0
        %4822 = vmatprep.mubr.f32.mxu0 0.0
        %4823 = vmatmul.mubr.f32.gmra.mxu0 %v778
        %v4824 = vpop.f32.mrf.mxu0
        %v4825 = vadd.f32 0.0, %v4824
        %v4826 = vpop.f32.mrf.mxu0
        %4827 = vmatprep.mubr.f32.mxu0 0.0
        %4828 = vmatmul.mubr.f32.gmra.mxu0 %v780
        %v4829 = vpop.f32.mrf.mxu0
        %v4830 = vadd.f32 0.0, %v4829
        %v4831 = vpop.f32.mrf.mxu0
        %4832 = vmatprep.mubr.f32.mxu0 0.0
        %4833 = vmatmul.mubr.f32.gmra.mxu0 %v782
        %v4834 = vpop.f32.mrf.mxu0
        %v4835 = vadd.f32 0.0, %v4834
        %v4836 = vpop.f32.mrf.mxu0
        %4837 = vmatprep.mubr.f32.mxu0 0.0
        %4838 = vmatmul.mubr.f32.gmra.mxu0 %v784
        %v4839 = vpop.f32.mrf.mxu0
        %v4840 = vadd.f32 0.0, %v4839
        %v4841 = vpop.f32.mrf.mxu0
        %4842 = vmatprep.mubr.f32.mxu0 0.0
        %4843 = vmatmul.mubr.f32.gmra.mxu0 %v786
        %v4844 = vpop.f32.mrf.mxu0
        %v4845 = vadd.f32 0.0, %v4844
        %v4846 = vpop.f32.mrf.mxu0
        %4847 = vmatprep.mubr.f32.mxu0 0.0
        %4848 = vmatmul.mubr.f32.gmra.mxu0 %v2994
        %v4849 = vpop.f32.mrf.mxu0
        %v4850 = vadd.f32 0.0, %v4849
        %v4851 = vpop.f32.mrf.mxu0
        %4852 = vmatprep.mubr.f32.mxu0 0.0
        %4853 = vmatmul.mubr.f32.gmra.mxu0 %v4468
        %v4854 = vpop.f32.mrf.mxu0
        %v4855 = vadd.f32 0.0, %v4854
        %v4856 = vpop.f32.mrf.mxu0
        %4857 = vdwg.mxu0
        %v4858 = vadd.f32 %v4356, %v4540
        %v4859 = vadd.f32 %v4357, %v4545
        %v4860 = vadd.f32 %v4358, %v4550
        %v4861 = vadd.f32 %v4359, %v4555
        %v4862 = vadd.f32 %v4360, %v4560
        %v4863 = vadd.f32 %v4361, %v4565
        %v4864 = vadd.f32 %v4362, %v4570
        %v4865 = vadd.f32 %v4363, %v4575
        %v4866 = vadd.f32 %v4364, %v4580
        %v4867 = vadd.f32 %v4365, %v4585
        %v4868 = vadd.f32 %v4366, %v4590
        %v4869 = vadd.f32 %v4367, %v4595
        %v4870 = vadd.f32 %v4368, %v4600
        %v4871 = vadd.f32 %v4369, %v4605
        %v4872 = vadd.f32 %v4370, %v4610
        %v4873 = vadd.f32 %v4371, %v4615
        %v4874 = vadd.f32 %v4372, %v4620
        %v4875 = vadd.f32 %v4373, %v4625
        %v4876 = vadd.f32 %v4374, %v4630
        %v4877 = vadd.f32 %v4375, %v4635
        %v4878 = vadd.f32 %v4376, %v4640
        %v4879 = vadd.f32 %v4377, %v4645
        %v4880 = vadd.f32 %v4378, %v4650
        %v4881 = vadd.f32 %v4379, %v4655
        %v4882 = vadd.f32 %v4380, %v4660
        %v4883 = vadd.f32 %v4381, %v4665
        %v4884 = vadd.f32 %v4382, %v4670
        %v4885 = vadd.f32 %v4383, %v4675
        %v4886 = vadd.f32 %v4384, %v4680
        %v4887 = vadd.f32 %v4385, %v4685
        %v4888 = vadd.f32 %v4386, %v4690
        %v4889 = vadd.f32 %v4387, %v4695
        %v4890 = vadd.f32 %v4388, %v4700
        %v4891 = vadd.f32 %v4389, %v4705
        %v4892 = vadd.f32 %v4390, %v4710
        %v4893 = vadd.f32 %v4391, %v4715
        %v4894 = vadd.f32 %v4392, %v4720
        %v4895 = vadd.f32 %v4393, %v4725
        %v4896 = vadd.f32 %v4394, %v4730
        %v4897 = vadd.f32 %v4395, %v4735
        %v4898 = vadd.f32 %v4396, %v4740
        %v4899 = vadd.f32 %v4397, %v4745
        %v4900 = vadd.f32 %v4398, %v4750
        %v4901 = vadd.f32 %v4399, %v4755
        %v4902 = vadd.f32 %v4400, %v4760
        %v4903 = vadd.f32 %v4401, %v4765
        %v4904 = vadd.f32 %v4402, %v4770
        %v4905 = vadd.f32 %v4403, %v4775
        %v4906 = vadd.f32 %v4404, %v4780
        %v4907 = vadd.f32 %v4405, %v4785
        %v4908 = vadd.f32 %v4406, %v4790
        %v4909 = vadd.f32 %v4407, %v4795
        %v4910 = vadd.f32 %v4408, %v4800
        %v4911 = vadd.f32 %v4409, %v4805
        %v4912 = vadd.f32 %v4410, %v4810
        %v4913 = vadd.f32 %v4411, %v4815
        %v4914 = vadd.f32 %v4412, %v4820
        %v4915 = vadd.f32 %v4413, %v4825
        %v4916 = vadd.f32 %v4414, %v4830
        %v4917 = vadd.f32 %v4415, %v4835
        %v4918 = vadd.f32 %v4416, %v4840
        %v4919 = vadd.f32 %v4417, %v4845
        %v4920 = vadd.f32 %v4418, %v4850
        %v4921 = vadd.f32 %v4419, %v4855
        %v4922 = vrot.slane %v193, 2
        %v4923 = vrot.slane %v194, 2
        %v4924 = vsel %vm1693, %v4922, %v4923
        %v4925 = vrot.slane %v213, 2
        %v4926 = vrot.slane %v214, 2
        %v4927 = vsel %vm1693, %v4925, %v4926
        %v4928 = vrot.slane %v233, 2
        %v4929 = vrot.slane %v234, 2
        %v4930 = vsel %vm1693, %v4928, %v4929
        %v4931 = vrot.slane %v253, 2
        %v4932 = vrot.slane %v254, 2
        %v4933 = vsel %vm1693, %v4931, %v4932
        %v4934 = vrot.slane %v273, 2
        %v4935 = vrot.slane %v274, 2
        %v4936 = vsel %vm1693, %v4934, %v4935
        %v4937 = vrot.slane %v293, 2
        %v4938 = vrot.slane %v294, 2
        %v4939 = vsel %vm1693, %v4937, %v4938
        %v4940 = vrot.slane %v313, 2
        %v4941 = vrot.slane %v314, 2
        %v4942 = vsel %vm1693, %v4940, %v4941
        %v4943 = vrot.slane %v333, 2
        %v4944 = vrot.slane %v334, 2
        %v4945 = vsel %vm1693, %v4943, %v4944
        %s4946 = scalar_lea.vmem %s1, 32
        %v4947 = vld [vmem:[%s4946] sm:$0xf]
        %v4948 = vsel %vm659, %v4924, 0
        %v4950 = vsel %vm659, %v4927, 0
        %v4952 = vsel %vm659, %v4930, 0
        %v4954 = vsel %vm659, %v4933, 0
        %v4956 = vsel %vm659, %v4936, 0
        %v4958 = vsel %vm659, %v4939, 0
        %v4960 = vsel %vm659, %v4942, 0
        %v4962 = vsel %vm659, %v4945, 0
        %v4965 = vsel %vm788, %v4947, 0
        %4967 = vmatprep.subr.mxu0 0.0
        %4968 = vmatpush1.msra.mxu0 0.0
        %4969 = vmatprep.subr.mxu0 0.0
        %4970 = vmatpush1.msra.mxu0 0.0
        %4971 = vmatprep.subr.mxu0 0.0
        %4972 = vmatpush1.msra.mxu0 0.0
        %4973 = vmatprep.subr.mxu0 0.0
        %4974 = vmatpush1.msra.mxu0 0.0
        %4975 = vmatprep.subr.mxu0 0.0
        %4976 = vmatpush1.msra.mxu0 0.0
        %4977 = vmatprep.subr.mxu0 0.0
        %4978 = vmatpush1.msra.mxu0 0.0
        %4979 = vmatprep.subr.mxu0 0.0
        %4980 = vmatpush1.msra.mxu0 0.0
        %4981 = vmatprep.subr.mxu0 0.0
        %4982 = vmatpush1.msra.mxu0 0.0
        %4983 = vmatprep.subr.mxu0 0.0
        %4984 = vmatpush1.msra.mxu0 0.0
        %4985 = vmatprep.subr.mxu0 0.0
        %4986 = vmatpush1.msra.mxu0 0.0
        %4987 = vmatprep.subr.mxu0 0.0
        %4988 = vmatpush1.msra.mxu0 0.0
        %4989 = vmatprep.subr.mxu0 0.0
        %4990 = vmatpush1.msra.mxu0 0.0
        %4991 = vmatprep.subr.mxu0 0.0
        %4992 = vmatpush1.msra.mxu0 0.0
        %4993 = vmatprep.subr.mxu0 0.0
        %4994 = vmatpush1.msra.mxu0 0.0
        %4995 = vmatprep.subr.mxu0 0.0
        %4996 = vmatpush1.msra.mxu0 0.0
        %4997 = vmatprep.subr.mxu0 0.0
        %4998 = vmatpush1.msra.mxu0 %v4965
        %4999 = vmatprep.subr.mxu0 0.0
        %5000 = vmatpush2.msra.mxu0 0.0
        %5001 = vmatprep.subr.mxu0 0.0
        %5002 = vmatpush2.msra.mxu0 0.0
        %5003 = vmatprep.subr.mxu0 0.0
        %5004 = vmatpush2.msra.mxu0 0.0
        %5005 = vmatprep.subr.mxu0 0.0
        %5006 = vmatpush2.msra.mxu0 0.0
        %5007 = vmatprep.subr.mxu0 0.0
        %5008 = vmatpush2.msra.mxu0 0.0
        %5009 = vmatprep.subr.mxu0 0.0
        %5010 = vmatpush2.msra.mxu0 0.0
        %5011 = vmatprep.subr.mxu0 0.0
        %5012 = vmatpush2.msra.mxu0 0.0
        %5013 = vmatprep.subr.mxu0 0.0
        %5014 = vmatpush2.msra.mxu0 0.0
        %5015 = vmatprep.subr.mxu0 0.0
        %5016 = vmatpush2.msra.mxu0 0.0
        %5017 = vmatprep.subr.mxu0 0.0
        %5018 = vmatpush2.msra.mxu0 0.0
        %5019 = vmatprep.subr.mxu0 0.0
        %5020 = vmatpush2.msra.mxu0 0.0
        %5021 = vmatprep.subr.mxu0 0.0
        %5022 = vmatpush2.msra.mxu0 0.0
        %5023 = vmatprep.subr.mxu0 0.0
        %5024 = vmatpush2.msra.mxu0 0.0
        %5025 = vmatprep.subr.mxu0 0.0
        %5026 = vmatpush2.msra.mxu0 0.0
        %5027 = vmatprep.subr.mxu0 0.0
        %5028 = vmatpush2.msra.mxu0 0.0
        %5029 = vmatprep.subr.mxu0 0.0
        %5030 = vmatpush2.msra.mxu0 0.0
        %5031 = vmatprep.mubr.f32.mxu0 0.0
        %5032 = vmatmul.mubr.f32.gmra.mxu0 %v1892
        %v5033 = vpop.f32.mrf.mxu0
        %v5034 = vadd.f32 0.0, %v5033
        %v5035 = vpop.f32.mrf.mxu0
        %5036 = vmatprep.mubr.f32.mxu0 0.0
        %5037 = vmatmul.mubr.f32.gmra.mxu0 %v1894
        %v5038 = vpop.f32.mrf.mxu0
        %v5039 = vadd.f32 0.0, %v5038
        %v5040 = vpop.f32.mrf.mxu0
        %5041 = vmatprep.mubr.f32.mxu0 0.0
        %5042 = vmatmul.mubr.f32.gmra.mxu0 %v1896
        %v5043 = vpop.f32.mrf.mxu0
        %v5044 = vadd.f32 0.0, %v5043
        %v5045 = vpop.f32.mrf.mxu0
        %5046 = vmatprep.mubr.f32.mxu0 0.0
        %5047 = vmatmul.mubr.f32.gmra.mxu0 %v1898
        %v5048 = vpop.f32.mrf.mxu0
        %v5049 = vadd.f32 0.0, %v5048
        %v5050 = vpop.f32.mrf.mxu0
        %5051 = vmatprep.mubr.f32.mxu0 0.0
        %5052 = vmatmul.mubr.f32.gmra.mxu0 %v1900
        %v5053 = vpop.f32.mrf.mxu0
        %v5054 = vadd.f32 0.0, %v5053
        %v5055 = vpop.f32.mrf.mxu0
        %5056 = vmatprep.mubr.f32.mxu0 0.0
        %5057 = vmatmul.mubr.f32.gmra.mxu0 %v1902
        %v5058 = vpop.f32.mrf.mxu0
        %v5059 = vadd.f32 0.0, %v5058
        %v5060 = vpop.f32.mrf.mxu0
        %5061 = vmatprep.mubr.f32.mxu0 0.0
        %5062 = vmatmul.mubr.f32.gmra.mxu0 %v3474
        %v5063 = vpop.f32.mrf.mxu0
        %v5064 = vadd.f32 0.0, %v5063
        %v5065 = vpop.f32.mrf.mxu0
        %5066 = vmatprep.mubr.f32.mxu0 0.0
        %5067 = vmatmul.mubr.f32.gmra.mxu0 %v4948
        %v5068 = vpop.f32.mrf.mxu0
        %v5069 = vadd.f32 0.0, %v5068
        %v5070 = vpop.f32.mrf.mxu0
        %5071 = vmatprep.mubr.f32.mxu0 0.0
        %5072 = vmatmul.mubr.f32.gmra.mxu0 %v1908
        %v5073 = vpop.f32.mrf.mxu0
        %v5074 = vadd.f32 0.0, %v5073
        %v5075 = vpop.f32.mrf.mxu0
        %5076 = vmatprep.mubr.f32.mxu0 0.0
        %5077 = vmatmul.mubr.f32.gmra.mxu0 %v1910
        %v5078 = vpop.f32.mrf.mxu0
        %v5079 = vadd.f32 0.0, %v5078
        %v5080 = vpop.f32.mrf.mxu0
        %5081 = vmatprep.mubr.f32.mxu0 0.0
        %5082 = vmatmul.mubr.f32.gmra.mxu0 %v1912
        %v5083 = vpop.f32.mrf.mxu0
        %v5084 = vadd.f32 0.0, %v5083
        %v5085 = vpop.f32.mrf.mxu0
        %5086 = vmatprep.mubr.f32.mxu0 0.0
        %5087 = vmatmul.mubr.f32.gmra.mxu0 %v1914
        %v5088 = vpop.f32.mrf.mxu0
        %v5089 = vadd.f32 0.0, %v5088
        %v5090 = vpop.f32.mrf.mxu0
        %5091 = vmatprep.mubr.f32.mxu0 0.0
        %5092 = vmatmul.mubr.f32.gmra.mxu0 %v1916
        %v5093 = vpop.f32.mrf.mxu0
        %v5094 = vadd.f32 0.0, %v5093
        %v5095 = vpop.f32.mrf.mxu0
        %5096 = vmatprep.mubr.f32.mxu0 0.0
        %5097 = vmatmul.mubr.f32.gmra.mxu0 %v1918
        %v5098 = vpop.f32.mrf.mxu0
        %v5099 = vadd.f32 0.0, %v5098
        %v5100 = vpop.f32.mrf.mxu0
        %5101 = vmatprep.mubr.f32.mxu0 0.0
        %5102 = vmatmul.mubr.f32.gmra.mxu0 %v3476
        %v5103 = vpop.f32.mrf.mxu0
        %v5104 = vadd.f32 0.0, %v5103
        %v5105 = vpop.f32.mrf.mxu0
        %5106 = vmatprep.mubr.f32.mxu0 0.0
        %5107 = vmatmul.mubr.f32.gmra.mxu0 %v4950
        %v5108 = vpop.f32.mrf.mxu0
        %v5109 = vadd.f32 0.0, %v5108
        %v5110 = vpop.f32.mrf.mxu0
        %5111 = vmatprep.mubr.f32.mxu0 0.0
        %5112 = vmatmul.mubr.f32.gmra.mxu0 %v1924
        %v5113 = vpop.f32.mrf.mxu0
        %v5114 = vadd.f32 0.0, %v5113
        %v5115 = vpop.f32.mrf.mxu0
        %5116 = vmatprep.mubr.f32.mxu0 0.0
        %5117 = vmatmul.mubr.f32.gmra.mxu0 %v1926
        %v5118 = vpop.f32.mrf.mxu0
        %v5119 = vadd.f32 0.0, %v5118
        %v5120 = vpop.f32.mrf.mxu0
        %5121 = vmatprep.mubr.f32.mxu0 0.0
        %5122 = vmatmul.mubr.f32.gmra.mxu0 %v1928
        %v5123 = vpop.f32.mrf.mxu0
        %v5124 = vadd.f32 0.0, %v5123
        %v5125 = vpop.f32.mrf.mxu0
        %5126 = vmatprep.mubr.f32.mxu0 0.0
        %5127 = vmatmul.mubr.f32.gmra.mxu0 %v1930
        %v5128 = vpop.f32.mrf.mxu0
        %v5129 = vadd.f32 0.0, %v5128
        %v5130 = vpop.f32.mrf.mxu0
        %5131 = vmatprep.mubr.f32.mxu0 0.0
        %5132 = vmatmul.mubr.f32.gmra.mxu0 %v1932
        %v5133 = vpop.f32.mrf.mxu0
        %v5134 = vadd.f32 0.0, %v5133
        %v5135 = vpop.f32.mrf.mxu0
        %5136 = vmatprep.mubr.f32.mxu0 0.0
        %5137 = vmatmul.mubr.f32.gmra.mxu0 %v1934
        %v5138 = vpop.f32.mrf.mxu0
        %v5139 = vadd.f32 0.0, %v5138
        %v5140 = vpop.f32.mrf.mxu0
        %5141 = vmatprep.mubr.f32.mxu0 0.0
        %5142 = vmatmul.mubr.f32.gmra.mxu0 %v3478
        %v5143 = vpop.f32.mrf.mxu0
        %v5144 = vadd.f32 0.0, %v5143
        %v5145 = vpop.f32.mrf.mxu0
        %5146 = vmatprep.mubr.f32.mxu0 0.0
        %5147 = vmatmul.mubr.f32.gmra.mxu0 %v4952
        %v5148 = vpop.f32.mrf.mxu0
        %v5149 = vadd.f32 0.0, %v5148
        %v5150 = vpop.f32.mrf.mxu0
        %5151 = vmatprep.mubr.f32.mxu0 0.0
        %5152 = vmatmul.mubr.f32.gmra.mxu0 %v1940
        %v5153 = vpop.f32.mrf.mxu0
        %v5154 = vadd.f32 0.0, %v5153
        %v5155 = vpop.f32.mrf.mxu0
        %5156 = vmatprep.mubr.f32.mxu0 0.0
        %5157 = vmatmul.mubr.f32.gmra.mxu0 %v1942
        %v5158 = vpop.f32.mrf.mxu0
        %v5159 = vadd.f32 0.0, %v5158
        %v5160 = vpop.f32.mrf.mxu0
        %5161 = vmatprep.mubr.f32.mxu0 0.0
        %5162 = vmatmul.mubr.f32.gmra.mxu0 %v1944
        %v5163 = vpop.f32.mrf.mxu0
        %v5164 = vadd.f32 0.0, %v5163
        %v5165 = vpop.f32.mrf.mxu0
        %5166 = vmatprep.mubr.f32.mxu0 0.0
        %5167 = vmatmul.mubr.f32.gmra.mxu0 %v1946
        %v5168 = vpop.f32.mrf.mxu0
        %v5169 = vadd.f32 0.0, %v5168
        %v5170 = vpop.f32.mrf.mxu0
        %5171 = vmatprep.mubr.f32.mxu0 0.0
        %5172 = vmatmul.mubr.f32.gmra.mxu0 %v1948
        %v5173 = vpop.f32.mrf.mxu0
        %v5174 = vadd.f32 0.0, %v5173
        %v5175 = vpop.f32.mrf.mxu0
        %5176 = vmatprep.mubr.f32.mxu0 0.0
        %5177 = vmatmul.mubr.f32.gmra.mxu0 %v1950
        %v5178 = vpop.f32.mrf.mxu0
        %v5179 = vadd.f32 0.0, %v5178
        %v5180 = vpop.f32.mrf.mxu0
        %5181 = vmatprep.mubr.f32.mxu0 0.0
        %5182 = vmatmul.mubr.f32.gmra.mxu0 %v3480
        %v5183 = vpop.f32.mrf.mxu0
        %v5184 = vadd.f32 0.0, %v5183
        %v5185 = vpop.f32.mrf.mxu0
        %5186 = vmatprep.mubr.f32.mxu0 0.0
        %5187 = vmatmul.mubr.f32.gmra.mxu0 %v4954
        %v5188 = vpop.f32.mrf.mxu0
        %v5189 = vadd.f32 0.0, %v5188
        %v5190 = vpop.f32.mrf.mxu0
        %5191 = vmatprep.mubr.f32.mxu0 0.0
        %5192 = vmatmul.mubr.f32.gmra.mxu0 %v1956
        %v5193 = vpop.f32.mrf.mxu0
        %v5194 = vadd.f32 0.0, %v5193
        %v5195 = vpop.f32.mrf.mxu0
        %5196 = vmatprep.mubr.f32.mxu0 0.0
        %5197 = vmatmul.mubr.f32.gmra.mxu0 %v1958
        %v5198 = vpop.f32.mrf.mxu0
        %v5199 = vadd.f32 0.0, %v5198
        %v5200 = vpop.f32.mrf.mxu0
        %5201 = vmatprep.mubr.f32.mxu0 0.0
        %5202 = vmatmul.mubr.f32.gmra.mxu0 %v1960
        %v5203 = vpop.f32.mrf.mxu0
        %v5204 = vadd.f32 0.0, %v5203
        %v5205 = vpop.f32.mrf.mxu0
        %5206 = vmatprep.mubr.f32.mxu0 0.0
        %5207 = vmatmul.mubr.f32.gmra.mxu0 %v1962
        %v5208 = vpop.f32.mrf.mxu0
        %v5209 = vadd.f32 0.0, %v5208
        %v5210 = vpop.f32.mrf.mxu0
        %5211 = vmatprep.mubr.f32.mxu0 0.0
        %5212 = vmatmul.mubr.f32.gmra.mxu0 %v1964
        %v5213 = vpop.f32.mrf.mxu0
        %v5214 = vadd.f32 0.0, %v5213
        %v5215 = vpop.f32.mrf.mxu0
        %5216 = vmatprep.mubr.f32.mxu0 0.0
        %5217 = vmatmul.mubr.f32.gmra.mxu0 %v1966
        %v5218 = vpop.f32.mrf.mxu0
        %v5219 = vadd.f32 0.0, %v5218
        %v5220 = vpop.f32.mrf.mxu0
        %5221 = vmatprep.mubr.f32.mxu0 0.0
        %5222 = vmatmul.mubr.f32.gmra.mxu0 %v3482
        %v5223 = vpop.f32.mrf.mxu0
        %v5224 = vadd.f32 0.0, %v5223
        %v5225 = vpop.f32.mrf.mxu0
        %5226 = vmatprep.mubr.f32.mxu0 0.0
        %5227 = vmatmul.mubr.f32.gmra.mxu0 %v4956
        %v5228 = vpop.f32.mrf.mxu0
        %v5229 = vadd.f32 0.0, %v5228
        %v5230 = vpop.f32.mrf.mxu0
        %5231 = vmatprep.mubr.f32.mxu0 0.0
        %5232 = vmatmul.mubr.f32.gmra.mxu0 %v1972
        %v5233 = vpop.f32.mrf.mxu0
        %v5234 = vadd.f32 0.0, %v5233
        %v5235 = vpop.f32.mrf.mxu0
        %5236 = vmatprep.mubr.f32.mxu0 0.0
        %5237 = vmatmul.mubr.f32.gmra.mxu0 %v1974
        %v5238 = vpop.f32.mrf.mxu0
        %v5239 = vadd.f32 0.0, %v5238
        %v5240 = vpop.f32.mrf.mxu0
        %5241 = vmatprep.mubr.f32.mxu0 0.0
        %5242 = vmatmul.mubr.f32.gmra.mxu0 %v1976
        %v5243 = vpop.f32.mrf.mxu0
        %v5244 = vadd.f32 0.0, %v5243
        %v5245 = vpop.f32.mrf.mxu0
        %5246 = vmatprep.mubr.f32.mxu0 0.0
        %5247 = vmatmul.mubr.f32.gmra.mxu0 %v1978
        %v5248 = vpop.f32.mrf.mxu0
        %v5249 = vadd.f32 0.0, %v5248
        %v5250 = vpop.f32.mrf.mxu0
        %5251 = vmatprep.mubr.f32.mxu0 0.0
        %5252 = vmatmul.mubr.f32.gmra.mxu0 %v1980
        %v5253 = vpop.f32.mrf.mxu0
        %v5254 = vadd.f32 0.0, %v5253
        %v5255 = vpop.f32.mrf.mxu0
        %5256 = vmatprep.mubr.f32.mxu0 0.0
        %5257 = vmatmul.mubr.f32.gmra.mxu0 %v1982
        %v5258 = vpop.f32.mrf.mxu0
        %v5259 = vadd.f32 0.0, %v5258
        %v5260 = vpop.f32.mrf.mxu0
        %5261 = vmatprep.mubr.f32.mxu0 0.0
        %5262 = vmatmul.mubr.f32.gmra.mxu0 %v3484
        %v5263 = vpop.f32.mrf.mxu0
        %v5264 = vadd.f32 0.0, %v5263
        %v5265 = vpop.f32.mrf.mxu0
        %5266 = vmatprep.mubr.f32.mxu0 0.0
        %5267 = vmatmul.mubr.f32.gmra.mxu0 %v4958
        %v5268 = vpop.f32.mrf.mxu0
        %v5269 = vadd.f32 0.0, %v5268
        %v5270 = vpop.f32.mrf.mxu0
        %5271 = vmatprep.mubr.f32.mxu0 0.0
        %5272 = vmatmul.mubr.f32.gmra.mxu0 %v1988
        %v5273 = vpop.f32.mrf.mxu0
        %v5274 = vadd.f32 0.0, %v5273
        %v5275 = vpop.f32.mrf.mxu0
        %5276 = vmatprep.mubr.f32.mxu0 0.0
        %5277 = vmatmul.mubr.f32.gmra.mxu0 %v1990
        %v5278 = vpop.f32.mrf.mxu0
        %v5279 = vadd.f32 0.0, %v5278
        %v5280 = vpop.f32.mrf.mxu0
        %5281 = vmatprep.mubr.f32.mxu0 0.0
        %5282 = vmatmul.mubr.f32.gmra.mxu0 %v1992
        %v5283 = vpop.f32.mrf.mxu0
        %v5284 = vadd.f32 0.0, %v5283
        %v5285 = vpop.f32.mrf.mxu0
        %5286 = vmatprep.mubr.f32.mxu0 0.0
        %5287 = vmatmul.mubr.f32.gmra.mxu0 %v1994
        %v5288 = vpop.f32.mrf.mxu0
        %v5289 = vadd.f32 0.0, %v5288
        %v5290 = vpop.f32.mrf.mxu0
        %5291 = vmatprep.mubr.f32.mxu0 0.0
        %5292 = vmatmul.mubr.f32.gmra.mxu0 %v1996
        %v5293 = vpop.f32.mrf.mxu0
        %v5294 = vadd.f32 0.0, %v5293
        %v5295 = vpop.f32.mrf.mxu0
        %5296 = vmatprep.mubr.f32.mxu0 0.0
        %5297 = vmatmul.mubr.f32.gmra.mxu0 %v1998
        %v5298 = vpop.f32.mrf.mxu0
        %v5299 = vadd.f32 0.0, %v5298
        %v5300 = vpop.f32.mrf.mxu0
        %5301 = vmatprep.mubr.f32.mxu0 0.0
        %5302 = vmatmul.mubr.f32.gmra.mxu0 %v3486
        %v5303 = vpop.f32.mrf.mxu0
        %v5304 = vadd.f32 0.0, %v5303
        %v5305 = vpop.f32.mrf.mxu0
        %5306 = vmatprep.mubr.f32.mxu0 0.0
        %5307 = vmatmul.mubr.f32.gmra.mxu0 %v4960
        %v5308 = vpop.f32.mrf.mxu0
        %v5309 = vadd.f32 0.0, %v5308
        %v5310 = vpop.f32.mrf.mxu0
        %5311 = vmatprep.mubr.f32.mxu0 0.0
        %5312 = vmatmul.mubr.f32.gmra.mxu0 %v2004
        %v5313 = vpop.f32.mrf.mxu0
        %v5314 = vadd.f32 0.0, %v5313
        %v5315 = vpop.f32.mrf.mxu0
        %5316 = vmatprep.mubr.f32.mxu0 0.0
        %5317 = vmatmul.mubr.f32.gmra.mxu0 %v2006
        %v5318 = vpop.f32.mrf.mxu0
        %v5319 = vadd.f32 0.0, %v5318
        %v5320 = vpop.f32.mrf.mxu0
        %5321 = vmatprep.mubr.f32.mxu0 0.0
        %5322 = vmatmul.mubr.f32.gmra.mxu0 %v2008
        %v5323 = vpop.f32.mrf.mxu0
        %v5324 = vadd.f32 0.0, %v5323
        %v5325 = vpop.f32.mrf.mxu0
        %5326 = vmatprep.mubr.f32.mxu0 0.0
        %5327 = vmatmul.mubr.f32.gmra.mxu0 %v2010
        %v5328 = vpop.f32.mrf.mxu0
        %v5329 = vadd.f32 0.0, %v5328
        %v5330 = vpop.f32.mrf.mxu0
        %5331 = vmatprep.mubr.f32.mxu0 0.0
        %5332 = vmatmul.mubr.f32.gmra.mxu0 %v2012
        %v5333 = vpop.f32.mrf.mxu0
        %v5334 = vadd.f32 0.0, %v5333
        %v5335 = vpop.f32.mrf.mxu0
        %5336 = vmatprep.mubr.f32.mxu0 0.0
        %5337 = vmatmul.mubr.f32.gmra.mxu0 %v2014
        %v5338 = vpop.f32.mrf.mxu0
        %v5339 = vadd.f32 0.0, %v5338
        %v5340 = vpop.f32.mrf.mxu0
        %5341 = vmatprep.mubr.f32.mxu0 0.0
        %5342 = vmatmul.mubr.f32.gmra.mxu0 %v3488
        %v5343 = vpop.f32.mrf.mxu0
        %v5344 = vadd.f32 0.0, %v5343
        %v5345 = vpop.f32.mrf.mxu0
        %5346 = vmatprep.mubr.f32.mxu0 0.0
        %5347 = vmatmul.mubr.f32.gmra.mxu0 %v4962
        %v5348 = vpop.f32.mrf.mxu0
        %v5349 = vadd.f32 0.0, %v5348
        %v5350 = vpop.f32.mrf.mxu0
        %5351 = vdwg.mxu0
        %v5352 = vadd.f32 %v4858, %v5034
        %v5353 = vadd.f32 %v4859, %v5039
        %v5354 = vadd.f32 %v4860, %v5044
        %v5355 = vadd.f32 %v4861, %v5049
        %v5356 = vadd.f32 %v4862, %v5054
        %v5357 = vadd.f32 %v4863, %v5059
        %v5358 = vadd.f32 %v4864, %v5064
        %v5359 = vadd.f32 %v4865, %v5069
        %v5360 = vadd.f32 %v4866, %v5074
        %v5361 = vadd.f32 %v4867, %v5079
        %v5362 = vadd.f32 %v4868, %v5084
        %v5363 = vadd.f32 %v4869, %v5089
        %v5364 = vadd.f32 %v4870, %v5094
        %v5365 = vadd.f32 %v4871, %v5099
        %v5366 = vadd.f32 %v4872, %v5104
        %v5367 = vadd.f32 %v4873, %v5109
        %v5368 = vadd.f32 %v4874, %v5114
        %v5369 = vadd.f32 %v4875, %v5119
        %v5370 = vadd.f32 %v4876, %v5124
        %v5371 = vadd.f32 %v4877, %v5129
        %v5372 = vadd.f32 %v4878, %v5134
        %v5373 = vadd.f32 %v4879, %v5139
        %v5374 = vadd.f32 %v4880, %v5144
        %v5375 = vadd.f32 %v4881, %v5149
        %v5376 = vadd.f32 %v4882, %v5154
        %v5377 = vadd.f32 %v4883, %v5159
        %v5378 = vadd.f32 %v4884, %v5164
        %v5379 = vadd.f32 %v4885, %v5169
        %v5380 = vadd.f32 %v4886, %v5174
        %v5381 = vadd.f32 %v4887, %v5179
        %v5382 = vadd.f32 %v4888, %v5184
        %v5383 = vadd.f32 %v4889, %v5189
        %v5384 = vadd.f32 %v4890, %v5194
        %v5385 = vadd.f32 %v4891, %v5199
        %v5386 = vadd.f32 %v4892, %v5204
        %v5387 = vadd.f32 %v4893, %v5209
        %v5388 = vadd.f32 %v4894, %v5214
        %v5389 = vadd.f32 %v4895, %v5219
        %v5390 = vadd.f32 %v4896, %v5224
        %v5391 = vadd.f32 %v4897, %v5229
        %v5392 = vadd.f32 %v4898, %v5234
        %v5393 = vadd.f32 %v4899, %v5239
        %v5394 = vadd.f32 %v4900, %v5244
        %v5395 = vadd.f32 %v4901, %v5249
        %v5396 = vadd.f32 %v4902, %v5254
        %v5397 = vadd.f32 %v4903, %v5259
        %v5398 = vadd.f32 %v4904, %v5264
        %v5399 = vadd.f32 %v4905, %v5269
        %v5400 = vadd.f32 %v4906, %v5274
        %v5401 = vadd.f32 %v4907, %v5279
        %v5402 = vadd.f32 %v4908, %v5284
        %v5403 = vadd.f32 %v4909, %v5289
        %v5404 = vadd.f32 %v4910, %v5294
        %v5405 = vadd.f32 %v4911, %v5299
        %v5406 = vadd.f32 %v4912, %v5304
        %v5407 = vadd.f32 %v4913, %v5309
        %v5408 = vadd.f32 %v4914, %v5314
        %v5409 = vadd.f32 %v4915, %v5319
        %v5410 = vadd.f32 %v4916, %v5324
        %v5411 = vadd.f32 %v4917, %v5329
        %v5412 = vadd.f32 %v4918, %v5334
        %v5413 = vadd.f32 %v4919, %v5339
        %v5414 = vadd.f32 %v4920, %v5344
        %v5415 = vadd.f32 %v4921, %v5349
        %v5416 = vld [vmem:[%s2] sm:$0x1]
        %v5418 = vlaneseq
        %v5419 = vshrl.u32 %v5418, 7
        %v5420 = vsub.s32 0, %v5419
        %v5421 = vrot.slane %v5416, %v5420
        %v5423 = vadd.f32 %v5352, %v5421
        %v5424 = vadd.f32 %v5353, %v5421
        %v5425 = vadd.f32 %v5354, %v5421
        %v5426 = vadd.f32 %v5355, %v5421
        %v5427 = vadd.f32 %v5356, %v5421
        %v5428 = vadd.f32 %v5357, %v5421
        %v5429 = vadd.f32 %v5358, %v5421
        %v5430 = vadd.f32 %v5359, %v5421
        %v5431 = vadd.f32 %v5360, %v5421
        %v5432 = vadd.f32 %v5361, %v5421
        %v5433 = vadd.f32 %v5362, %v5421
        %v5434 = vadd.f32 %v5363, %v5421
        %v5435 = vadd.f32 %v5364, %v5421
        %v5436 = vadd.f32 %v5365, %v5421
        %v5437 = vadd.f32 %v5366, %v5421
        %v5438 = vadd.f32 %v5367, %v5421
        %v5439 = vadd.f32 %v5368, %v5421
        %v5440 = vadd.f32 %v5369, %v5421
        %v5441 = vadd.f32 %v5370, %v5421
        %v5442 = vadd.f32 %v5371, %v5421
        %v5443 = vadd.f32 %v5372, %v5421
        %v5444 = vadd.f32 %v5373, %v5421
        %v5445 = vadd.f32 %v5374, %v5421
        %v5446 = vadd.f32 %v5375, %v5421
        %v5447 = vadd.f32 %v5376, %v5421
        %v5448 = vadd.f32 %v5377, %v5421
        %v5449 = vadd.f32 %v5378, %v5421
        %v5450 = vadd.f32 %v5379, %v5421
        %v5451 = vadd.f32 %v5380, %v5421
        %v5452 = vadd.f32 %v5381, %v5421
        %v5453 = vadd.f32 %v5382, %v5421
        %v5454 = vadd.f32 %v5383, %v5421
        %v5455 = vadd.f32 %v5384, %v5421
        %v5456 = vadd.f32 %v5385, %v5421
        %v5457 = vadd.f32 %v5386, %v5421
        %v5458 = vadd.f32 %v5387, %v5421
        %v5459 = vadd.f32 %v5388, %v5421
        %v5460 = vadd.f32 %v5389, %v5421
        %v5461 = vadd.f32 %v5390, %v5421
        %v5462 = vadd.f32 %v5391, %v5421
        %v5463 = vadd.f32 %v5392, %v5421
        %v5464 = vadd.f32 %v5393, %v5421
        %v5465 = vadd.f32 %v5394, %v5421
        %v5466 = vadd.f32 %v5395, %v5421
        %v5467 = vadd.f32 %v5396, %v5421
        %v5468 = vadd.f32 %v5397, %v5421
        %v5469 = vadd.f32 %v5398, %v5421
        %v5470 = vadd.f32 %v5399, %v5421
        %v5471 = vadd.f32 %v5400, %v5421
        %v5472 = vadd.f32 %v5401, %v5421
        %v5473 = vadd.f32 %v5402, %v5421
        %v5474 = vadd.f32 %v5403, %v5421
        %v5475 = vadd.f32 %v5404, %v5421
        %v5476 = vadd.f32 %v5405, %v5421
        %v5477 = vadd.f32 %v5406, %v5421
        %v5478 = vadd.f32 %v5407, %v5421
        %v5479 = vadd.f32 %v5408, %v5421
        %v5480 = vadd.f32 %v5409, %v5421
        %v5481 = vadd.f32 %v5410, %v5421
        %v5482 = vadd.f32 %v5411, %v5421
        %v5483 = vadd.f32 %v5412, %v5421
        %v5484 = vadd.f32 %v5413, %v5421
        %v5485 = vadd.f32 %v5414, %v5421
        %v5486 = vadd.f32 %v5415, %v5421
        %v5487 = vmax.f32 %v5423, 0.0
        %v5488 = vmax.f32 %v5424, 0.0
        %v5489 = vmax.f32 %v5425, 0.0
        %v5490 = vmax.f32 %v5426, 0.0
        %v5491 = vmax.f32 %v5427, 0.0
        %v5492 = vmax.f32 %v5428, 0.0
        %v5493 = vmax.f32 %v5429, 0.0
        %v5494 = vmax.f32 %v5430, 0.0
        %v5495 = vmax.f32 %v5431, 0.0
        %v5496 = vmax.f32 %v5432, 0.0
        %v5497 = vmax.f32 %v5433, 0.0
        %v5498 = vmax.f32 %v5434, 0.0
        %v5499 = vmax.f32 %v5435, 0.0
        %v5500 = vmax.f32 %v5436, 0.0
        %v5501 = vmax.f32 %v5437, 0.0
        %v5502 = vmax.f32 %v5438, 0.0
        %v5503 = vmax.f32 %v5439, 0.0
        %v5504 = vmax.f32 %v5440, 0.0
        %v5505 = vmax.f32 %v5441, 0.0
        %v5506 = vmax.f32 %v5442, 0.0
        %v5507 = vmax.f32 %v5443, 0.0
        %v5508 = vmax.f32 %v5444, 0.0
        %v5509 = vmax.f32 %v5445, 0.0
        %v5510 = vmax.f32 %v5446, 0.0
        %v5511 = vmax.f32 %v5447, 0.0
        %v5512 = vmax.f32 %v5448, 0.0
        %v5513 = vmax.f32 %v5449, 0.0
        %v5514 = vmax.f32 %v5450, 0.0
        %v5515 = vmax.f32 %v5451, 0.0
        %v5516 = vmax.f32 %v5452, 0.0
        %v5517 = vmax.f32 %v5453, 0.0
        %v5518 = vmax.f32 %v5454, 0.0
        %v5519 = vmax.f32 %v5455, 0.0
        %v5520 = vmax.f32 %v5456, 0.0
        %v5521 = vmax.f32 %v5457, 0.0
        %v5522 = vmax.f32 %v5458, 0.0
        %v5523 = vmax.f32 %v5459, 0.0
        %v5524 = vmax.f32 %v5460, 0.0
        %v5525 = vmax.f32 %v5461, 0.0
        %v5526 = vmax.f32 %v5462, 0.0
        %v5527 = vmax.f32 %v5463, 0.0
        %v5528 = vmax.f32 %v5464, 0.0
        %v5529 = vmax.f32 %v5465, 0.0
        %v5530 = vmax.f32 %v5466, 0.0
        %v5531 = vmax.f32 %v5467, 0.0
        %v5532 = vmax.f32 %v5468, 0.0
        %v5533 = vmax.f32 %v5469, 0.0
        %v5534 = vmax.f32 %v5470, 0.0
        %v5535 = vmax.f32 %v5471, 0.0
        %v5536 = vmax.f32 %v5472, 0.0
        %v5537 = vmax.f32 %v5473, 0.0
        %v5538 = vmax.f32 %v5474, 0.0
        %v5539 = vmax.f32 %v5475, 0.0
        %v5540 = vmax.f32 %v5476, 0.0
        %v5541 = vmax.f32 %v5477, 0.0
        %v5542 = vmax.f32 %v5478, 0.0
        %v5543 = vmax.f32 %v5479, 0.0
        %v5544 = vmax.f32 %v5480, 0.0
        %v5545 = vmax.f32 %v5481, 0.0
        %v5546 = vmax.f32 %v5482, 0.0
        %v5547 = vmax.f32 %v5483, 0.0
        %v5548 = vmax.f32 %v5484, 0.0
        %v5549 = vmax.f32 %v5485, 0.0
        %v5550 = vmax.f32 %v5486, 0.0
        %vm5551 = vcmask 523264
        %5552 = vst.msk [vmem:[%s166] sm:$0xff] %vm5551, %v5487
        %5553 = vst.msk [vmem:[%s166 + $0x8] sm:$0xff] %vm5551, %v5488
        %5554 = vst.msk [vmem:[%s166 + $0x10] sm:$0xff] %vm5551, %v5489
        %5555 = vst.msk [vmem:[%s166 + $0x18] sm:$0xff] %vm5551, %v5490
        %5556 = vst.msk [vmem:[%s166 + $0x20] sm:$0xff] %vm5551, %v5491
        %5557 = vst.msk [vmem:[%s166 + $0x28] sm:$0xff] %vm5551, %v5492
        %5558 = vst.msk [vmem:[%s166 + $0x30] sm:$0xff] %vm5551, %v5493
        %5559 = vst.msk [vmem:[%s166 + $0x38] sm:$0xff] %vm5551, %v5494
        %5560 = vst.msk [vmem:[%s166 + $0x40] sm:$0xff] %vm5551, %v5495
        %5561 = vst.msk [vmem:[%s166 + $0x48] sm:$0xff] %vm5551, %v5496
        %5562 = vst.msk [vmem:[%s166 + $0x50] sm:$0xff] %vm5551, %v5497
        %5563 = vst.msk [vmem:[%s166 + $0x58] sm:$0xff] %vm5551, %v5498
        %5564 = vst.msk [vmem:[%s166 + $0x60] sm:$0xff] %vm5551, %v5499
        %5565 = vst.msk [vmem:[%s166 + $0x68] sm:$0xff] %vm5551, %v5500
        %5566 = vst.msk [vmem:[%s166 + $0x70] sm:$0xff] %vm5551, %v5501
        %5567 = vst.msk [vmem:[%s166 + $0x78] sm:$0xff] %vm5551, %v5502
        %5568 = vst.msk [vmem:[%s166 + $0x80] sm:$0xff] %vm5551, %v5503
        %5569 = vst.msk [vmem:[%s166 + $0x88] sm:$0xff] %vm5551, %v5504
        %5570 = vst.msk [vmem:[%s166 + $0x90] sm:$0xff] %vm5551, %v5505
        %5571 = vst.msk [vmem:[%s166 + $0x98] sm:$0xff] %vm5551, %v5506
        %5572 = vst.msk [vmem:[%s166 + $0xa0] sm:$0xff] %vm5551, %v5507
        %5573 = vst.msk [vmem:[%s166 + $0xa8] sm:$0xff] %vm5551, %v5508
        %5574 = vst.msk [vmem:[%s166 + $0xb0] sm:$0xff] %vm5551, %v5509
        %5575 = vst.msk [vmem:[%s166 + $0xb8] sm:$0xff] %vm5551, %v5510
        %5576 = vst.msk [vmem:[%s166 + $0xc0] sm:$0xff] %vm5551, %v5511
        %5577 = vst.msk [vmem:[%s166 + $0xc8] sm:$0xff] %vm5551, %v5512
        %5578 = vst.msk [vmem:[%s166 + $0xd0] sm:$0xff] %vm5551, %v5513
        %5579 = vst.msk [vmem:[%s166 + $0xd8] sm:$0xff] %vm5551, %v5514
        %5580 = vst.msk [vmem:[%s166 + $0xe0] sm:$0xff] %vm5551, %v5515
        %5581 = vst.msk [vmem:[%s166 + $0xe8] sm:$0xff] %vm5551, %v5516
        %5582 = vst.msk [vmem:[%s166 + $0xf0] sm:$0xff] %vm5551, %v5517
        %5583 = vst.msk [vmem:[%s166 + $0xf8] sm:$0xff] %vm5551, %v5518
        %5584 = vst.msk [vmem:[%s166 + $0x100] sm:$0xff] %vm5551, %v5519
        %5585 = vst.msk [vmem:[%s166 + $0x108] sm:$0xff] %vm5551, %v5520
        %5586 = vst.msk [vmem:[%s166 + $0x110] sm:$0xff] %vm5551, %v5521
        %5587 = vst.msk [vmem:[%s166 + $0x118] sm:$0xff] %vm5551, %v5522
        %5588 = vst.msk [vmem:[%s166 + $0x120] sm:$0xff] %vm5551, %v5523
        %5589 = vst.msk [vmem:[%s166 + $0x128] sm:$0xff] %vm5551, %v5524
        %5590 = vst.msk [vmem:[%s166 + $0x130] sm:$0xff] %vm5551, %v5525
        %5591 = vst.msk [vmem:[%s166 + $0x138] sm:$0xff] %vm5551, %v5526
        %5592 = vst.msk [vmem:[%s166 + $0x140] sm:$0xff] %vm5551, %v5527
        %5593 = vst.msk [vmem:[%s166 + $0x148] sm:$0xff] %vm5551, %v5528
        %5594 = vst.msk [vmem:[%s166 + $0x150] sm:$0xff] %vm5551, %v5529
        %5595 = vst.msk [vmem:[%s166 + $0x158] sm:$0xff] %vm5551, %v5530
        %5596 = vst.msk [vmem:[%s166 + $0x160] sm:$0xff] %vm5551, %v5531
        %5597 = vst.msk [vmem:[%s166 + $0x168] sm:$0xff] %vm5551, %v5532
        %5598 = vst.msk [vmem:[%s166 + $0x170] sm:$0xff] %vm5551, %v5533
        %5599 = vst.msk [vmem:[%s166 + $0x178] sm:$0xff] %vm5551, %v5534
        %5600 = vst.msk [vmem:[%s166 + $0x180] sm:$0xff] %vm5551, %v5535
        %5601 = vst.msk [vmem:[%s166 + $0x188] sm:$0xff] %vm5551, %v5536
        %5602 = vst.msk [vmem:[%s166 + $0x190] sm:$0xff] %vm5551, %v5537
        %5603 = vst.msk [vmem:[%s166 + $0x198] sm:$0xff] %vm5551, %v5538
        %5604 = vst.msk [vmem:[%s166 + $0x1a0] sm:$0xff] %vm5551, %v5539
        %5605 = vst.msk [vmem:[%s166 + $0x1a8] sm:$0xff] %vm5551, %v5540
        %5606 = vst.msk [vmem:[%s166 + $0x1b0] sm:$0xff] %vm5551, %v5541
        %5607 = vst.msk [vmem:[%s166 + $0x1b8] sm:$0xff] %vm5551, %v5542
        %5608 = vst.msk [vmem:[%s166 + $0x1c0] sm:$0xff] %vm5551, %v5543
        %5609 = vst.msk [vmem:[%s166 + $0x1c8] sm:$0xff] %vm5551, %v5544
        %5610 = vst.msk [vmem:[%s166 + $0x1d0] sm:$0xff] %vm5551, %v5545
        %5611 = vst.msk [vmem:[%s166 + $0x1d8] sm:$0xff] %vm5551, %v5546
        %5612 = vst.msk [vmem:[%s166 + $0x1e0] sm:$0xff] %vm5551, %v5547
        %5613 = vst.msk [vmem:[%s166 + $0x1e8] sm:$0xff] %vm5551, %v5548
        %5614 = vst.msk [vmem:[%s166 + $0x1f0] sm:$0xff] %vm5551, %v5549
        %5615 = vst.msk [vmem:[%s166 + $0x1f8] sm:$0xff] %vm5551, %v5550
        %s5616 = sand.u32 %s93, 1
        %s5617 = scalar_lea.sflag [#allocation3], %s5616
        %s5618 = sand.u32 %s93, 1
        %s5619 = smul.addr %s5618, 512
        %s5620 = scalar_lea.vmem [#allocation2], %s5619
        // Predicated region
        $region33: #{tpu_custom_call.1} parent=31 // pred_check
          %p5621 = pneg %p103
        $region34: #{tpu_custom_call.1} parent=31 // pred_check_branch
          %5623 = sbr.rel (%p5621) target = $region36
        $region35: #{tpu_custom_call.1} parent=31 // pred_region
          %s5624 = smul.u32 8, %s17
          %s5626 = ssub.s32 8192, 8192
          %5627 = vsyncadd %s5617, %s5626
          %s5628 = smul.addr %s5624, 8
          %s5629 = smul.addr %s5628, 128
          %s5630 = scalar_lea.hbm %s3, %s5629
          %s5631 = sshll.u32 %s5620, 4
          %s5632 = int_to_ptr.vmem [resolvable:$true] %s5631
          %5637 = dma.vmem_to_hbm [thread:$0]  %s5632, 8192, %s5630, %s5617, 128, 128, 8
        $region36: #{tpu_custom_call.1} parent=31 // pred_fallthru
          _
      $region32: #{tpu_custom_call.1} parent=5 // pred_fallthru
        _
      %p5638 = scmp.le.s32.totalorder 2, %s12
      // Predicated region
      $region37: #{tpu_custom_call.1} parent=5 // pred_check
        %p5639 = pneg %p5638
      $region38: #{tpu_custom_call.1} parent=5 // pred_check_branch
        %5641 = sbr.rel (%p5639) target = $region40
      $region39: #{tpu_custom_call.1} parent=5 // pred_region
        %s5642 = ssub.s32 %s12, 2
        // Predicated region
        $region41: #{tpu_custom_call.1} parent=39 // pred_check
          %p5643 = pneg %p109
        $region42: #{tpu_custom_call.1} parent=39 // pred_check_branch
          %5645 = sbr.rel (%p5643) target = $region44
        $region43: #{tpu_custom_call.1} parent=39 // pred_region
          %s5646 = sand.u32 %s94, 1
          %s5647 = scalar_lea.sflag [#allocation3], %s5646
          %s5648 = sand.u32 %s94, 1
          %s5649 = smul.addr %s5648, 512
          %s5650 = scalar_lea.vmem [#allocation2], %s5649
          %5651 = dma.done %s5647, 8192
        $region44: #{tpu_custom_call.1} parent=39 // pred_fallthru
          _
      $region40: #{tpu_custom_call.1} parent=5 // pred_fallthru
        _
    $region6: #{tpu_custom_call.1} parent=1 // loop_footer
      %s16 = sadd.s32 1, %s12
    $region7: #{tpu_custom_call.1} parent=1 // loop_footer_branch
      %11 = sbr.rel target = $region3
    $region8: #{tpu_custom_call.1} parent=1 // loop_exit
      _
    %5652 = vsyncpa [#allocation3], 1
    %s5653 = scalar_lea.sflag [#allocation3], 1
    %5654 = vsyncpa %s5653, 1

</llo_original>
